<compile_context>
chip_gen: v6e
topology: v6e:2x2x1
jax: 0.10.0
libtpu: 0.0.40
codegen_flags: <defaults>
</compile_context>

<pallas_src>
import functools

import jax
import jax.numpy as jnp
from jax.experimental import pallas as pl
from jax.experimental.pallas import tpu as pltpu

_LN_EPS = 1e-5  # PyTorch nn.LayerNorm default


def _round_up(x, m):
    return ((x + m - 1) // m) * m


# ---------------------------------------------------------------------------
# Fused  MLP (ReLU hidden, Identity out) + LayerNorm + residual(b)
# over a tile of rows, with the input given as the two pieces of the concat.
# The residual is always the second concat operand b (X for nodes, E for edges).
# ---------------------------------------------------------------------------
def _make_fused_mlp_ln_kernel(num_linear, emit_pre_residual):
    def kernel(*refs):
        it = iter(refs)
        a_ref = next(it)          # (tm, da)  -- first half of the concat
        b_ref = next(it)          # (tm, db)  -- second half of the concat (= residual)
        w0a = next(it)            # (da, h)
        w0b = next(it)            # (db, h)
        bias0 = next(it)          # (1, h)

        # layer 0 on the "virtual" concat([a, b]) without materializing it
        h = (jnp.dot(a_ref[...], w0a[...], preferred_element_type=jnp.float32)
             + jnp.dot(b_ref[...], w0b[...], preferred_element_type=jnp.float32)
             + bias0[...].astype(jnp.float32))
        if num_linear > 1:
            h = jnp.maximum(h, 0.0)

        for li in range(1, num_linear):
            w = next(it)
            bb = next(it)
            h = jnp.dot(h, w[...], preferred_element_type=jnp.float32) \
                + bb[...].astype(jnp.float32)
            if li < num_linear - 1:         # last linear has Identity activation
                h = jnp.maximum(h, 0.0)

        gamma = next(it)
        beta = next(it)
        mean = jnp.mean(h, axis=-1, keepdims=True)
        centered = h - mean
        var = jnp.mean(centered * centered, axis=-1, keepdims=True)
        y = centered * jax.lax.rsqrt(var + _LN_EPS)
        y = y * gamma[...].astype(jnp.float32) + beta[...].astype(jnp.float32)
        y_res = y + b_ref[...].astype(jnp.float32)   # residual fused (b is already in VMEM)

        if emit_pre_residual:
            o_pre = next(it)
            o_res = next(it)
            o_pre[...] = y.astype(o_pre.dtype)       # pre-residual (needed by node gather)
            o_res[...] = y_res.astype(o_res.dtype)   # post-residual (step output)
        else:
            o_res = next(it)
            o_res[...] = y_res.astype(o_res.dtype)

    return kernel


def _pick_tile_rows(n, tile_m, io_itemsize, bytes_per_row):
    """Row-tile size: aligned, >=2 grid steps when possible, within VMEM budget."""
    align = 16 if io_itemsize < 4 else 8
    if n <= align:
        return n
    # at least two grid steps so the 'parallel' axis feeds both TensorCores on v7x
    tm = min(tile_m, _round_up(pl.cdiv(n, 2), align))
    # keep double-buffered streams + f32 intermediates comfortably inside scoped VMEM
    budget = 24 * 1024 * 1024
    while tm > align and tm * bytes_per_row > budget:
        tm = max(_round_up(tm // 2, align), align)
    return max(tm, align)


def fused_mlp_ln(a, b, layer_params, *, emit_pre_residual=False, tile_m=8192):
    """y = LayerNorm(MLP(concat([a, b], -1))).

    Returns y + b (node case) or (y, y + b) when emit_pre_residual=True (edge case).
    layer_params = {'linears': ((W, b), ...) with W stored (in, out),
                    'ln': (gamma, beta) each (1, out)}.
    """
    linears = layer_params["linears"]
    gamma, beta = layer_params["ln"]
    n, da = a.shape
    db = b.shape[1]
    d_out = linears[-1][0].shape[1]
    dtype = a.dtype
    assert d_out == db, "residual requires out_dim == dim of second concat operand"

    w0, b0 = linears[0]
    w0a, w0b = w0[:da], w0[da:]              # split layer-0 weight along the concat axis

    n_out_streams = 2 if emit_pre_residual else 1
    io_itemsize = jnp.dtype(dtype).itemsize
    max_width = max([da, db, d_out] + [int(w.shape[1]) for w, _ in linears])
    bytes_per_row = (2 * io_itemsize * (da + db + n_out_streams * d_out)   # dbl-buffered streams
                     + 4 * 3 * max_width)                                  # f32 intermediates
    tm = _pick_tile_rows(n, tile_m, io_itemsize, bytes_per_row)
    grid = (pl.cdiv(n, tm),)

    operands = [a, b, w0a, w0b, b0]
    for w, bb in linears[1:]:
        operands += [w, bb]
    operands += [gamma, beta]

    def row_spec(d):
        return pl.BlockSpec((tm, d), lambda i: (i, 0))

    def full_spec(shape):
        return pl.BlockSpec(shape, lambda i, _n=len(shape): (0,) * _n)

    in_specs = [row_spec(da), row_spec(db),
                full_spec(w0a.shape), full_spec(w0b.shape), full_spec(b0.shape)]
    for w, bb in linears[1:]:
        in_specs += [full_spec(w.shape), full_spec(bb.shape)]
    in_specs += [full_spec(gamma.shape), full_spec(beta.shape)]

    if emit_pre_residual:
        out_shape = (jax.ShapeDtypeStruct((n, d_out), dtype),
                     jax.ShapeDtypeStruct((n, d_out), dtype))
        out_specs = (pl.BlockSpec((tm, d_out), lambda i: (i, 0)),
                     pl.BlockSpec((tm, d_out), lambda i: (i, 0)))
    else:
        out_shape = jax.ShapeDtypeStruct((n, d_out), dtype)
        out_specs = pl.BlockSpec((tm, d_out), lambda i: (i, 0))

    # Cost hint for XLA's scheduler (matmul flops + small LN term; rsqrt per row).
    flops = 2 * n * sum(int(w.shape[0]) * int(w.shape[1]) for w, _ in linears) + 10 * n * d_out
    bytes_accessed = (io_itemsize * n * (da + db + n_out_streams * d_out)
                      + 4 * sum(int(w.size) + int(bb.size) for w, bb in linears)
                      + 4 * (int(gamma.size) + int(beta.size)))
    cost = pl.CostEstimate(flops=int(flops), transcendentals=int(n),
                           bytes_accessed=int(bytes_accessed))

    kernel = _make_fused_mlp_ln_kernel(num_linear=len(linears),
                                       emit_pre_residual=emit_pre_residual)

    return pl.pallas_call(
        kernel,
        out_shape=out_shape,
        grid_spec=pltpu.PrefetchScalarGridSpec(
            num_scalar_prefetch=0,
            grid=grid,
            in_specs=in_specs,
            out_specs=out_specs,
        ),
        compiler_params=pltpu.CompilerParams(
            dimension_semantics=("parallel",),
            vmem_limit_bytes=32 * 1024 * 1024,
        ),
        cost_estimate=cost,
    )(*operands)


# ---------------------------------------------------------------------------
# UniGNNInteractionNetwork / UniGNNProcessor forward
# ---------------------------------------------------------------------------
def interaction_network_forward(x, vertices, hyperedges, edge_features, params,
                                *, tile_m=8192):
    n_nodes = x.shape[0]
    n_edges = edge_features.shape[0]

    # TODO(synk): data-dependent gather / scatter-add stays in XLA (jnp.take / segment_sum);
    # a Pallas version would need sorted-segment scalar-prefetch DMA, out of scope here.
    xve = jnp.take(x, vertices, axis=0)
    xe = jax.ops.segment_sum(xve, hyperedges, num_segments=n_edges)

    # edge update: one kernel emits both LN(MLP([Xe,E])) (for the node-side gather) and the
    # residual-added step output LN(MLP([Xe,E])) + E.
    upd_e, new_e = fused_mlp_ln(xe, edge_features, params["edge"],
                                emit_pre_residual=True, tile_m=tile_m)

    xev = jnp.take(upd_e, hyperedges, axis=0)
    xv = jax.ops.segment_sum(xev, vertices, num_segments=n_nodes)

    # node update: LayerNorm(MLP(concat([Xv, X]))) + X  -- residual (== second operand X)
    # fused in the kernel.
    new_x = fused_mlp_ln(xv, x, params["node"], emit_pre_residual=False, tile_m=tile_m)

    return new_x, new_e


@functools.partial(jax.jit, static_argnames=("tile_m", "io_dtype"))
def processor_forward(x, vertices, hyperedges, edge_features, params_list,
                      *, tile_m=8192, io_dtype=None):
    if io_dtype is not None:
        # bf16 row streams: matmuls still accumulate in f32, LN stays f32 in-register.
        x = x.astype(io_dtype)
        edge_features = edge_features.astype(io_dtype)
    for params in params_list:
        x, edge_features = interaction_network_forward(
            x, vertices, hyperedges, edge_features, params, tile_m=tile_m)
    return x, edge_features


# ---------------------------------------------------------------------------
# Parameter init (matches PyTorch Linear U(-1/sqrt(fan_in), 1/sqrt(fan_in)),
# LayerNorm gamma=1 beta=0).  Weights stored (in, out); biases (1, out).
# ---------------------------------------------------------------------------
def _init_linear(key, fan_in, fan_out, dtype):
    kw, kb = jax.random.split(key)
    bound = float(1.0 / (fan_in ** 0.5))
    w = jax.random.uniform(kw, (fan_in, fan_out), dtype, -bound, bound)
    b = jax.random.uniform(kb, (1, fan_out), dtype, -bound, bound)
    return w, b


def _init_mlp_ln(key, in_dim, hidden, nmlp_layers, out_dim, dtype):
    sizes = [in_dim] + [hidden] * nmlp_layers + [out_dim]
    linears = []
    for i in range(len(sizes) - 1):
        key, k = jax.random.split(key)
        linears.append(_init_linear(k, sizes[i], sizes[i + 1], dtype))
    gamma = jnp.ones((1, out_dim), dtype)
    beta = jnp.zeros((1, out_dim), dtype)
    return {"linears": tuple(linears), "ln": (gamma, beta)}


def init_processor_params(key, nnode_in, nnode_out, nedge_in, nedge_out,
                          nmessage_passing_steps, nmlp_layers, mlp_hidden_dim,
                          dtype=jnp.float32):
    params = []
    for _ in range(nmessage_passing_steps):
        key, ke, kn = jax.random.split(key, 3)
        edge = _init_mlp_ln(ke, nnode_in + nedge_in, mlp_hidden_dim, nmlp_layers,
                            nedge_out, dtype)
        node = _init_mlp_ln(kn, nnode_in + nedge_out, mlp_hidden_dim, nmlp_layers,
                            nnode_out, dtype)
        params.append({"edge": edge, "node": node})
    return tuple(params)


# ---------------------------------------------------------------------------
# Plain-JAX reference for verification
# ---------------------------------------------------------------------------
def _mlp_ref(x, linears):
    h = x
    for i, (w, b) in enumerate(linears):
        h = h @ w + b
        if i < len(linears) - 1:
            h = jnp.maximum(h, 0.0)
    return h


def _layer_norm_ref(x, gamma, beta):
    mean = jnp.mean(x, axis=-1, keepdims=True)
    var = jnp.mean((x - mean) ** 2, axis=-1, keepdims=True)
    return (x - mean) / jnp.sqrt(var + _LN_EPS) * gamma + beta


def _interaction_reference(x, vertices, hyperedges, edge_features, params):
    n_nodes = x.shape[0]
    n_edges = edge_features.shape[0]
    xve = x[vertices]
    xe = jax.ops.segment_sum(xve, hyperedges, num_segments=n_edges)
    stacked_e = jnp.concatenate([xe, edge_features], axis=-1)
    upd_e = _layer_norm_ref(_mlp_ref(stacked_e, params["edge"]["linears"]),
                            *params["edge"]["ln"])
    xev = upd_e[hyperedges]
    xv = jax.ops.segment_sum(xev, vertices, num_segments=n_nodes)
    stacked_n = jnp.concatenate([xv, x], axis=-1)
    upd_n = _layer_norm_ref(_mlp_ref(stacked_n, params["node"]["linears"]),
                            *params["node"]["ln"])
    return upd_n + x, upd_e + edge_features


def processor_reference(x, vertices, hyperedges, edge_features, params_list):
    for params in params_list:
        x, edge_features = _interaction_reference(x, vertices, hyperedges,
                                                  edge_features, params)
    return x, edge_features


if __name__ == "__main__":
    # UniGNNProcessor(nnode_in=32, nnode_out=32, nedge_in=32, nedge_out=32,
    #                 nmessage_passing_steps=2, nmlp_layers=2, mlp_hidden_dim=32)
    nnode_in = nnode_out = 32
    nedge_in = nedge_out = 32
    mlp_hidden_dim = 32
    nmlp_layers = 2
    nmessage_passing_steps = 2

    n_nodes = 64
    n_hyperedges = 16
    incidences_per_edge = 4
    n_incidences = n_hyperedges * incidences_per_edge

    key = jax.random.PRNGKey(0)
    key, kx, ke, kv, kp = jax.random.split(key, 5)
    x = jax.random.normal(kx, (n_nodes, nnode_in), dtype=jnp.float32)
    edge_features = jax.random.normal(ke, (n_hyperedges, nedge_in), dtype=jnp.float32)
    vertices = jax.random.randint(kv, (n_incidences,), 0, n_nodes, dtype=jnp.int32)
    hyperedges = jnp.repeat(jnp.arange(n_hyperedges, dtype=jnp.int32),
                            incidences_per_edge)

    params = init_processor_params(kp, nnode_in, nnode_out, nedge_in, nedge_out,
                                   nmessage_passing_steps, nmlp_layers, mlp_hidden_dim)

    x_out, e_out = processor_forward(x, vertices, hyperedges, edge_features, params,
                                     tile_m=8192)
    x_out, e_out = jax.block_until_ready((x_out, e_out))

    x_ref, e_ref = processor_reference(x, vertices, hyperedges, edge_features, params)

    assert x_out.shape == (n_nodes, nnode_out)
    assert e_out.shape == (n_hyperedges, nedge_out)
    assert jnp.allclose(x_out, x_ref, atol=5e-3, rtol=5e-3), "node features mismatch"
    assert jnp.allclose(e_out, e_ref, atol=5e-3, rtol=5e-3), "edge features mismatch"

    print("KERNEL_OK")
</pallas_src>

<mosaic_0001>
module attributes {stable_mosaic.version = 11 : i64} {
  func.func @kernel(%arg0: i32, %arg1: memref<8x32xf32, #tpu.memory_space<vmem>>, %arg2: memref<8x32xf32, #tpu.memory_space<vmem>>, %arg3: memref<32x32xf32, #tpu.memory_space<vmem>>, %arg4: memref<32x32xf32, #tpu.memory_space<vmem>>, %arg5: memref<1x32xf32, #tpu.memory_space<vmem>>, %arg6: memref<32x32xf32, #tpu.memory_space<vmem>>, %arg7: memref<1x32xf32, #tpu.memory_space<vmem>>, %arg8: memref<32x32xf32, #tpu.memory_space<vmem>>, %arg9: memref<1x32xf32, #tpu.memory_space<vmem>>, %arg10: memref<1x32xf32, #tpu.memory_space<vmem>>, %arg11: memref<1x32xf32, #tpu.memory_space<vmem>>, %arg12: memref<8x32xf32, #tpu.memory_space<vmem>>, %arg13: memref<8x32xf32, #tpu.memory_space<vmem>>) attributes {dimension_semantics = [#tpu.dimension_semantics<parallel>], iteration_bounds = array<i64: 2>, scalar_prefetch = 0 : i64, scratch_operands = 0 : i64, tpu.core_type = #tpu.core_type<tc>, window_params = [{transform_indices = @transform_0, window_bounds = array<i64: 8, 32>}, {transform_indices = @transform_1, window_bounds = array<i64: 8, 32>}, {pipeline_mode = #tpu.pipeline_mode<synchronous>, transform_indices = @transform_2, window_bounds = array<i64: 32, 32>}, {pipeline_mode = #tpu.pipeline_mode<synchronous>, transform_indices = @transform_3, window_bounds = array<i64: 32, 32>}, {pipeline_mode = #tpu.pipeline_mode<synchronous>, transform_indices = @transform_4, window_bounds = array<i64: 1, 32>}, {pipeline_mode = #tpu.pipeline_mode<synchronous>, transform_indices = @transform_5, window_bounds = array<i64: 32, 32>}, {pipeline_mode = #tpu.pipeline_mode<synchronous>, transform_indices = @transform_6, window_bounds = array<i64: 1, 32>}, {pipeline_mode = #tpu.pipeline_mode<synchronous>, transform_indices = @transform_7, window_bounds = array<i64: 32, 32>}, {pipeline_mode = #tpu.pipeline_mode<synchronous>, transform_indices = @transform_8, window_bounds = array<i64: 1, 32>}, {pipeline_mode = #tpu.pipeline_mode<synchronous>, transform_indices = @transform_9, window_bounds = array<i64: 1, 32>}, {pipeline_mode = #tpu.pipeline_mode<synchronous>, transform_indices = @transform_10, window_bounds = array<i64: 1, 32>}, {transform_indices = @transform_11, window_bounds = array<i64: 8, 32>}, {transform_indices = @transform_12, window_bounds = array<i64: 8, 32>}]} {
    %c0 = arith.constant 0 : index
    %c0_0 = arith.constant 0 : index
    %0 = vector.load %arg1[%c0, %c0_0] : memref<8x32xf32, #tpu.memory_space<vmem>>, vector<8x32xf32>
    %c0_1 = arith.constant 0 : index
    %c0_2 = arith.constant 0 : index
    %1 = vector.load %arg3[%c0_1, %c0_2] : memref<32x32xf32, #tpu.memory_space<vmem>>, vector<32x32xf32>
    %cst = arith.constant dense<0.000000e+00> : vector<8x32xf32>
    %2 = tpu.matmul %0, %1, %cst {dimension_numbers = #tpu.dot_dimension_numbers<[1], [0], [0], [1], [0, 0, 1, 1], [], []>} : vector<8x32xf32>, vector<32x32xf32>, vector<8x32xf32> -> vector<8x32xf32>
    %c0_3 = arith.constant 0 : index
    %c0_4 = arith.constant 0 : index
    %3 = vector.load %arg2[%c0_3, %c0_4] : memref<8x32xf32, #tpu.memory_space<vmem>>, vector<8x32xf32>
    %c0_5 = arith.constant 0 : index
    %c0_6 = arith.constant 0 : index
    %4 = vector.load %arg4[%c0_5, %c0_6] : memref<32x32xf32, #tpu.memory_space<vmem>>, vector<32x32xf32>
    %cst_7 = arith.constant dense<0.000000e+00> : vector<8x32xf32>
    %5 = tpu.matmul %3, %4, %cst_7 {dimension_numbers = #tpu.dot_dimension_numbers<[1], [0], [0], [1], [0, 0, 1, 1], [], []>} : vector<8x32xf32>, vector<32x32xf32>, vector<8x32xf32> -> vector<8x32xf32>
    %6 = arith.addf %2, %5 : vector<8x32xf32>
    %c0_8 = arith.constant 0 : index
    %c0_9 = arith.constant 0 : index
    %7 = vector.load %arg5[%c0_8, %c0_9] : memref<1x32xf32, #tpu.memory_space<vmem>>, vector<1x32xf32>
    %8 = vector.broadcast %7 : vector<1x32xf32> to vector<8x32xf32>
    %9 = arith.addf %6, %8 : vector<8x32xf32>
    %cst_10 = arith.constant 0.000000e+00 : f32
    %10 = vector.broadcast %cst_10 : f32 to vector<8x32xf32>
    %11 = arith.maximumf %9, %10 : vector<8x32xf32>
    %c0_11 = arith.constant 0 : index
    %c0_12 = arith.constant 0 : index
    %12 = vector.load %arg6[%c0_11, %c0_12] : memref<32x32xf32, #tpu.memory_space<vmem>>, vector<32x32xf32>
    %cst_13 = arith.constant dense<0.000000e+00> : vector<8x32xf32>
    %13 = tpu.matmul %11, %12, %cst_13 {dimension_numbers = #tpu.dot_dimension_numbers<[1], [0], [0], [1], [0, 0, 1, 1], [], []>} : vector<8x32xf32>, vector<32x32xf32>, vector<8x32xf32> -> vector<8x32xf32>
    %c0_14 = arith.constant 0 : index
    %c0_15 = arith.constant 0 : index
    %14 = vector.load %arg7[%c0_14, %c0_15] : memref<1x32xf32, #tpu.memory_space<vmem>>, vector<1x32xf32>
    %15 = vector.broadcast %14 : vector<1x32xf32> to vector<8x32xf32>
    %16 = arith.addf %13, %15 : vector<8x32xf32>
    %cst_16 = arith.constant 0.000000e+00 : f32
    %17 = vector.broadcast %cst_16 : f32 to vector<8x32xf32>
    %18 = arith.maximumf %16, %17 : vector<8x32xf32>
    %c0_17 = arith.constant 0 : index
    %c0_18 = arith.constant 0 : index
    %19 = vector.load %arg8[%c0_17, %c0_18] : memref<32x32xf32, #tpu.memory_space<vmem>>, vector<32x32xf32>
    %cst_19 = arith.constant dense<0.000000e+00> : vector<8x32xf32>
    %20 = tpu.matmul %18, %19, %cst_19 {dimension_numbers = #tpu.dot_dimension_numbers<[1], [0], [0], [1], [0, 0, 1, 1], [], []>} : vector<8x32xf32>, vector<32x32xf32>, vector<8x32xf32> -> vector<8x32xf32>
    %c0_20 = arith.constant 0 : index
    %c0_21 = arith.constant 0 : index
    %21 = vector.load %arg9[%c0_20, %c0_21] : memref<1x32xf32, #tpu.memory_space<vmem>>, vector<1x32xf32>
    %22 = vector.broadcast %21 : vector<1x32xf32> to vector<8x32xf32>
    %23 = arith.addf %20, %22 : vector<8x32xf32>
    %cst_22 = arith.constant dense<0.000000e+00> : vector<8xf32>
    %24 = vector.multi_reduction <add>, %23, %cst_22 [1] : vector<8x32xf32> to vector<8xf32>
    %25 = vector.shape_cast %24 : vector<8xf32> to vector<8x1xf32>
    %cst_23 = arith.constant 3.200000e+01 : f32
    %26 = vector.broadcast %cst_23 : f32 to vector<8x1xf32>
    %27 = arith.divf %25, %26 : vector<8x1xf32>
    %28 = vector.broadcast %27 : vector<8x1xf32> to vector<8x32xf32>
    %29 = arith.subf %23, %28 : vector<8x32xf32>
    %30 = arith.mulf %29, %29 : vector<8x32xf32>
    %cst_24 = arith.constant dense<0.000000e+00> : vector<8xf32>
    %31 = vector.multi_reduction <add>, %30, %cst_24 [1] : vector<8x32xf32> to vector<8xf32>
    %32 = vector.shape_cast %31 : vector<8xf32> to vector<8x1xf32>
    %cst_25 = arith.constant 3.200000e+01 : f32
    %33 = vector.broadcast %cst_25 : f32 to vector<8x1xf32>
    %34 = arith.divf %32, %33 : vector<8x1xf32>
    %cst_26 = arith.constant 9.99999974E-6 : f32
    %35 = vector.broadcast %cst_26 : f32 to vector<8x1xf32>
    %36 = arith.addf %34, %35 : vector<8x1xf32>
    %37 = math.rsqrt %36 : vector<8x1xf32>
    %38 = vector.broadcast %37 : vector<8x1xf32> to vector<8x32xf32>
    %39 = arith.mulf %29, %38 : vector<8x32xf32>
    %c0_27 = arith.constant 0 : index
    %c0_28 = arith.constant 0 : index
    %40 = vector.load %arg10[%c0_27, %c0_28] : memref<1x32xf32, #tpu.memory_space<vmem>>, vector<1x32xf32>
    %41 = vector.broadcast %40 : vector<1x32xf32> to vector<8x32xf32>
    %42 = arith.mulf %39, %41 : vector<8x32xf32>
    %c0_29 = arith.constant 0 : index
    %c0_30 = arith.constant 0 : index
    %43 = vector.load %arg11[%c0_29, %c0_30] : memref<1x32xf32, #tpu.memory_space<vmem>>, vector<1x32xf32>
    %44 = vector.broadcast %43 : vector<1x32xf32> to vector<8x32xf32>
    %45 = arith.addf %42, %44 : vector<8x32xf32>
    %c0_31 = arith.constant 0 : index
    %c0_32 = arith.constant 0 : index
    %46 = vector.load %arg2[%c0_31, %c0_32] : memref<8x32xf32, #tpu.memory_space<vmem>>, vector<8x32xf32>
    %47 = arith.addf %45, %46 : vector<8x32xf32>
    %c0_33 = arith.constant 0 : index
    %c0_34 = arith.constant 0 : index
    %48 = vector.load %arg12[%c0_33, %c0_34] : memref<8x32xf32, #tpu.memory_space<vmem>>, vector<8x32xf32>
    tpu.vector_store %arg12[%c0_33, %c0_34], %45 {strides = array<i32>} : memref<8x32xf32, #tpu.memory_space<vmem>>, vector<8x32xf32>,
    %c0_35 = arith.constant 0 : index
    %c0_36 = arith.constant 0 : index
    %49 = vector.load %arg13[%c0_35, %c0_36] : memref<8x32xf32, #tpu.memory_space<vmem>>, vector<8x32xf32>
    tpu.vector_store %arg13[%c0_35, %c0_36], %47 {strides = array<i32>} : memref<8x32xf32, #tpu.memory_space<vmem>>, vector<8x32xf32>,
    return
  }
  func.func @transform_0(%arg0: i32) -> (i32, i32) {
    %c0_i32 = arith.constant 0 : i32
    %c0_i32_0 = arith.constant 0 : i32
    return %arg0, %c0_i32 : i32, i32
  }
  func.func @transform_1(%arg0: i32) -> (i32, i32) {
    %c0_i32 = arith.constant 0 : i32
    %c0_i32_0 = arith.constant 0 : i32
    return %arg0, %c0_i32 : i32, i32
  }
  func.func @transform_2(%arg0: i32) -> (i32, i32) {
    %c0_i32 = arith.constant 0 : i32
    %c0_i32_0 = arith.constant 0 : i32
    %c0_i32_1 = arith.constant 0 : i32
    return %c0_i32, %c0_i32_0 : i32, i32
  }
  func.func @transform_3(%arg0: i32) -> (i32, i32) {
    %c0_i32 = arith.constant 0 : i32
    %c0_i32_0 = arith.constant 0 : i32
    %c0_i32_1 = arith.constant 0 : i32
    return %c0_i32, %c0_i32_0 : i32, i32
  }
  func.func @transform_4(%arg0: i32) -> (i32, i32) {
    %c0_i32 = arith.constant 0 : i32
    %c0_i32_0 = arith.constant 0 : i32
    %c0_i32_1 = arith.constant 0 : i32
    return %c0_i32, %c0_i32_0 : i32, i32
  }
  func.func @transform_5(%arg0: i32) -> (i32, i32) {
    %c0_i32 = arith.constant 0 : i32
    %c0_i32_0 = arith.constant 0 : i32
    %c0_i32_1 = arith.constant 0 : i32
    return %c0_i32, %c0_i32_0 : i32, i32
  }
  func.func @transform_6(%arg0: i32) -> (i32, i32) {
    %c0_i32 = arith.constant 0 : i32
    %c0_i32_0 = arith.constant 0 : i32
    %c0_i32_1 = arith.constant 0 : i32
    return %c0_i32, %c0_i32_0 : i32, i32
  }
  func.func @transform_7(%arg0: i32) -> (i32, i32) {
    %c0_i32 = arith.constant 0 : i32
    %c0_i32_0 = arith.constant 0 : i32
    %c0_i32_1 = arith.constant 0 : i32
    return %c0_i32, %c0_i32_0 : i32, i32
  }
  func.func @transform_8(%arg0: i32) -> (i32, i32) {
    %c0_i32 = arith.constant 0 : i32
    %c0_i32_0 = arith.constant 0 : i32
    %c0_i32_1 = arith.constant 0 : i32
    return %c0_i32, %c0_i32_0 : i32, i32
  }
  func.func @transform_9(%arg0: i32) -> (i32, i32) {
    %c0_i32 = arith.constant 0 : i32
    %c0_i32_0 = arith.constant 0 : i32
    %c0_i32_1 = arith.constant 0 : i32
    return %c0_i32, %c0_i32_0 : i32, i32
  }
  func.func @transform_10(%arg0: i32) -> (i32, i32) {
    %c0_i32 = arith.constant 0 : i32
    %c0_i32_0 = arith.constant 0 : i32
    %c0_i32_1 = arith.constant 0 : i32
    return %c0_i32, %c0_i32_0 : i32, i32
  }
  func.func @transform_11(%arg0: i32) -> (i32, i32) {
    %c0_i32 = arith.constant 0 : i32
    %c0_i32_0 = arith.constant 0 : i32
    return %arg0, %c0_i32 : i32, i32
  }
  func.func @transform_12(%arg0: i32) -> (i32, i32) {
    %c0_i32 = arith.constant 0 : i32
    %c0_i32_0 = arith.constant 0 : i32
    return %arg0, %c0_i32 : i32, i32
  }
}

module attributes {stable_mosaic.version = 11 : i64} {
  func.func @kernel(%arg0: i32, %arg1: memref<32x32xf32, #tpu.memory_space<vmem>>, %arg2: memref<32x32xf32, #tpu.memory_space<vmem>>, %arg3: memref<32x32xf32, #tpu.memory_space<vmem>>, %arg4: memref<32x32xf32, #tpu.memory_space<vmem>>, %arg5: memref<1x32xf32, #tpu.memory_space<vmem>>, %arg6: memref<32x32xf32, #tpu.memory_space<vmem>>, %arg7: memref<1x32xf32, #tpu.memory_space<vmem>>, %arg8: memref<32x32xf32, #tpu.memory_space<vmem>>, %arg9: memref<1x32xf32, #tpu.memory_space<vmem>>, %arg10: memref<1x32xf32, #tpu.memory_space<vmem>>, %arg11: memref<1x32xf32, #tpu.memory_space<vmem>>, %arg12: memref<32x32xf32, #tpu.memory_space<vmem>>) attributes {dimension_semantics = [#tpu.dimension_semantics<parallel>], iteration_bounds = array<i64: 2>, scalar_prefetch = 0 : i64, scratch_operands = 0 : i64, tpu.core_type = #tpu.core_type<tc>, window_params = [{transform_indices = @transform_0, window_bounds = array<i64: 32, 32>}, {transform_indices = @transform_1, window_bounds = array<i64: 32, 32>}, {pipeline_mode = #tpu.pipeline_mode<synchronous>, transform_indices = @transform_2, window_bounds = array<i64: 32, 32>}, {pipeline_mode = #tpu.pipeline_mode<synchronous>, transform_indices = @transform_3, window_bounds = array<i64: 32, 32>}, {pipeline_mode = #tpu.pipeline_mode<synchronous>, transform_indices = @transform_4, window_bounds = array<i64: 1, 32>}, {pipeline_mode = #tpu.pipeline_mode<synchronous>, transform_indices = @transform_5, window_bounds = array<i64: 32, 32>}, {pipeline_mode = #tpu.pipeline_mode<synchronous>, transform_indices = @transform_6, window_bounds = array<i64: 1, 32>}, {pipeline_mode = #tpu.pipeline_mode<synchronous>, transform_indices = @transform_7, window_bounds = array<i64: 32, 32>}, {pipeline_mode = #tpu.pipeline_mode<synchronous>, transform_indices = @transform_8, window_bounds = array<i64: 1, 32>}, {pipeline_mode = #tpu.pipeline_mode<synchronous>, transform_indices = @transform_9, window_bounds = array<i64: 1, 32>}, {pipeline_mode = #tpu.pipeline_mode<synchronous>, transform_indices = @transform_10, window_bounds = array<i64: 1, 32>}, {transform_indices = @transform_11, window_bounds = array<i64: 32, 32>}]} {
    %c0 = arith.constant 0 : index
    %c0_0 = arith.constant 0 : index
    %0 = vector.load %arg1[%c0, %c0_0] : memref<32x32xf32, #tpu.memory_space<vmem>>, vector<32x32xf32>
    %c0_1 = arith.constant 0 : index
    %c0_2 = arith.constant 0 : index
    %1 = vector.load %arg3[%c0_1, %c0_2] : memref<32x32xf32, #tpu.memory_space<vmem>>, vector<32x32xf32>
    %cst = arith.constant dense<0.000000e+00> : vector<32x32xf32>
    %2 = tpu.matmul %0, %1, %cst {dimension_numbers = #tpu.dot_dimension_numbers<[1], [0], [0], [1], [0, 0, 1, 1], [], []>} : vector<32x32xf32>, vector<32x32xf32>, vector<32x32xf32> -> vector<32x32xf32>
    %c0_3 = arith.constant 0 : index
    %c0_4 = arith.constant 0 : index
    %3 = vector.load %arg2[%c0_3, %c0_4] : memref<32x32xf32, #tpu.memory_space<vmem>>, vector<32x32xf32>
    %c0_5 = arith.constant 0 : index
    %c0_6 = arith.constant 0 : index
    %4 = vector.load %arg4[%c0_5, %c0_6] : memref<32x32xf32, #tpu.memory_space<vmem>>, vector<32x32xf32>
    %cst_7 = arith.constant dense<0.000000e+00> : vector<32x32xf32>
    %5 = tpu.matmul %3, %4, %cst_7 {dimension_numbers = #tpu.dot_dimension_numbers<[1], [0], [0], [1], [0, 0, 1, 1], [], []>} : vector<32x32xf32>, vector<32x32xf32>, vector<32x32xf32> -> vector<32x32xf32>
    %6 = arith.addf %2, %5 : vector<32x32xf32>
    %c0_8 = arith.constant 0 : index
    %c0_9 = arith.constant 0 : index
    %7 = vector.load %arg5[%c0_8, %c0_9] : memref<1x32xf32, #tpu.memory_space<vmem>>, vector<1x32xf32>
    %8 = vector.broadcast %7 : vector<1x32xf32> to vector<32x32xf32>
    %9 = arith.addf %6, %8 : vector<32x32xf32>
    %cst_10 = arith.constant 0.000000e+00 : f32
    %10 = vector.broadcast %cst_10 : f32 to vector<32x32xf32>
    %11 = arith.maximumf %9, %10 : vector<32x32xf32>
    %c0_11 = arith.constant 0 : index
    %c0_12 = arith.constant 0 : index
    %12 = vector.load %arg6[%c0_11, %c0_12] : memref<32x32xf32, #tpu.memory_space<vmem>>, vector<32x32xf32>
    %cst_13 = arith.constant dense<0.000000e+00> : vector<32x32xf32>
    %13 = tpu.matmul %11, %12, %cst_13 {dimension_numbers = #tpu.dot_dimension_numbers<[1], [0], [0], [1], [0, 0, 1, 1], [], []>} : vector<32x32xf32>, vector<32x32xf32>, vector<32x32xf32> -> vector<32x32xf32>
    %c0_14 = arith.constant 0 : index
    %c0_15 = arith.constant 0 : index
    %14 = vector.load %arg7[%c0_14, %c0_15] : memref<1x32xf32, #tpu.memory_space<vmem>>, vector<1x32xf32>
    %15 = vector.broadcast %14 : vector<1x32xf32> to vector<32x32xf32>
    %16 = arith.addf %13, %15 : vector<32x32xf32>
    %cst_16 = arith.constant 0.000000e+00 : f32
    %17 = vector.broadcast %cst_16 : f32 to vector<32x32xf32>
    %18 = arith.maximumf %16, %17 : vector<32x32xf32>
    %c0_17 = arith.constant 0 : index
    %c0_18 = arith.constant 0 : index
    %19 = vector.load %arg8[%c0_17, %c0_18] : memref<32x32xf32, #tpu.memory_space<vmem>>, vector<32x32xf32>
    %cst_19 = arith.constant dense<0.000000e+00> : vector<32x32xf32>
    %20 = tpu.matmul %18, %19, %cst_19 {dimension_numbers = #tpu.dot_dimension_numbers<[1], [0], [0], [1], [0, 0, 1, 1], [], []>} : vector<32x32xf32>, vector<32x32xf32>, vector<32x32xf32> -> vector<32x32xf32>
    %c0_20 = arith.constant 0 : index
    %c0_21 = arith.constant 0 : index
    %21 = vector.load %arg9[%c0_20, %c0_21] : memref<1x32xf32, #tpu.memory_space<vmem>>, vector<1x32xf32>
    %22 = vector.broadcast %21 : vector<1x32xf32> to vector<32x32xf32>
    %23 = arith.addf %20, %22 : vector<32x32xf32>
    %cst_22 = arith.constant dense<0.000000e+00> : vector<32xf32>
    %24 = vector.multi_reduction <add>, %23, %cst_22 [1] : vector<32x32xf32> to vector<32xf32>
    %25 = vector.shape_cast %24 : vector<32xf32> to vector<32x1xf32>
    %cst_23 = arith.constant 3.200000e+01 : f32
    %26 = vector.broadcast %cst_23 : f32 to vector<32x1xf32>
    %27 = arith.divf %25, %26 : vector<32x1xf32>
    %28 = vector.broadcast %27 : vector<32x1xf32> to vector<32x32xf32>
    %29 = arith.subf %23, %28 : vector<32x32xf32>
    %30 = arith.mulf %29, %29 : vector<32x32xf32>
    %cst_24 = arith.constant dense<0.000000e+00> : vector<32xf32>
    %31 = vector.multi_reduction <add>, %30, %cst_24 [1] : vector<32x32xf32> to vector<32xf32>
    %32 = vector.shape_cast %31 : vector<32xf32> to vector<32x1xf32>
    %cst_25 = arith.constant 3.200000e+01 : f32
    %33 = vector.broadcast %cst_25 : f32 to vector<32x1xf32>
    %34 = arith.divf %32, %33 : vector<32x1xf32>
    %cst_26 = arith.constant 9.99999974E-6 : f32
    %35 = vector.broadcast %cst_26 : f32 to vector<32x1xf32>
    %36 = arith.addf %34, %35 : vector<32x1xf32>
    %37 = math.rsqrt %36 : vector<32x1xf32>
    %38 = vector.broadcast %37 : vector<32x1xf32> to vector<32x32xf32>
    %39 = arith.mulf %29, %38 : vector<32x32xf32>
    %c0_27 = arith.constant 0 : index
    %c0_28 = arith.constant 0 : index
    %40 = vector.load %arg10[%c0_27, %c0_28] : memref<1x32xf32, #tpu.memory_space<vmem>>, vector<1x32xf32>
    %41 = vector.broadcast %40 : vector<1x32xf32> to vector<32x32xf32>
    %42 = arith.mulf %39, %41 : vector<32x32xf32>
    %c0_29 = arith.constant 0 : index
    %c0_30 = arith.constant 0 : index
    %43 = vector.load %arg11[%c0_29, %c0_30] : memref<1x32xf32, #tpu.memory_space<vmem>>, vector<1x32xf32>
    %44 = vector.broadcast %43 : vector<1x32xf32> to vector<32x32xf32>
    %45 = arith.addf %42, %44 : vector<32x32xf32>
    %c0_31 = arith.constant 0 : index
    %c0_32 = arith.constant 0 : index
    %46 = vector.load %arg2[%c0_31, %c0_32] : memref<32x32xf32, #tpu.memory_space<vmem>>, vector<32x32xf32>
    %47 = arith.addf %45, %46 : vector<32x32xf32>
    %c0_33 = arith.constant 0 : index
    %c0_34 = arith.constant 0 : index
    %48 = vector.load %arg12[%c0_33, %c0_34] : memref<32x32xf32, #tpu.memory_space<vmem>>, vector<32x32xf32>
    tpu.vector_store %arg12[%c0_33, %c0_34], %47 {strides = array<i32>} : memref<32x32xf32, #tpu.memory_space<vmem>>, vector<32x32xf32>,
    return
  }
  func.func @transform_0(%arg0: i32) -> (i32, i32) {
    %c0_i32 = arith.constant 0 : i32
    %c0_i32_0 = arith.constant 0 : i32
    return %arg0, %c0_i32 : i32, i32
  }
  func.func @transform_1(%arg0: i32) -> (i32, i32) {
    %c0_i32 = arith.constant 0 : i32
    %c0_i32_0 = arith.constant 0 : i32
    return %arg0, %c0_i32 : i32, i32
  }
  func.func @transform_2(%arg0: i32) -> (i32, i32) {
    %c0_i32 = arith.constant 0 : i32
    %c0_i32_0 = arith.constant 0 : i32
    %c0_i32_1 = arith.constant 0 : i32
    return %c0_i32, %c0_i32_0 : i32, i32
  }
  func.func @transform_3(%arg0: i32) -> (i32, i32) {
    %c0_i32 = arith.constant 0 : i32
    %c0_i32_0 = arith.constant 0 : i32
    %c0_i32_1 = arith.constant 0 : i32
    return %c0_i32, %c0_i32_0 : i32, i32
  }
  func.func @transform_4(%arg0: i32) -> (i32, i32) {
    %c0_i32 = arith.constant 0 : i32
    %c0_i32_0 = arith.constant 0 : i32
    %c0_i32_1 = arith.constant 0 : i32
    return %c0_i32, %c0_i32_0 : i32, i32
  }
  func.func @transform_5(%arg0: i32) -> (i32, i32) {
    %c0_i32 = arith.constant 0 : i32
    %c0_i32_0 = arith.constant 0 : i32
    %c0_i32_1 = arith.constant 0 : i32
    return %c0_i32, %c0_i32_0 : i32, i32
  }
  func.func @transform_6(%arg0: i32) -> (i32, i32) {
    %c0_i32 = arith.constant 0 : i32
    %c0_i32_0 = arith.constant 0 : i32
    %c0_i32_1 = arith.constant 0 : i32
    return %c0_i32, %c0_i32_0 : i32, i32
  }
  func.func @transform_7(%arg0: i32) -> (i32, i32) {
    %c0_i32 = arith.constant 0 : i32
    %c0_i32_0 = arith.constant 0 : i32
    %c0_i32_1 = arith.constant 0 : i32
    return %c0_i32, %c0_i32_0 : i32, i32
  }
  func.func @transform_8(%arg0: i32) -> (i32, i32) {
    %c0_i32 = arith.constant 0 : i32
    %c0_i32_0 = arith.constant 0 : i32
    %c0_i32_1 = arith.constant 0 : i32
    return %c0_i32, %c0_i32_0 : i32, i32
  }
  func.func @transform_9(%arg0: i32) -> (i32, i32) {
    %c0_i32 = arith.constant 0 : i32
    %c0_i32_0 = arith.constant 0 : i32
    %c0_i32_1 = arith.constant 0 : i32
    return %c0_i32, %c0_i32_0 : i32, i32
  }
  func.func @transform_10(%arg0: i32) -> (i32, i32) {
    %c0_i32 = arith.constant 0 : i32
    %c0_i32_0 = arith.constant 0 : i32
    %c0_i32_1 = arith.constant 0 : i32
    return %c0_i32, %c0_i32_0 : i32, i32
  }
  func.func @transform_11(%arg0: i32) -> (i32, i32) {
    %c0_i32 = arith.constant 0 : i32
    %c0_i32_0 = arith.constant 0 : i32
    return %arg0, %c0_i32 : i32, i32
  }
}

module attributes {stable_mosaic.version = 11 : i64} {
  func.func @kernel(%arg0: i32, %arg1: memref<8x32xf32, #tpu.memory_space<vmem>>, %arg2: memref<8x32xf32, #tpu.memory_space<vmem>>, %arg3: memref<32x32xf32, #tpu.memory_space<vmem>>, %arg4: memref<32x32xf32, #tpu.memory_space<vmem>>, %arg5: memref<1x32xf32, #tpu.memory_space<vmem>>, %arg6: memref<32x32xf32, #tpu.memory_space<vmem>>, %arg7: memref<1x32xf32, #tpu.memory_space<vmem>>, %arg8: memref<32x32xf32, #tpu.memory_space<vmem>>, %arg9: memref<1x32xf32, #tpu.memory_space<vmem>>, %arg10: memref<1x32xf32, #tpu.memory_space<vmem>>, %arg11: memref<1x32xf32, #tpu.memory_space<vmem>>, %arg12: memref<8x32xf32, #tpu.memory_space<vmem>>, %arg13: memref<8x32xf32, #tpu.memory_space<vmem>>) attributes {dimension_semantics = [#tpu.dimension_semantics<parallel>], iteration_bounds = array<i64: 2>, scalar_prefetch = 0 : i64, scratch_operands = 0 : i64, tpu.core_type = #tpu.core_type<tc>, window_params = [{transform_indices = @transform_0, window_bounds = array<i64: 8, 32>}, {transform_indices = @transform_1, window_bounds = array<i64: 8, 32>}, {pipeline_mode = #tpu.pipeline_mode<synchronous>, transform_indices = @transform_2, window_bounds = array<i64: 32, 32>}, {pipeline_mode = #tpu.pipeline_mode<synchronous>, transform_indices = @transform_3, window_bounds = array<i64: 32, 32>}, {pipeline_mode = #tpu.pipeline_mode<synchronous>, transform_indices = @transform_4, window_bounds = array<i64: 1, 32>}, {pipeline_mode = #tpu.pipeline_mode<synchronous>, transform_indices = @transform_5, window_bounds = array<i64: 32, 32>}, {pipeline_mode = #tpu.pipeline_mode<synchronous>, transform_indices = @transform_6, window_bounds = array<i64: 1, 32>}, {pipeline_mode = #tpu.pipeline_mode<synchronous>, transform_indices = @transform_7, window_bounds = array<i64: 32, 32>}, {pipeline_mode = #tpu.pipeline_mode<synchronous>, transform_indices = @transform_8, window_bounds = array<i64: 1, 32>}, {pipeline_mode = #tpu.pipeline_mode<synchronous>, transform_indices = @transform_9, window_bounds = array<i64: 1, 32>}, {pipeline_mode = #tpu.pipeline_mode<synchronous>, transform_indices = @transform_10, window_bounds = array<i64: 1, 32>}, {transform_indices = @transform_11, window_bounds = array<i64: 8, 32>}, {transform_indices = @transform_12, window_bounds = array<i64: 8, 32>}]} {
    %c0 = arith.constant 0 : index
    %c0_0 = arith.constant 0 : index
    %0 = vector.load %arg1[%c0, %c0_0] : memref<8x32xf32, #tpu.memory_space<vmem>>, vector<8x32xf32>
    %c0_1 = arith.constant 0 : index
    %c0_2 = arith.constant 0 : index
    %1 = vector.load %arg3[%c0_1, %c0_2] : memref<32x32xf32, #tpu.memory_space<vmem>>, vector<32x32xf32>
    %cst = arith.constant dense<0.000000e+00> : vector<8x32xf32>
    %2 = tpu.matmul %0, %1, %cst {dimension_numbers = #tpu.dot_dimension_numbers<[1], [0], [0], [1], [0, 0, 1, 1], [], []>} : vector<8x32xf32>, vector<32x32xf32>, vector<8x32xf32> -> vector<8x32xf32>
    %c0_3 = arith.constant 0 : index
    %c0_4 = arith.constant 0 : index
    %3 = vector.load %arg2[%c0_3, %c0_4] : memref<8x32xf32, #tpu.memory_space<vmem>>, vector<8x32xf32>
    %c0_5 = arith.constant 0 : index
    %c0_6 = arith.constant 0 : index
    %4 = vector.load %arg4[%c0_5, %c0_6] : memref<32x32xf32, #tpu.memory_space<vmem>>, vector<32x32xf32>
    %cst_7 = arith.constant dense<0.000000e+00> : vector<8x32xf32>
    %5 = tpu.matmul %3, %4, %cst_7 {dimension_numbers = #tpu.dot_dimension_numbers<[1], [0], [0], [1], [0, 0, 1, 1], [], []>} : vector<8x32xf32>, vector<32x32xf32>, vector<8x32xf32> -> vector<8x32xf32>
    %6 = arith.addf %2, %5 : vector<8x32xf32>
    %c0_8 = arith.constant 0 : index
    %c0_9 = arith.constant 0 : index
    %7 = vector.load %arg5[%c0_8, %c0_9] : memref<1x32xf32, #tpu.memory_space<vmem>>, vector<1x32xf32>
    %8 = vector.broadcast %7 : vector<1x32xf32> to vector<8x32xf32>
    %9 = arith.addf %6, %8 : vector<8x32xf32>
    %cst_10 = arith.constant 0.000000e+00 : f32
    %10 = vector.broadcast %cst_10 : f32 to vector<8x32xf32>
    %11 = arith.maximumf %9, %10 : vector<8x32xf32>
    %c0_11 = arith.constant 0 : index
    %c0_12 = arith.constant 0 : index
    %12 = vector.load %arg6[%c0_11, %c0_12] : memref<32x32xf32, #tpu.memory_space<vmem>>, vector<32x32xf32>
    %cst_13 = arith.constant dense<0.000000e+00> : vector<8x32xf32>
    %13 = tpu.matmul %11, %12, %cst_13 {dimension_numbers = #tpu.dot_dimension_numbers<[1], [0], [0], [1], [0, 0, 1, 1], [], []>} : vector<8x32xf32>, vector<32x32xf32>, vector<8x32xf32> -> vector<8x32xf32>
    %c0_14 = arith.constant 0 : index
    %c0_15 = arith.constant 0 : index
    %14 = vector.load %arg7[%c0_14, %c0_15] : memref<1x32xf32, #tpu.memory_space<vmem>>, vector<1x32xf32>
    %15 = vector.broadcast %14 : vector<1x32xf32> to vector<8x32xf32>
    %16 = arith.addf %13, %15 : vector<8x32xf32>
    %cst_16 = arith.constant 0.000000e+00 : f32
    %17 = vector.broadcast %cst_16 : f32 to vector<8x32xf32>
    %18 = arith.maximumf %16, %17 : vector<8x32xf32>
    %c0_17 = arith.constant 0 : index
    %c0_18 = arith.constant 0 : index
    %19 = vector.load %arg8[%c0_17, %c0_18] : memref<32x32xf32, #tpu.memory_space<vmem>>, vector<32x32xf32>
    %cst_19 = arith.constant dense<0.000000e+00> : vector<8x32xf32>
    %20 = tpu.matmul %18, %19, %cst_19 {dimension_numbers = #tpu.dot_dimension_numbers<[1], [0], [0], [1], [0, 0, 1, 1], [], []>} : vector<8x32xf32>, vector<32x32xf32>, vector<8x32xf32> -> vector<8x32xf32>
    %c0_20 = arith.constant 0 : index
    %c0_21 = arith.constant 0 : index
    %21 = vector.load %arg9[%c0_20, %c0_21] : memref<1x32xf32, #tpu.memory_space<vmem>>, vector<1x32xf32>
    %22 = vector.broadcast %21 : vector<1x32xf32> to vector<8x32xf32>
    %23 = arith.addf %20, %22 : vector<8x32xf32>
    %cst_22 = arith.constant dense<0.000000e+00> : vector<8xf32>
    %24 = vector.multi_reduction <add>, %23, %cst_22 [1] : vector<8x32xf32> to vector<8xf32>
    %25 = vector.shape_cast %24 : vector<8xf32> to vector<8x1xf32>
    %cst_23 = arith.constant 3.200000e+01 : f32
    %26 = vector.broadcast %cst_23 : f32 to vector<8x1xf32>
    %27 = arith.divf %25, %26 : vector<8x1xf32>
    %28 = vector.broadcast %27 : vector<8x1xf32> to vector<8x32xf32>
    %29 = arith.subf %23, %28 : vector<8x32xf32>
    %30 = arith.mulf %29, %29 : vector<8x32xf32>
    %cst_24 = arith.constant dense<0.000000e+00> : vector<8xf32>
    %31 = vector.multi_reduction <add>, %30, %cst_24 [1] : vector<8x32xf32> to vector<8xf32>
    %32 = vector.shape_cast %31 : vector<8xf32> to vector<8x1xf32>
    %cst_25 = arith.constant 3.200000e+01 : f32
    %33 = vector.broadcast %cst_25 : f32 to vector<8x1xf32>
    %34 = arith.divf %32, %33 : vector<8x1xf32>
    %cst_26 = arith.constant 9.99999974E-6 : f32
    %35 = vector.broadcast %cst_26 : f32 to vector<8x1xf32>
    %36 = arith.addf %34, %35 : vector<8x1xf32>
    %37 = math.rsqrt %36 : vector<8x1xf32>
    %38 = vector.broadcast %37 : vector<8x1xf32> to vector<8x32xf32>
    %39 = arith.mulf %29, %38 : vector<8x32xf32>
    %c0_27 = arith.constant 0 : index
    %c0_28 = arith.constant 0 : index
    %40 = vector.load %arg10[%c0_27, %c0_28] : memref<1x32xf32, #tpu.memory_space<vmem>>, vector<1x32xf32>
    %41 = vector.broadcast %40 : vector<1x32xf32> to vector<8x32xf32>
    %42 = arith.mulf %39, %41 : vector<8x32xf32>
    %c0_29 = arith.constant 0 : index
    %c0_30 = arith.constant 0 : index
    %43 = vector.load %arg11[%c0_29, %c0_30] : memref<1x32xf32, #tpu.memory_space<vmem>>, vector<1x32xf32>
    %44 = vector.broadcast %43 : vector<1x32xf32> to vector<8x32xf32>
    %45 = arith.addf %42, %44 : vector<8x32xf32>
    %c0_31 = arith.constant 0 : index
    %c0_32 = arith.constant 0 : index
    %46 = vector.load %arg2[%c0_31, %c0_32] : memref<8x32xf32, #tpu.memory_space<vmem>>, vector<8x32xf32>
    %47 = arith.addf %45, %46 : vector<8x32xf32>
    %c0_33 = arith.constant 0 : index
    %c0_34 = arith.constant 0 : index
    %48 = vector.load %arg12[%c0_33, %c0_34] : memref<8x32xf32, #tpu.memory_space<vmem>>, vector<8x32xf32>
    tpu.vector_store %arg12[%c0_33, %c0_34], %45 {strides = array<i32>} : memref<8x32xf32, #tpu.memory_space<vmem>>, vector<8x32xf32>,
    %c0_35 = arith.constant 0 : index
    %c0_36 = arith.constant 0 : index
    %49 = vector.load %arg13[%c0_35, %c0_36] : memref<8x32xf32, #tpu.memory_space<vmem>>, vector<8x32xf32>
    tpu.vector_store %arg13[%c0_35, %c0_36], %47 {strides = array<i32>} : memref<8x32xf32, #tpu.memory_space<vmem>>, vector<8x32xf32>,
    return
  }
  func.func @transform_0(%arg0: i32) -> (i32, i32) {
    %c0_i32 = arith.constant 0 : i32
    %c0_i32_0 = arith.constant 0 : i32
    return %arg0, %c0_i32 : i32, i32
  }
  func.func @transform_1(%arg0: i32) -> (i32, i32) {
    %c0_i32 = arith.constant 0 : i32
    %c0_i32_0 = arith.constant 0 : i32
    return %arg0, %c0_i32 : i32, i32
  }
  func.func @transform_2(%arg0: i32) -> (i32, i32) {
    %c0_i32 = arith.constant 0 : i32
    %c0_i32_0 = arith.constant 0 : i32
    %c0_i32_1 = arith.constant 0 : i32
    return %c0_i32, %c0_i32_0 : i32, i32
  }
  func.func @transform_3(%arg0: i32) -> (i32, i32) {
    %c0_i32 = arith.constant 0 : i32
    %c0_i32_0 = arith.constant 0 : i32
    %c0_i32_1 = arith.constant 0 : i32
    return %c0_i32, %c0_i32_0 : i32, i32
  }
  func.func @transform_4(%arg0: i32) -> (i32, i32) {
    %c0_i32 = arith.constant 0 : i32
    %c0_i32_0 = arith.constant 0 : i32
    %c0_i32_1 = arith.constant 0 : i32
    return %c0_i32, %c0_i32_0 : i32, i32
  }
  func.func @transform_5(%arg0: i32) -> (i32, i32) {
    %c0_i32 = arith.constant 0 : i32
    %c0_i32_0 = arith.constant 0 : i32
    %c0_i32_1 = arith.constant 0 : i32
    return %c0_i32, %c0_i32_0 : i32, i32
  }
  func.func @transform_6(%arg0: i32) -> (i32, i32) {
    %c0_i32 = arith.constant 0 : i32
    %c0_i32_0 = arith.constant 0 : i32
    %c0_i32_1 = arith.constant 0 : i32
    return %c0_i32, %c0_i32_0 : i32, i32
  }
  func.func @transform_7(%arg0: i32) -> (i32, i32) {
    %c0_i32 = arith.constant 0 : i32
    %c0_i32_0 = arith.constant 0 : i32
    %c0_i32_1 = arith.constant 0 : i32
    return %c0_i32, %c0_i32_0 : i32, i32
  }
  func.func @transform_8(%arg0: i32) -> (i32, i32) {
    %c0_i32 = arith.constant 0 : i32
    %c0_i32_0 = arith.constant 0 : i32
    %c0_i32_1 = arith.constant 0 : i32
    return %c0_i32, %c0_i32_0 : i32, i32
  }
  func.func @transform_9(%arg0: i32) -> (i32, i32) {
    %c0_i32 = arith.constant 0 : i32
    %c0_i32_0 = arith.constant 0 : i32
    %c0_i32_1 = arith.constant 0 : i32
    return %c0_i32, %c0_i32_0 : i32, i32
  }
  func.func @transform_10(%arg0: i32) -> (i32, i32) {
    %c0_i32 = arith.constant 0 : i32
    %c0_i32_0 = arith.constant 0 : i32
    %c0_i32_1 = arith.constant 0 : i32
    return %c0_i32, %c0_i32_0 : i32, i32
  }
  func.func @transform_11(%arg0: i32) -> (i32, i32) {
    %c0_i32 = arith.constant 0 : i32
    %c0_i32_0 = arith.constant 0 : i32
    return %arg0, %c0_i32 : i32, i32
  }
  func.func @transform_12(%arg0: i32) -> (i32, i32) {
    %c0_i32 = arith.constant 0 : i32
    %c0_i32_0 = arith.constant 0 : i32
    return %arg0, %c0_i32 : i32, i32
  }
}

</mosaic_0001>

<llo_original>
// kernel: processor_forward.4
$region0: #{processor_forward.4}
  #allocation0 [shape = 'u32[]', space=smem, size = 0x4, offset = 0x4, fixed_abs, tag = 'smem constant byte address 0x4 - core index']
  #allocation1 [shape = 'u32[144,128]{1,0:T(1,128)}', space=vmem, size = 0x12000, scoped, tag = 'internal scratch']
  %s0 = inlined_call_operand.vmem [shape: f32[16,32], index: 0, kind: input, shape index: {}]
  %s1 = inlined_call_operand.vmem [shape: f32[16,32], index: 1, kind: input, shape index: {}]
  %s2 = inlined_call_operand.vmem [shape: f32[32,32], index: 2, kind: input, shape index: {}]
  %s3 = inlined_call_operand.vmem [shape: f32[32,32], index: 3, kind: input, shape index: {}]
  %s4 = inlined_call_operand.vmem [shape: f32[1,32], index: 4, kind: input, shape index: {}]
  %s5 = inlined_call_operand.vmem [shape: f32[32,32], index: 5, kind: input, shape index: {}]
  %s6 = inlined_call_operand.vmem [shape: f32[1,32], index: 6, kind: input, shape index: {}]
  %s7 = inlined_call_operand.vmem [shape: f32[32,32], index: 7, kind: input, shape index: {}]
  %s8 = inlined_call_operand.vmem [shape: f32[1,32], index: 8, kind: input, shape index: {}]
  %s9 = inlined_call_operand.vmem [shape: f32[1,32], index: 9, kind: input, shape index: {}]
  %s10 = inlined_call_operand.vmem [shape: f32[1,32], index: 10, kind: input, shape index: {}]
  %s11 = inlined_call_operand.vmem [shape: f32[16,32], index: 11, kind: output, shape index: {0}]
  %s12 = inlined_call_operand.vmem [shape: f32[16,32], index: 12, kind: output, shape index: {1}]
  %13 = xla_tuple %s11, %s12
  %s14 = sld [smem:[#allocation0]]
  $region85: #{processor_forward.4} parent=0
    _
  %s16 = ssub.s32 1, %s14
  %s17 = scalar_select 0, %s16, %s14
  loop: start=0, step=1, limit=4
  $region2: #{processor_forward.4} parent=0 // loop_pre_header
    _
  $region3: #{processor_forward.4} parent=0 // loop_header
    %s19 = sphi 0, %s23
    %p20 = scmp.ge.s32.totalorder %s19, 4
    %s29 = sphi 0, %s31
    %s32 = sphi 0, %s29
    %s33 = sphi 0, %s32
    %s49 = sphi 0, %s33
    %s55 = sphi 0, %s57
    %s58 = sphi 0, %s55
    %s59 = sphi 0, %s58
    %s75 = sphi 0, %s59
    %s79 = sphi 0, %s79
    %s81 = sphi 0, %s79
    %s82 = sphi 0, %s81
    %s96 = sphi 0, %s82
    %s100 = sphi 0, %s100
    %s102 = sphi 0, %s100
    %s103 = sphi 0, %s102
    %s117 = sphi 0, %s103
    %s121 = sphi 0, %s121
    %s123 = sphi 0, %s121
    %s124 = sphi 0, %s123
    %s138 = sphi 0, %s124
    %s142 = sphi 0, %s142
    %s144 = sphi 0, %s142
    %s145 = sphi 0, %s144
    %s159 = sphi 0, %s145
    %s163 = sphi 0, %s163
    %s165 = sphi 0, %s163
    %s166 = sphi 0, %s165
    %s180 = sphi 0, %s166
    %s184 = sphi 0, %s184
    %s186 = sphi 0, %s184
    %s187 = sphi 0, %s186
    %s201 = sphi 0, %s187
    %s205 = sphi 0, %s205
    %s207 = sphi 0, %s205
    %s208 = sphi 0, %s207
    %s222 = sphi 0, %s208
    %s226 = sphi 0, %s226
    %s228 = sphi 0, %s226
    %s229 = sphi 0, %s228
    %s243 = sphi 0, %s229
    %s247 = sphi 0, %s247
    %s249 = sphi 0, %s247
    %s250 = sphi 0, %s249
    %s264 = sphi 0, %s250
    %s270 = sphi 0, %s272
    %s273 = sphi 0, %s270
    %s274 = sphi 0, %s273
    %s290 = sphi 0, %s274
    %s296 = sphi 0, %s298
    %s299 = sphi 0, %s296
    %s300 = sphi 0, %s299
    %s316 = sphi 0, %s300
  $region4: #{processor_forward.4} parent=0 // loop_header_branch
    %22 = sbr.rel (%p20) target = $region8
  $region5: #{processor_forward.4} parent=0 // loop_body
    %s24 = ssub.s32 %s19, 1
    %s25 = ssub.s32 %s19, 2
    %s26 = sadd.s32 %s19, 1
    %s27 = ssub.s32 %s19, %s26
    %p28 = scmp.eq.s32.totalorder %s27, 0
    %s30 = sadd.s32 %s29, 1
    %s31 = scalar_select %p28, %s29, %s30
    %p34 = pneg %p28
    %p35 = scmp.eq.s32.totalorder %s19, 1
    %p36 = por %p34, %p35
    %p37 = scmp.ne.s32.totalorder %s29, %s32
    %p38 = scmp.eq.s32.totalorder %s19, 0
    %p39 = por %p37, %p38
    %p40 = scmp.ne.s32.totalorder %s29, %s32
    %p41 = scmp.eq.s32.totalorder %s24, 1
    %p42 = por %p40, %p41
    %p43 = scmp.ne.s32.totalorder %s32, %s33
    %p44 = scmp.eq.s32.totalorder %s24, 0
    %p45 = por %p43, %p44
    %p46 = scmp.ne.s32.totalorder %s32, %s33
    %p47 = scmp.eq.s32.totalorder %s25, 1
    %p48 = por %p46, %p47
    %p50 = scmp.ne.s32.totalorder %s33, %s49
    %p51 = scmp.eq.s32.totalorder %s25, 0
    %p52 = por %p50, %p51
    %s53 = ssub.s32 %s19, %s26
    %p54 = scmp.eq.s32.totalorder %s53, 0
    %s56 = sadd.s32 %s55, 1
    %s57 = scalar_select %p54, %s55, %s56
    %p60 = pneg %p54
    %p61 = scmp.eq.s32.totalorder %s19, 1
    %p62 = por %p60, %p61
    %p63 = scmp.ne.s32.totalorder %s55, %s58
    %p64 = scmp.eq.s32.totalorder %s19, 0
    %p65 = por %p63, %p64
    %p66 = scmp.ne.s32.totalorder %s55, %s58
    %p67 = scmp.eq.s32.totalorder %s24, 1
    %p68 = por %p66, %p67
    %p69 = scmp.ne.s32.totalorder %s58, %s59
    %p70 = scmp.eq.s32.totalorder %s24, 0
    %p71 = por %p69, %p70
    %p72 = scmp.ne.s32.totalorder %s58, %s59
    %p73 = scmp.eq.s32.totalorder %s25, 1
    %p74 = por %p72, %p73
    %p76 = scmp.ne.s32.totalorder %s59, %s75
    %p77 = scmp.eq.s32.totalorder %s25, 0
    %p78 = por %p76, %p77
    %s80 = sadd.s32 %s79, 1
    %p83 = scmp.eq.s32.totalorder %s19, 1
    %p84 = scmp.ne.s32.totalorder %s79, %s81
    %p85 = scmp.eq.s32.totalorder %s19, 0
    %p86 = por %p84, %p85
    %p87 = scmp.ne.s32.totalorder %s79, %s81
    %p88 = scmp.eq.s32.totalorder %s24, 1
    %p89 = por %p87, %p88
    %p90 = scmp.ne.s32.totalorder %s81, %s82
    %p91 = scmp.eq.s32.totalorder %s24, 0
    %p92 = por %p90, %p91
    %p93 = scmp.ne.s32.totalorder %s81, %s82
    %p94 = scmp.eq.s32.totalorder %s25, 1
    %p95 = por %p93, %p94
    %p97 = scmp.ne.s32.totalorder %s82, %s96
    %p98 = scmp.eq.s32.totalorder %s25, 0
    %p99 = por %p97, %p98
    %s101 = sadd.s32 %s100, 1
    %p104 = scmp.eq.s32.totalorder %s19, 1
    %p105 = scmp.ne.s32.totalorder %s100, %s102
    %p106 = scmp.eq.s32.totalorder %s19, 0
    %p107 = por %p105, %p106
    %p108 = scmp.ne.s32.totalorder %s100, %s102
    %p109 = scmp.eq.s32.totalorder %s24, 1
    %p110 = por %p108, %p109
    %p111 = scmp.ne.s32.totalorder %s102, %s103
    %p112 = scmp.eq.s32.totalorder %s24, 0
    %p113 = por %p111, %p112
    %p114 = scmp.ne.s32.totalorder %s102, %s103
    %p115 = scmp.eq.s32.totalorder %s25, 1
    %p116 = por %p114, %p115
    %p118 = scmp.ne.s32.totalorder %s103, %s117
    %p119 = scmp.eq.s32.totalorder %s25, 0
    %p120 = por %p118, %p119
    %s122 = sadd.s32 %s121, 1
    %p125 = scmp.eq.s32.totalorder %s19, 1
    %p126 = scmp.ne.s32.totalorder %s121, %s123
    %p127 = scmp.eq.s32.totalorder %s19, 0
    %p128 = por %p126, %p127
    %p129 = scmp.ne.s32.totalorder %s121, %s123
    %p130 = scmp.eq.s32.totalorder %s24, 1
    %p131 = por %p129, %p130
    %p132 = scmp.ne.s32.totalorder %s123, %s124
    %p133 = scmp.eq.s32.totalorder %s24, 0
    %p134 = por %p132, %p133
    %p135 = scmp.ne.s32.totalorder %s123, %s124
    %p136 = scmp.eq.s32.totalorder %s25, 1
    %p137 = por %p135, %p136
    %p139 = scmp.ne.s32.totalorder %s124, %s138
    %p140 = scmp.eq.s32.totalorder %s25, 0
    %p141 = por %p139, %p140
    %s143 = sadd.s32 %s142, 1
    %p146 = scmp.eq.s32.totalorder %s19, 1
    %p147 = scmp.ne.s32.totalorder %s142, %s144
    %p148 = scmp.eq.s32.totalorder %s19, 0
    %p149 = por %p147, %p148
    %p150 = scmp.ne.s32.totalorder %s142, %s144
    %p151 = scmp.eq.s32.totalorder %s24, 1
    %p152 = por %p150, %p151
    %p153 = scmp.ne.s32.totalorder %s144, %s145
    %p154 = scmp.eq.s32.totalorder %s24, 0
    %p155 = por %p153, %p154
    %p156 = scmp.ne.s32.totalorder %s144, %s145
    %p157 = scmp.eq.s32.totalorder %s25, 1
    %p158 = por %p156, %p157
    %p160 = scmp.ne.s32.totalorder %s145, %s159
    %p161 = scmp.eq.s32.totalorder %s25, 0
    %p162 = por %p160, %p161
    %s164 = sadd.s32 %s163, 1
    %p167 = scmp.eq.s32.totalorder %s19, 1
    %p168 = scmp.ne.s32.totalorder %s163, %s165
    %p169 = scmp.eq.s32.totalorder %s19, 0
    %p170 = por %p168, %p169
    %p171 = scmp.ne.s32.totalorder %s163, %s165
    %p172 = scmp.eq.s32.totalorder %s24, 1
    %p173 = por %p171, %p172
    %p174 = scmp.ne.s32.totalorder %s165, %s166
    %p175 = scmp.eq.s32.totalorder %s24, 0
    %p176 = por %p174, %p175
    %p177 = scmp.ne.s32.totalorder %s165, %s166
    %p178 = scmp.eq.s32.totalorder %s25, 1
    %p179 = por %p177, %p178
    %p181 = scmp.ne.s32.totalorder %s166, %s180
    %p182 = scmp.eq.s32.totalorder %s25, 0
    %p183 = por %p181, %p182
    %s185 = sadd.s32 %s184, 1
    %p188 = scmp.eq.s32.totalorder %s19, 1
    %p189 = scmp.ne.s32.totalorder %s184, %s186
    %p190 = scmp.eq.s32.totalorder %s19, 0
    %p191 = por %p189, %p190
    %p192 = scmp.ne.s32.totalorder %s184, %s186
    %p193 = scmp.eq.s32.totalorder %s24, 1
    %p194 = por %p192, %p193
    %p195 = scmp.ne.s32.totalorder %s186, %s187
    %p196 = scmp.eq.s32.totalorder %s24, 0
    %p197 = por %p195, %p196
    %p198 = scmp.ne.s32.totalorder %s186, %s187
    %p199 = scmp.eq.s32.totalorder %s25, 1
    %p200 = por %p198, %p199
    %p202 = scmp.ne.s32.totalorder %s187, %s201
    %p203 = scmp.eq.s32.totalorder %s25, 0
    %p204 = por %p202, %p203
    %s206 = sadd.s32 %s205, 1
    %p209 = scmp.eq.s32.totalorder %s19, 1
    %p210 = scmp.ne.s32.totalorder %s205, %s207
    %p211 = scmp.eq.s32.totalorder %s19, 0
    %p212 = por %p210, %p211
    %p213 = scmp.ne.s32.totalorder %s205, %s207
    %p214 = scmp.eq.s32.totalorder %s24, 1
    %p215 = por %p213, %p214
    %p216 = scmp.ne.s32.totalorder %s207, %s208
    %p217 = scmp.eq.s32.totalorder %s24, 0
    %p218 = por %p216, %p217
    %p219 = scmp.ne.s32.totalorder %s207, %s208
    %p220 = scmp.eq.s32.totalorder %s25, 1
    %p221 = por %p219, %p220
    %p223 = scmp.ne.s32.totalorder %s208, %s222
    %p224 = scmp.eq.s32.totalorder %s25, 0
    %p225 = por %p223, %p224
    %s227 = sadd.s32 %s226, 1
    %p230 = scmp.eq.s32.totalorder %s19, 1
    %p231 = scmp.ne.s32.totalorder %s226, %s228
    %p232 = scmp.eq.s32.totalorder %s19, 0
    %p233 = por %p231, %p232
    %p234 = scmp.ne.s32.totalorder %s226, %s228
    %p235 = scmp.eq.s32.totalorder %s24, 1
    %p236 = por %p234, %p235
    %p237 = scmp.ne.s32.totalorder %s228, %s229
    %p238 = scmp.eq.s32.totalorder %s24, 0
    %p239 = por %p237, %p238
    %p240 = scmp.ne.s32.totalorder %s228, %s229
    %p241 = scmp.eq.s32.totalorder %s25, 1
    %p242 = por %p240, %p241
    %p244 = scmp.ne.s32.totalorder %s229, %s243
    %p245 = scmp.eq.s32.totalorder %s25, 0
    %p246 = por %p244, %p245
    %s248 = sadd.s32 %s247, 1
    %p251 = scmp.eq.s32.totalorder %s19, 1
    %p252 = scmp.ne.s32.totalorder %s247, %s249
    %p253 = scmp.eq.s32.totalorder %s19, 0
    %p254 = por %p252, %p253
    %p255 = scmp.ne.s32.totalorder %s247, %s249
    %p256 = scmp.eq.s32.totalorder %s24, 1
    %p257 = por %p255, %p256
    %p258 = scmp.ne.s32.totalorder %s249, %s250
    %p259 = scmp.eq.s32.totalorder %s24, 0
    %p260 = por %p258, %p259
    %p261 = scmp.ne.s32.totalorder %s249, %s250
    %p262 = scmp.eq.s32.totalorder %s25, 1
    %p263 = por %p261, %p262
    %p265 = scmp.ne.s32.totalorder %s250, %s264
    %p266 = scmp.eq.s32.totalorder %s25, 0
    %p267 = por %p265, %p266
    %s268 = ssub.s32 %s19, %s26
    %p269 = scmp.eq.s32.totalorder %s268, 0
    %s271 = sadd.s32 %s270, 1
    %s272 = scalar_select %p269, %s270, %s271
    %p275 = pneg %p269
    %p276 = scmp.eq.s32.totalorder %s19, 1
    %p277 = por %p275, %p276
    %p278 = scmp.ne.s32.totalorder %s270, %s273
    %p279 = scmp.eq.s32.totalorder %s19, 0
    %p280 = por %p278, %p279
    %p281 = scmp.ne.s32.totalorder %s270, %s273
    %p282 = scmp.eq.s32.totalorder %s24, 1
    %p283 = por %p281, %p282
    %p284 = scmp.ne.s32.totalorder %s273, %s274
    %p285 = scmp.eq.s32.totalorder %s24, 0
    %p286 = por %p284, %p285
    %p287 = scmp.ne.s32.totalorder %s273, %s274
    %p288 = scmp.eq.s32.totalorder %s25, 1
    %p289 = por %p287, %p288
    %p291 = scmp.ne.s32.totalorder %s274, %s290
    %p292 = scmp.eq.s32.totalorder %s25, 0
    %p293 = por %p291, %p292
    %s294 = ssub.s32 %s19, %s26
    %p295 = scmp.eq.s32.totalorder %s294, 0
    %s297 = sadd.s32 %s296, 1
    %s298 = scalar_select %p295, %s296, %s297
    %p301 = pneg %p295
    %p302 = scmp.eq.s32.totalorder %s19, 1
    %p303 = por %p301, %p302
    %p304 = scmp.ne.s32.totalorder %s296, %s299
    %p305 = scmp.eq.s32.totalorder %s19, 0
    %p306 = por %p304, %p305
    %p307 = scmp.ne.s32.totalorder %s296, %s299
    %p308 = scmp.eq.s32.totalorder %s24, 1
    %p309 = por %p307, %p308
    %p310 = scmp.ne.s32.totalorder %s299, %s300
    %p311 = scmp.eq.s32.totalorder %s24, 0
    %p312 = por %p310, %p311
    %p313 = scmp.ne.s32.totalorder %s299, %s300
    %p314 = scmp.eq.s32.totalorder %s25, 1
    %p315 = por %p313, %p314
    %p317 = scmp.ne.s32.totalorder %s300, %s316
    %p318 = scmp.eq.s32.totalorder %s25, 0
    %p319 = por %p317, %p318
    %p320 = scmp.le.s32.totalorder 1, %s19
    %p321 = scmp.lt.s32.totalorder %s19, 3
    %p322 = pnand %p320, %p321
    %p323 = pneg %p322
    // Predicated region
    $region9: #{processor_forward.4} parent=5 // pred_check
      _
    $region10: #{processor_forward.4} parent=5 // pred_check_branch
      %325 = sbr.rel (%p322) target = $region12
    $region11: #{processor_forward.4} parent=5 // pred_region
      %s326 = ssub.s32 %s19, 1
      // Predicated region
      $region13: #{processor_forward.4} parent=11 // pred_check
        %p327 = pneg %p92
      $region14: #{processor_forward.4} parent=11 // pred_check_branch
        %329 = sbr.rel (%p327) target = $region16
      $region15: #{processor_forward.4} parent=11 // pred_region
        _
      $region16: #{processor_forward.4} parent=11 // pred_fallthru
        _
      // Predicated region
      $region17: #{processor_forward.4} parent=11 // pred_check
        %p330 = pneg %p113
      $region18: #{processor_forward.4} parent=11 // pred_check_branch
        %332 = sbr.rel (%p330) target = $region20
      $region19: #{processor_forward.4} parent=11 // pred_region
        _
      $region20: #{processor_forward.4} parent=11 // pred_fallthru
        _
      // Predicated region
      $region21: #{processor_forward.4} parent=11 // pred_check
        %p333 = pneg %p134
      $region22: #{processor_forward.4} parent=11 // pred_check_branch
        %335 = sbr.rel (%p333) target = $region24
      $region23: #{processor_forward.4} parent=11 // pred_region
        _
      $region24: #{processor_forward.4} parent=11 // pred_fallthru
        _
      // Predicated region
      $region25: #{processor_forward.4} parent=11 // pred_check
        %p336 = pneg %p155
      $region26: #{processor_forward.4} parent=11 // pred_check_branch
        %338 = sbr.rel (%p336) target = $region28
      $region27: #{processor_forward.4} parent=11 // pred_region
        _
      $region28: #{processor_forward.4} parent=11 // pred_fallthru
        _
      // Predicated region
      $region29: #{processor_forward.4} parent=11 // pred_check
        %p339 = pneg %p176
      $region30: #{processor_forward.4} parent=11 // pred_check_branch
        %341 = sbr.rel (%p339) target = $region32
      $region31: #{processor_forward.4} parent=11 // pred_region
        _
      $region32: #{processor_forward.4} parent=11 // pred_fallthru
        _
      // Predicated region
      $region33: #{processor_forward.4} parent=11 // pred_check
        %p342 = pneg %p197
      $region34: #{processor_forward.4} parent=11 // pred_check_branch
        %344 = sbr.rel (%p342) target = $region36
      $region35: #{processor_forward.4} parent=11 // pred_region
        _
      $region36: #{processor_forward.4} parent=11 // pred_fallthru
        _
      // Predicated region
      $region37: #{processor_forward.4} parent=11 // pred_check
        %p345 = pneg %p218
      $region38: #{processor_forward.4} parent=11 // pred_check_branch
        %347 = sbr.rel (%p345) target = $region40
      $region39: #{processor_forward.4} parent=11 // pred_region
        _
      $region40: #{processor_forward.4} parent=11 // pred_fallthru
        _
      // Predicated region
      $region41: #{processor_forward.4} parent=11 // pred_check
        %p348 = pneg %p239
      $region42: #{processor_forward.4} parent=11 // pred_check_branch
        %350 = sbr.rel (%p348) target = $region44
      $region43: #{processor_forward.4} parent=11 // pred_region
        _
      $region44: #{processor_forward.4} parent=11 // pred_fallthru
        _
      // Predicated region
      $region45: #{processor_forward.4} parent=11 // pred_check
        %p351 = pneg %p260
      $region46: #{processor_forward.4} parent=11 // pred_check_branch
        %353 = sbr.rel (%p351) target = $region48
      $region47: #{processor_forward.4} parent=11 // pred_region
        _
      $region48: #{processor_forward.4} parent=11 // pred_fallthru
        _
    $region12: #{processor_forward.4} parent=5 // pred_fallthru
      _
    %p354 = scmp.lt.s32.totalorder %s19, 2
    // Predicated region
    $region49: #{processor_forward.4} parent=5 // pred_check
      %p355 = pneg %p354
    $region50: #{processor_forward.4} parent=5 // pred_check_branch
      %357 = sbr.rel (%p355) target = $region52
    $region51: #{processor_forward.4} parent=5 // pred_region
      // Predicated region
      $region53: #{processor_forward.4} parent=51 // pred_check
        %p358 = pneg %p39
      $region54: #{processor_forward.4} parent=51 // pred_check_branch
        %360 = sbr.rel (%p358) target = $region56
      $region55: #{processor_forward.4} parent=51 // pred_region
        %p361 = scmp.lt.s32.totalorder %s19, 1
        %s362 = scalar_select %p361, %s19, 1
        %s363 = smul.addr %s362, 8
        %s364 = scalar_lea.vmem %s0, %s363
      $region56: #{processor_forward.4} parent=51 // pred_fallthru
        _
      // Predicated region
      $region57: #{processor_forward.4} parent=51 // pred_check
        %p365 = pneg %p65
      $region58: #{processor_forward.4} parent=51 // pred_check_branch
        %367 = sbr.rel (%p365) target = $region60
      $region59: #{processor_forward.4} parent=51 // pred_region
        %p368 = scmp.lt.s32.totalorder %s19, 1
        %s369 = scalar_select %p368, %s19, 1
        %s370 = smul.addr %s369, 8
        %s371 = scalar_lea.vmem %s1, %s370
      $region60: #{processor_forward.4} parent=51 // pred_fallthru
        _
    $region52: #{processor_forward.4} parent=5 // pred_fallthru
      _
    %p372 = scmp.le.s32.totalorder 1, %s19
    %p373 = scmp.lt.s32.totalorder %s19, 3
    %p374 = pnand %p372, %p373
    %p375 = pneg %p374
    // Predicated region
    $region61: #{processor_forward.4} parent=5 // pred_check
      _
    $region62: #{processor_forward.4} parent=5 // pred_check_branch
      %377 = sbr.rel (%p374) target = $region64
    $region63: #{processor_forward.4} parent=5 // pred_region
      %s378 = ssub.s32 %s19, 1
      %p379 = scmp.lt.s32.totalorder %s24, 1
      %s380 = scalar_select %p379, %s24, 1
      %s381 = smul.addr %s380, 8
      %s382 = scalar_lea.vmem %s0, %s381
      %p383 = pneg %p45
      %p384 = pneg %p42
      %p385 = scmp.lt.s32.totalorder %s24, 1
      %s386 = scalar_select %p385, %s24, 1
      %s387 = smul.addr %s386, 8
      %s388 = scalar_lea.vmem %s1, %s387
      %p389 = pneg %p71
      %p390 = pneg %p68
      %p391 = pneg %p92
      %p392 = pneg %p89
      %p393 = pneg %p113
      %p394 = pneg %p110
      %p395 = pneg %p134
      %p396 = pneg %p131
      %p397 = pneg %p155
      %p398 = pneg %p152
      %p399 = pneg %p176
      %p400 = pneg %p173
      %p401 = pneg %p197
      %p402 = pneg %p194
      %p403 = pneg %p218
      %p404 = pneg %p215
      %p405 = pneg %p239
      %p406 = pneg %p236
      %p407 = pneg %p260
      %p408 = pneg %p257
      %p409 = pneg %p286
      %p410 = pneg %p283
      %p411 = scmp.lt.s32.totalorder %s24, 1
      %s412 = scalar_select %p411, %s24, 1
      %s413 = smul.addr %s412, 8
      %s414 = scalar_lea.vmem %s11, %s413
      %p415 = pneg %p312
      %p416 = pneg %p309
      %p417 = scmp.lt.s32.totalorder %s24, 1
      %s418 = scalar_select %p417, %s24, 1
      %s419 = smul.addr %s418, 8
      %s420 = scalar_lea.vmem %s12, %s419
      %p421 = scmp.lt.s32.totalorder %s24, 1
      %s422 = scalar_select %p421, %s24, 1
      %s423 = smul.addr %s422, 8
      %s424 = scalar_lea.vmem %s0, %s423
      %p425 = scmp.lt.s32.totalorder %s24, 1
      %s426 = scalar_select %p425, %s24, 1
      %s427 = smul.addr %s426, 8
      %s428 = scalar_lea.vmem %s1, %s427
      %p429 = scmp.lt.s32.totalorder %s24, 1
      %s430 = scalar_select %p429, %s24, 1
      %s431 = smul.addr %s430, 8
      %s432 = scalar_lea.vmem %s11, %s431
      %p433 = scmp.lt.s32.totalorder %s24, 1
      %s434 = scalar_select %p433, %s24, 1
      %s435 = smul.addr %s434, 8
      %s436 = scalar_lea.vmem %s12, %s435
      %v437 = vld [vmem:[%s424] sm:$0xff]
      %v438 = vld [vmem:[%s2] sm:$0xff]
      %v439 = vld [vmem:[%s2 + $0x8] sm:$0xff]
      %v440 = vld [vmem:[%s2 + $0x10] sm:$0xff]
      %v441 = vld [vmem:[%s2 + $0x18] sm:$0xff]
      %v442 = vld [vmem:[%s428] sm:$0xff]
      %v443 = vld [vmem:[%s3] sm:$0xff]
      %v444 = vld [vmem:[%s3 + $0x8] sm:$0xff]
      %v445 = vld [vmem:[%s3 + $0x10] sm:$0xff]
      %v446 = vld [vmem:[%s3 + $0x18] sm:$0xff]
      %vm447 = vcmask 261120
      %v449 = vsel %vm447, %v442, 0
      %451 = vmatprep.subr.mxu0 0.0
      %452 = vmatpush1.msra.mxu0 0.0
      %453 = vmatprep.subr.mxu0 0.0
      %454 = vmatpush1.msra.mxu0 0.0
      %455 = vmatprep.subr.mxu0 0.0
      %456 = vmatpush1.msra.mxu0 0.0
      %457 = vmatprep.subr.mxu0 0.0
      %458 = vmatpush1.msra.mxu0 0.0
      %459 = vmatprep.subr.mxu0 0.0
      %460 = vmatpush1.msra.mxu0 0.0
      %461 = vmatprep.subr.mxu0 0.0
      %462 = vmatpush1.msra.mxu0 0.0
      %463 = vmatprep.subr.mxu0 0.0
      %464 = vmatpush1.msra.mxu0 0.0
      %465 = vmatprep.subr.mxu0 0.0
      %466 = vmatpush1.msra.mxu0 0.0
      %467 = vmatprep.subr.mxu0 0.0
      %468 = vmatpush1.msra.mxu0 0.0
      %469 = vmatprep.subr.mxu0 0.0
      %470 = vmatpush1.msra.mxu0 0.0
      %471 = vmatprep.subr.mxu0 0.0
      %472 = vmatpush1.msra.mxu0 0.0
      %473 = vmatprep.subr.mxu0 0.0
      %474 = vmatpush1.msra.mxu0 0.0
      %475 = vmatprep.subr.mxu0 0.0
      %476 = vmatpush1.msra.mxu0 %v446
      %477 = vmatprep.subr.mxu0 0.0
      %478 = vmatpush1.msra.mxu0 %v445
      %479 = vmatprep.subr.mxu0 0.0
      %480 = vmatpush1.msra.mxu0 %v444
      %481 = vmatprep.subr.mxu0 0.0
      %482 = vmatpush1.msra.mxu0 %v443
      %483 = vmatprep.subr.mxu0 0.0
      %484 = vmatpush2.msra.mxu0 0.0
      %485 = vmatprep.subr.mxu0 0.0
      %486 = vmatpush2.msra.mxu0 0.0
      %487 = vmatprep.subr.mxu0 0.0
      %488 = vmatpush2.msra.mxu0 0.0
      %489 = vmatprep.subr.mxu0 0.0
      %490 = vmatpush2.msra.mxu0 0.0
      %491 = vmatprep.subr.mxu0 0.0
      %492 = vmatpush2.msra.mxu0 0.0
      %493 = vmatprep.subr.mxu0 0.0
      %494 = vmatpush2.msra.mxu0 0.0
      %495 = vmatprep.subr.mxu0 0.0
      %496 = vmatpush2.msra.mxu0 0.0
      %497 = vmatprep.subr.mxu0 0.0
      %498 = vmatpush2.msra.mxu0 0.0
      %499 = vmatprep.subr.mxu0 0.0
      %500 = vmatpush2.msra.mxu0 0.0
      %501 = vmatprep.subr.mxu0 0.0
      %502 = vmatpush2.msra.mxu0 0.0
      %503 = vmatprep.subr.mxu0 0.0
      %504 = vmatpush2.msra.mxu0 0.0
      %505 = vmatprep.subr.mxu0 0.0
      %506 = vmatpush2.msra.mxu0 0.0
      %507 = vmatprep.subr.mxu0 0.0
      %508 = vmatpush2.msra.mxu0 0.0
      %509 = vmatprep.subr.mxu0 0.0
      %510 = vmatpush2.msra.mxu0 0.0
      %511 = vmatprep.subr.mxu0 0.0
      %512 = vmatpush2.msra.mxu0 0.0
      %513 = vmatprep.subr.mxu0 0.0
      %514 = vmatpush2.msra.mxu0 0.0
      %515 = vmatprep.mubr.f32.mxu0 0.0
      %516 = vmatmul.mubr.f32.gmra.mxu0 %v449
      %v517 = vpop.f32.mrf.mxu0
      %v518 = vadd.f32 0.0, %v517
      %v519 = vpop.f32.mrf.mxu0
      %520 = vdwg.mxu0
      %v522 = vsel %vm447, %v437, 0
      %524 = vmatprep.subr.mxu0 0.0
      %525 = vmatpush1.msra.mxu0 0.0
      %526 = vmatprep.subr.mxu0 0.0
      %527 = vmatpush1.msra.mxu0 0.0
      %528 = vmatprep.subr.mxu0 0.0
      %529 = vmatpush1.msra.mxu0 0.0
      %530 = vmatprep.subr.mxu0 0.0
      %531 = vmatpush1.msra.mxu0 0.0
      %532 = vmatprep.subr.mxu0 0.0
      %533 = vmatpush1.msra.mxu0 0.0
      %534 = vmatprep.subr.mxu0 0.0
      %535 = vmatpush1.msra.mxu0 0.0
      %536 = vmatprep.subr.mxu0 0.0
      %537 = vmatpush1.msra.mxu0 0.0
      %538 = vmatprep.subr.mxu0 0.0
      %539 = vmatpush1.msra.mxu0 0.0
      %540 = vmatprep.subr.mxu0 0.0
      %541 = vmatpush1.msra.mxu0 0.0
      %542 = vmatprep.subr.mxu0 0.0
      %543 = vmatpush1.msra.mxu0 0.0
      %544 = vmatprep.subr.mxu0 0.0
      %545 = vmatpush1.msra.mxu0 0.0
      %546 = vmatprep.subr.mxu0 0.0
      %547 = vmatpush1.msra.mxu0 0.0
      %548 = vmatprep.subr.mxu0 0.0
      %549 = vmatpush1.msra.mxu0 %v441
      %550 = vmatprep.subr.mxu0 0.0
      %551 = vmatpush1.msra.mxu0 %v440
      %552 = vmatprep.subr.mxu0 0.0
      %553 = vmatpush1.msra.mxu0 %v439
      %554 = vmatprep.subr.mxu0 0.0
      %555 = vmatpush1.msra.mxu0 %v438
      %556 = vmatprep.subr.mxu0 0.0
      %557 = vmatpush2.msra.mxu0 0.0
      %558 = vmatprep.subr.mxu0 0.0
      %559 = vmatpush2.msra.mxu0 0.0
      %560 = vmatprep.subr.mxu0 0.0
      %561 = vmatpush2.msra.mxu0 0.0
      %562 = vmatprep.subr.mxu0 0.0
      %563 = vmatpush2.msra.mxu0 0.0
      %564 = vmatprep.subr.mxu0 0.0
      %565 = vmatpush2.msra.mxu0 0.0
      %566 = vmatprep.subr.mxu0 0.0
      %567 = vmatpush2.msra.mxu0 0.0
      %568 = vmatprep.subr.mxu0 0.0
      %569 = vmatpush2.msra.mxu0 0.0
      %570 = vmatprep.subr.mxu0 0.0
      %571 = vmatpush2.msra.mxu0 0.0
      %572 = vmatprep.subr.mxu0 0.0
      %573 = vmatpush2.msra.mxu0 0.0
      %574 = vmatprep.subr.mxu0 0.0
      %575 = vmatpush2.msra.mxu0 0.0
      %576 = vmatprep.subr.mxu0 0.0
      %577 = vmatpush2.msra.mxu0 0.0
      %578 = vmatprep.subr.mxu0 0.0
      %579 = vmatpush2.msra.mxu0 0.0
      %580 = vmatprep.subr.mxu0 0.0
      %581 = vmatpush2.msra.mxu0 0.0
      %582 = vmatprep.subr.mxu0 0.0
      %583 = vmatpush2.msra.mxu0 0.0
      %584 = vmatprep.subr.mxu0 0.0
      %585 = vmatpush2.msra.mxu0 0.0
      %586 = vmatprep.subr.mxu0 0.0
      %587 = vmatpush2.msra.mxu0 0.0
      %588 = vmatprep.mubr.f32.mxu0 0.0
      %589 = vmatmul.mubr.f32.gmra.mxu0 %v522
      %v590 = vpop.f32.mrf.mxu0
      %v591 = vadd.f32 %v518, %v590
      %v592 = vpop.f32.mrf.mxu0
      %593 = vdwg.mxu0
      %v594 = vld [vmem:[%s4] sm:$0x1]
      %v596 = vlaneseq
      %v597 = vshrl.u32 %v596, 7
      %v598 = vsub.s32 0, %v597
      %v599 = vrot.slane %v594, %v598
      %v601 = vadd.f32 %v591, %v599
      %v602 = vmax.f32 %v601, 0.0
      %v603 = vld [vmem:[%s5] sm:$0xff]
      %v604 = vld [vmem:[%s5 + $0x8] sm:$0xff]
      %v605 = vld [vmem:[%s5 + $0x10] sm:$0xff]
      %v606 = vld [vmem:[%s5 + $0x18] sm:$0xff]
      %v607 = vld [vmem:[%s6] sm:$0x1]
      %v609 = vlaneseq
      %v610 = vshrl.u32 %v609, 7
      %v611 = vsub.s32 0, %v610
      %v612 = vrot.slane %v607, %v611
      %v615 = vsel %vm447, %v602, 0
      %617 = vmatprep.subr.mxu0 0.0
      %618 = vmatpush1.msra.mxu0 0.0
      %619 = vmatprep.subr.mxu0 0.0
      %620 = vmatpush1.msra.mxu0 0.0
      %621 = vmatprep.subr.mxu0 0.0
      %622 = vmatpush1.msra.mxu0 0.0
      %623 = vmatprep.subr.mxu0 0.0
      %624 = vmatpush1.msra.mxu0 0.0
      %625 = vmatprep.subr.mxu0 0.0
      %626 = vmatpush1.msra.mxu0 0.0
      %627 = vmatprep.subr.mxu0 0.0
      %628 = vmatpush1.msra.mxu0 0.0
      %629 = vmatprep.subr.mxu0 0.0
      %630 = vmatpush1.msra.mxu0 0.0
      %631 = vmatprep.subr.mxu0 0.0
      %632 = vmatpush1.msra.mxu0 0.0
      %633 = vmatprep.subr.mxu0 0.0
      %634 = vmatpush1.msra.mxu0 0.0
      %635 = vmatprep.subr.mxu0 0.0
      %636 = vmatpush1.msra.mxu0 0.0
      %637 = vmatprep.subr.mxu0 0.0
      %638 = vmatpush1.msra.mxu0 0.0
      %639 = vmatprep.subr.mxu0 0.0
      %640 = vmatpush1.msra.mxu0 0.0
      %641 = vmatprep.subr.mxu0 0.0
      %642 = vmatpush1.msra.mxu0 %v606
      %643 = vmatprep.subr.mxu0 0.0
      %644 = vmatpush1.msra.mxu0 %v605
      %645 = vmatprep.subr.mxu0 0.0
      %646 = vmatpush1.msra.mxu0 %v604
      %647 = vmatprep.subr.mxu0 0.0
      %648 = vmatpush1.msra.mxu0 %v603
      %649 = vmatprep.subr.mxu0 0.0
      %650 = vmatpush2.msra.mxu0 0.0
      %651 = vmatprep.subr.mxu0 0.0
      %652 = vmatpush2.msra.mxu0 0.0
      %653 = vmatprep.subr.mxu0 0.0
      %654 = vmatpush2.msra.mxu0 0.0
      %655 = vmatprep.subr.mxu0 0.0
      %656 = vmatpush2.msra.mxu0 0.0
      %657 = vmatprep.subr.mxu0 0.0
      %658 = vmatpush2.msra.mxu0 0.0
      %659 = vmatprep.subr.mxu0 0.0
      %660 = vmatpush2.msra.mxu0 0.0
      %661 = vmatprep.subr.mxu0 0.0
      %662 = vmatpush2.msra.mxu0 0.0
      %663 = vmatprep.subr.mxu0 0.0
      %664 = vmatpush2.msra.mxu0 0.0
      %665 = vmatprep.subr.mxu0 0.0
      %666 = vmatpush2.msra.mxu0 0.0
      %667 = vmatprep.subr.mxu0 0.0
      %668 = vmatpush2.msra.mxu0 0.0
      %669 = vmatprep.subr.mxu0 0.0
      %670 = vmatpush2.msra.mxu0 0.0
      %671 = vmatprep.subr.mxu0 0.0
      %672 = vmatpush2.msra.mxu0 0.0
      %673 = vmatprep.subr.mxu0 0.0
      %674 = vmatpush2.msra.mxu0 0.0
      %675 = vmatprep.subr.mxu0 0.0
      %676 = vmatpush2.msra.mxu0 0.0
      %677 = vmatprep.subr.mxu0 0.0
      %678 = vmatpush2.msra.mxu0 0.0
      %679 = vmatprep.subr.mxu0 0.0
      %680 = vmatpush2.msra.mxu0 0.0
      %681 = vmatprep.mubr.f32.mxu0 0.0
      %682 = vmatmul.mubr.f32.gmra.mxu0 %v615
      %v683 = vpop.f32.mrf.mxu0
      %v684 = vadd.f32 %v612, %v683
      %v685 = vpop.f32.mrf.mxu0
      %686 = vdwg.mxu0
      %v687 = vmax.f32 %v684, 0.0
      %v688 = vld [vmem:[%s7] sm:$0xff]
      %v689 = vld [vmem:[%s7 + $0x8] sm:$0xff]
      %v690 = vld [vmem:[%s7 + $0x10] sm:$0xff]
      %v691 = vld [vmem:[%s7 + $0x18] sm:$0xff]
      %v692 = vld [vmem:[%s8] sm:$0x1]
      %v694 = vlaneseq
      %v695 = vshrl.u32 %v694, 7
      %v696 = vsub.s32 0, %v695
      %v697 = vrot.slane %v692, %v696
      %v700 = vsel %vm447, %v687, 0
      %702 = vmatprep.subr.mxu0 0.0
      %703 = vmatpush1.msra.mxu0 0.0
      %704 = vmatprep.subr.mxu0 0.0
      %705 = vmatpush1.msra.mxu0 0.0
      %706 = vmatprep.subr.mxu0 0.0
      %707 = vmatpush1.msra.mxu0 0.0
      %708 = vmatprep.subr.mxu0 0.0
      %709 = vmatpush1.msra.mxu0 0.0
      %710 = vmatprep.subr.mxu0 0.0
      %711 = vmatpush1.msra.mxu0 0.0
      %712 = vmatprep.subr.mxu0 0.0
      %713 = vmatpush1.msra.mxu0 0.0
      %714 = vmatprep.subr.mxu0 0.0
      %715 = vmatpush1.msra.mxu0 0.0
      %716 = vmatprep.subr.mxu0 0.0
      %717 = vmatpush1.msra.mxu0 0.0
      %718 = vmatprep.subr.mxu0 0.0
      %719 = vmatpush1.msra.mxu0 0.0
      %720 = vmatprep.subr.mxu0 0.0
      %721 = vmatpush1.msra.mxu0 0.0
      %722 = vmatprep.subr.mxu0 0.0
      %723 = vmatpush1.msra.mxu0 0.0
      %724 = vmatprep.subr.mxu0 0.0
      %725 = vmatpush1.msra.mxu0 0.0
      %726 = vmatprep.subr.mxu0 0.0
      %727 = vmatpush1.msra.mxu0 %v691
      %728 = vmatprep.subr.mxu0 0.0
      %729 = vmatpush1.msra.mxu0 %v690
      %730 = vmatprep.subr.mxu0 0.0
      %731 = vmatpush1.msra.mxu0 %v689
      %732 = vmatprep.subr.mxu0 0.0
      %733 = vmatpush1.msra.mxu0 %v688
      %734 = vmatprep.subr.mxu0 0.0
      %735 = vmatpush2.msra.mxu0 0.0
      %736 = vmatprep.subr.mxu0 0.0
      %737 = vmatpush2.msra.mxu0 0.0
      %738 = vmatprep.subr.mxu0 0.0
      %739 = vmatpush2.msra.mxu0 0.0
      %740 = vmatprep.subr.mxu0 0.0
      %741 = vmatpush2.msra.mxu0 0.0
      %742 = vmatprep.subr.mxu0 0.0
      %743 = vmatpush2.msra.mxu0 0.0
      %744 = vmatprep.subr.mxu0 0.0
      %745 = vmatpush2.msra.mxu0 0.0
      %746 = vmatprep.subr.mxu0 0.0
      %747 = vmatpush2.msra.mxu0 0.0
      %748 = vmatprep.subr.mxu0 0.0
      %749 = vmatpush2.msra.mxu0 0.0
      %750 = vmatprep.subr.mxu0 0.0
      %751 = vmatpush2.msra.mxu0 0.0
      %752 = vmatprep.subr.mxu0 0.0
      %753 = vmatpush2.msra.mxu0 0.0
      %754 = vmatprep.subr.mxu0 0.0
      %755 = vmatpush2.msra.mxu0 0.0
      %756 = vmatprep.subr.mxu0 0.0
      %757 = vmatpush2.msra.mxu0 0.0
      %758 = vmatprep.subr.mxu0 0.0
      %759 = vmatpush2.msra.mxu0 0.0
      %760 = vmatprep.subr.mxu0 0.0
      %761 = vmatpush2.msra.mxu0 0.0
      %762 = vmatprep.subr.mxu0 0.0
      %763 = vmatpush2.msra.mxu0 0.0
      %764 = vmatprep.subr.mxu0 0.0
      %765 = vmatpush2.msra.mxu0 0.0
      %766 = vmatprep.mubr.f32.mxu0 0.0
      %767 = vmatmul.mubr.f32.gmra.mxu0 %v700
      %v768 = vpop.f32.mrf.mxu0
      %v769 = vadd.f32 %v697, %v768
      %v770 = vpop.f32.mrf.mxu0
      %771 = vdwg.mxu0
      %v772 = vsel %vm447, %v769, 0.0
      %773 = vadd.xlane.f32.xlu0 %v772
      %v774 = vpop.xlane.xlu0 %773
      %v775 = vrcp.pop 32.0
      %v776 = vmul.f32 %v774, %v775
      %v777 = vsub.f32 %v769, %v776
      %v778 = vmul.f32 %v777, %v777
      %v779 = vsel %vm447, %v778, 0.0
      %780 = vadd.xlane.f32.xlu0 %v779
      %v781 = vpop.xlane.xlu0 %780
      %v782 = vmul.f32 %v781, %v775
      %v783 = vadd.f32 %v782, 1e-05
      %v784 = vrsqrt.pop %v783
      %v785 = vmul.f32 %v777, %v784
      %v786 = vld [vmem:[%s9] sm:$0x1]
      %v788 = vlaneseq
      %v789 = vshrl.u32 %v788, 7
      %v790 = vsub.s32 0, %v789
      %v791 = vrot.slane %v786, %v790
      %v793 = vmul.f32 %v785, %v791
      %v794 = vld [vmem:[%s10] sm:$0x1]
      %v796 = vlaneseq
      %v797 = vshrl.u32 %v796, 7
      %v798 = vsub.s32 0, %v797
      %v799 = vrot.slane %v794, %v798
      %v801 = vadd.f32 %v793, %v799
      %v802 = vadd.f32 %v801, %v442
      %803 = vst.msk [vmem:[%s432] sm:$0xff] %vm447, %v801
      %804 = vst.msk [vmem:[%s436] sm:$0xff] %vm447, %v802
      %p805 = scmp.lt.s32.totalorder %s24, 1
      %s806 = scalar_select %p805, %s24, 1
      %s807 = smul.addr %s806, 8
      %s808 = scalar_lea.vmem %s11, %s807
      %p809 = scmp.lt.s32.totalorder %s24, 1
      %s810 = scalar_select %p809, %s24, 1
      %s811 = smul.addr %s810, 8
      %s812 = scalar_lea.vmem %s12, %s811
      // Predicated region
      $region65: #{processor_forward.4} parent=63 // pred_check
        %p813 = pneg %p283
      $region66: #{processor_forward.4} parent=63 // pred_check_branch
        %815 = sbr.rel (%p813) target = $region68
      $region67: #{processor_forward.4} parent=63 // pred_region
        _
      $region68: #{processor_forward.4} parent=63 // pred_fallthru
        _
      // Predicated region
      $region69: #{processor_forward.4} parent=63 // pred_check
        %p816 = pneg %p309
      $region70: #{processor_forward.4} parent=63 // pred_check_branch
        %818 = sbr.rel (%p816) target = $region72
      $region71: #{processor_forward.4} parent=63 // pred_region
        _
      $region72: #{processor_forward.4} parent=63 // pred_fallthru
        _
    $region64: #{processor_forward.4} parent=5 // pred_fallthru
      _
    %p819 = scmp.le.s32.totalorder 2, %s19
    // Predicated region
    $region73: #{processor_forward.4} parent=5 // pred_check
      %p820 = pneg %p819
    $region74: #{processor_forward.4} parent=5 // pred_check_branch
      %822 = sbr.rel (%p820) target = $region76
    $region75: #{processor_forward.4} parent=5 // pred_region
      %s823 = ssub.s32 %s19, 2
      // Predicated region
      $region77: #{processor_forward.4} parent=75 // pred_check
        %p824 = pneg %p289
      $region78: #{processor_forward.4} parent=75 // pred_check_branch
        %826 = sbr.rel (%p824) target = $region80
      $region79: #{processor_forward.4} parent=75 // pred_region
        %p827 = scmp.lt.s32.totalorder %s25, 1
        %s828 = scalar_select %p827, %s25, 1
        %s829 = smul.addr %s828, 8
        %s830 = scalar_lea.vmem %s11, %s829
      $region80: #{processor_forward.4} parent=75 // pred_fallthru
        _
      // Predicated region
      $region81: #{processor_forward.4} parent=75 // pred_check
        %p831 = pneg %p315
      $region82: #{processor_forward.4} parent=75 // pred_check_branch
        %833 = sbr.rel (%p831) target = $region84
      $region83: #{processor_forward.4} parent=75 // pred_region
        %p834 = scmp.lt.s32.totalorder %s25, 1
        %s835 = scalar_select %p834, %s25, 1
        %s836 = smul.addr %s835, 8
        %s837 = scalar_lea.vmem %s12, %s836
      $region84: #{processor_forward.4} parent=75 // pred_fallthru
        _
    $region76: #{processor_forward.4} parent=5 // pred_fallthru
      _
  $region6: #{processor_forward.4} parent=0 // loop_footer
    %s23 = sadd.s32 1, %s19
  $region7: #{processor_forward.4} parent=0 // loop_footer_branch
    %18 = sbr.rel target = $region3
  $region8: #{processor_forward.4} parent=0 // loop_exit
    _

// kernel: processor_forward.5
$region0: #{processor_forward.5}
  #allocation0 [shape = 'u32[]', space=smem, size = 0x4, offset = 0x4, fixed_abs, tag = 'smem constant byte address 0x4 - core index']
  #allocation1 [shape = 'u32[144,128]{1,0:T(1,128)}', space=vmem, size = 0x12000, scoped, tag = 'internal scratch']
  %s0 = inlined_call_operand.vmem [shape: f32[64,32], index: 0, kind: input, shape index: {}]
  %s1 = inlined_call_operand.vmem [shape: f32[64,32], index: 1, kind: input, shape index: {}]
  %s2 = inlined_call_operand.vmem [shape: f32[32,32], index: 2, kind: input, shape index: {}]
  %s3 = inlined_call_operand.vmem [shape: f32[32,32], index: 3, kind: input, shape index: {}]
  %s4 = inlined_call_operand.vmem [shape: f32[1,32], index: 4, kind: input, shape index: {}]
  %s5 = inlined_call_operand.vmem [shape: f32[32,32], index: 5, kind: input, shape index: {}]
  %s6 = inlined_call_operand.vmem [shape: f32[1,32], index: 6, kind: input, shape index: {}]
  %s7 = inlined_call_operand.vmem [shape: f32[32,32], index: 7, kind: input, shape index: {}]
  %s8 = inlined_call_operand.vmem [shape: f32[1,32], index: 8, kind: input, shape index: {}]
  %s9 = inlined_call_operand.vmem [shape: f32[1,32], index: 9, kind: input, shape index: {}]
  %s10 = inlined_call_operand.vmem [shape: f32[1,32], index: 10, kind: input, shape index: {}]
  %s11 = inlined_call_operand.vmem [shape: f32[64,32], index: 11, kind: output, shape index: {}]
  %s12 = sld [smem:[#allocation0]]
  $region77: #{processor_forward.5} parent=0
    _
  %s14 = ssub.s32 1, %s12
  %s15 = scalar_select 0, %s14, %s12
  loop: start=0, step=1, limit=4
  $region2: #{processor_forward.5} parent=0 // loop_pre_header
    _
  $region3: #{processor_forward.5} parent=0 // loop_header
    %s17 = sphi 0, %s21
    %p18 = scmp.ge.s32.totalorder %s17, 4
    %s27 = sphi 0, %s29
    %s30 = sphi 0, %s27
    %s31 = sphi 0, %s30
    %s47 = sphi 0, %s31
    %s53 = sphi 0, %s55
    %s56 = sphi 0, %s53
    %s57 = sphi 0, %s56
    %s73 = sphi 0, %s57
    %s77 = sphi 0, %s77
    %s79 = sphi 0, %s77
    %s80 = sphi 0, %s79
    %s94 = sphi 0, %s80
    %s98 = sphi 0, %s98
    %s100 = sphi 0, %s98
    %s101 = sphi 0, %s100
    %s115 = sphi 0, %s101
    %s119 = sphi 0, %s119
    %s121 = sphi 0, %s119
    %s122 = sphi 0, %s121
    %s136 = sphi 0, %s122
    %s140 = sphi 0, %s140
    %s142 = sphi 0, %s140
    %s143 = sphi 0, %s142
    %s157 = sphi 0, %s143
    %s161 = sphi 0, %s161
    %s163 = sphi 0, %s161
    %s164 = sphi 0, %s163
    %s178 = sphi 0, %s164
    %s182 = sphi 0, %s182
    %s184 = sphi 0, %s182
    %s185 = sphi 0, %s184
    %s199 = sphi 0, %s185
    %s203 = sphi 0, %s203
    %s205 = sphi 0, %s203
    %s206 = sphi 0, %s205
    %s220 = sphi 0, %s206
    %s224 = sphi 0, %s224
    %s226 = sphi 0, %s224
    %s227 = sphi 0, %s226
    %s241 = sphi 0, %s227
    %s245 = sphi 0, %s245
    %s247 = sphi 0, %s245
    %s248 = sphi 0, %s247
    %s262 = sphi 0, %s248
    %s268 = sphi 0, %s270
    %s271 = sphi 0, %s268
    %s272 = sphi 0, %s271
    %s288 = sphi 0, %s272
  $region4: #{processor_forward.5} parent=0 // loop_header_branch
    %20 = sbr.rel (%p18) target = $region8
  $region5: #{processor_forward.5} parent=0 // loop_body
    %s22 = ssub.s32 %s17, 1
    %s23 = ssub.s32 %s17, 2
    %s24 = sadd.s32 %s17, 1
    %s25 = ssub.s32 %s17, %s24
    %p26 = scmp.eq.s32.totalorder %s25, 0
    %s28 = sadd.s32 %s27, 1
    %s29 = scalar_select %p26, %s27, %s28
    %p32 = pneg %p26
    %p33 = scmp.eq.s32.totalorder %s17, 1
    %p34 = por %p32, %p33
    %p35 = scmp.ne.s32.totalorder %s27, %s30
    %p36 = scmp.eq.s32.totalorder %s17, 0
    %p37 = por %p35, %p36
    %p38 = scmp.ne.s32.totalorder %s27, %s30
    %p39 = scmp.eq.s32.totalorder %s22, 1
    %p40 = por %p38, %p39
    %p41 = scmp.ne.s32.totalorder %s30, %s31
    %p42 = scmp.eq.s32.totalorder %s22, 0
    %p43 = por %p41, %p42
    %p44 = scmp.ne.s32.totalorder %s30, %s31
    %p45 = scmp.eq.s32.totalorder %s23, 1
    %p46 = por %p44, %p45
    %p48 = scmp.ne.s32.totalorder %s31, %s47
    %p49 = scmp.eq.s32.totalorder %s23, 0
    %p50 = por %p48, %p49
    %s51 = ssub.s32 %s17, %s24
    %p52 = scmp.eq.s32.totalorder %s51, 0
    %s54 = sadd.s32 %s53, 1
    %s55 = scalar_select %p52, %s53, %s54
    %p58 = pneg %p52
    %p59 = scmp.eq.s32.totalorder %s17, 1
    %p60 = por %p58, %p59
    %p61 = scmp.ne.s32.totalorder %s53, %s56
    %p62 = scmp.eq.s32.totalorder %s17, 0
    %p63 = por %p61, %p62
    %p64 = scmp.ne.s32.totalorder %s53, %s56
    %p65 = scmp.eq.s32.totalorder %s22, 1
    %p66 = por %p64, %p65
    %p67 = scmp.ne.s32.totalorder %s56, %s57
    %p68 = scmp.eq.s32.totalorder %s22, 0
    %p69 = por %p67, %p68
    %p70 = scmp.ne.s32.totalorder %s56, %s57
    %p71 = scmp.eq.s32.totalorder %s23, 1
    %p72 = por %p70, %p71
    %p74 = scmp.ne.s32.totalorder %s57, %s73
    %p75 = scmp.eq.s32.totalorder %s23, 0
    %p76 = por %p74, %p75
    %s78 = sadd.s32 %s77, 1
    %p81 = scmp.eq.s32.totalorder %s17, 1
    %p82 = scmp.ne.s32.totalorder %s77, %s79
    %p83 = scmp.eq.s32.totalorder %s17, 0
    %p84 = por %p82, %p83
    %p85 = scmp.ne.s32.totalorder %s77, %s79
    %p86 = scmp.eq.s32.totalorder %s22, 1
    %p87 = por %p85, %p86
    %p88 = scmp.ne.s32.totalorder %s79, %s80
    %p89 = scmp.eq.s32.totalorder %s22, 0
    %p90 = por %p88, %p89
    %p91 = scmp.ne.s32.totalorder %s79, %s80
    %p92 = scmp.eq.s32.totalorder %s23, 1
    %p93 = por %p91, %p92
    %p95 = scmp.ne.s32.totalorder %s80, %s94
    %p96 = scmp.eq.s32.totalorder %s23, 0
    %p97 = por %p95, %p96
    %s99 = sadd.s32 %s98, 1
    %p102 = scmp.eq.s32.totalorder %s17, 1
    %p103 = scmp.ne.s32.totalorder %s98, %s100
    %p104 = scmp.eq.s32.totalorder %s17, 0
    %p105 = por %p103, %p104
    %p106 = scmp.ne.s32.totalorder %s98, %s100
    %p107 = scmp.eq.s32.totalorder %s22, 1
    %p108 = por %p106, %p107
    %p109 = scmp.ne.s32.totalorder %s100, %s101
    %p110 = scmp.eq.s32.totalorder %s22, 0
    %p111 = por %p109, %p110
    %p112 = scmp.ne.s32.totalorder %s100, %s101
    %p113 = scmp.eq.s32.totalorder %s23, 1
    %p114 = por %p112, %p113
    %p116 = scmp.ne.s32.totalorder %s101, %s115
    %p117 = scmp.eq.s32.totalorder %s23, 0
    %p118 = por %p116, %p117
    %s120 = sadd.s32 %s119, 1
    %p123 = scmp.eq.s32.totalorder %s17, 1
    %p124 = scmp.ne.s32.totalorder %s119, %s121
    %p125 = scmp.eq.s32.totalorder %s17, 0
    %p126 = por %p124, %p125
    %p127 = scmp.ne.s32.totalorder %s119, %s121
    %p128 = scmp.eq.s32.totalorder %s22, 1
    %p129 = por %p127, %p128
    %p130 = scmp.ne.s32.totalorder %s121, %s122
    %p131 = scmp.eq.s32.totalorder %s22, 0
    %p132 = por %p130, %p131
    %p133 = scmp.ne.s32.totalorder %s121, %s122
    %p134 = scmp.eq.s32.totalorder %s23, 1
    %p135 = por %p133, %p134
    %p137 = scmp.ne.s32.totalorder %s122, %s136
    %p138 = scmp.eq.s32.totalorder %s23, 0
    %p139 = por %p137, %p138
    %s141 = sadd.s32 %s140, 1
    %p144 = scmp.eq.s32.totalorder %s17, 1
    %p145 = scmp.ne.s32.totalorder %s140, %s142
    %p146 = scmp.eq.s32.totalorder %s17, 0
    %p147 = por %p145, %p146
    %p148 = scmp.ne.s32.totalorder %s140, %s142
    %p149 = scmp.eq.s32.totalorder %s22, 1
    %p150 = por %p148, %p149
    %p151 = scmp.ne.s32.totalorder %s142, %s143
    %p152 = scmp.eq.s32.totalorder %s22, 0
    %p153 = por %p151, %p152
    %p154 = scmp.ne.s32.totalorder %s142, %s143
    %p155 = scmp.eq.s32.totalorder %s23, 1
    %p156 = por %p154, %p155
    %p158 = scmp.ne.s32.totalorder %s143, %s157
    %p159 = scmp.eq.s32.totalorder %s23, 0
    %p160 = por %p158, %p159
    %s162 = sadd.s32 %s161, 1
    %p165 = scmp.eq.s32.totalorder %s17, 1
    %p166 = scmp.ne.s32.totalorder %s161, %s163
    %p167 = scmp.eq.s32.totalorder %s17, 0
    %p168 = por %p166, %p167
    %p169 = scmp.ne.s32.totalorder %s161, %s163
    %p170 = scmp.eq.s32.totalorder %s22, 1
    %p171 = por %p169, %p170
    %p172 = scmp.ne.s32.totalorder %s163, %s164
    %p173 = scmp.eq.s32.totalorder %s22, 0
    %p174 = por %p172, %p173
    %p175 = scmp.ne.s32.totalorder %s163, %s164
    %p176 = scmp.eq.s32.totalorder %s23, 1
    %p177 = por %p175, %p176
    %p179 = scmp.ne.s32.totalorder %s164, %s178
    %p180 = scmp.eq.s32.totalorder %s23, 0
    %p181 = por %p179, %p180
    %s183 = sadd.s32 %s182, 1
    %p186 = scmp.eq.s32.totalorder %s17, 1
    %p187 = scmp.ne.s32.totalorder %s182, %s184
    %p188 = scmp.eq.s32.totalorder %s17, 0
    %p189 = por %p187, %p188
    %p190 = scmp.ne.s32.totalorder %s182, %s184
    %p191 = scmp.eq.s32.totalorder %s22, 1
    %p192 = por %p190, %p191
    %p193 = scmp.ne.s32.totalorder %s184, %s185
    %p194 = scmp.eq.s32.totalorder %s22, 0
    %p195 = por %p193, %p194
    %p196 = scmp.ne.s32.totalorder %s184, %s185
    %p197 = scmp.eq.s32.totalorder %s23, 1
    %p198 = por %p196, %p197
    %p200 = scmp.ne.s32.totalorder %s185, %s199
    %p201 = scmp.eq.s32.totalorder %s23, 0
    %p202 = por %p200, %p201
    %s204 = sadd.s32 %s203, 1
    %p207 = scmp.eq.s32.totalorder %s17, 1
    %p208 = scmp.ne.s32.totalorder %s203, %s205
    %p209 = scmp.eq.s32.totalorder %s17, 0
    %p210 = por %p208, %p209
    %p211 = scmp.ne.s32.totalorder %s203, %s205
    %p212 = scmp.eq.s32.totalorder %s22, 1
    %p213 = por %p211, %p212
    %p214 = scmp.ne.s32.totalorder %s205, %s206
    %p215 = scmp.eq.s32.totalorder %s22, 0
    %p216 = por %p214, %p215
    %p217 = scmp.ne.s32.totalorder %s205, %s206
    %p218 = scmp.eq.s32.totalorder %s23, 1
    %p219 = por %p217, %p218
    %p221 = scmp.ne.s32.totalorder %s206, %s220
    %p222 = scmp.eq.s32.totalorder %s23, 0
    %p223 = por %p221, %p222
    %s225 = sadd.s32 %s224, 1
    %p228 = scmp.eq.s32.totalorder %s17, 1
    %p229 = scmp.ne.s32.totalorder %s224, %s226
    %p230 = scmp.eq.s32.totalorder %s17, 0
    %p231 = por %p229, %p230
    %p232 = scmp.ne.s32.totalorder %s224, %s226
    %p233 = scmp.eq.s32.totalorder %s22, 1
    %p234 = por %p232, %p233
    %p235 = scmp.ne.s32.totalorder %s226, %s227
    %p236 = scmp.eq.s32.totalorder %s22, 0
    %p237 = por %p235, %p236
    %p238 = scmp.ne.s32.totalorder %s226, %s227
    %p239 = scmp.eq.s32.totalorder %s23, 1
    %p240 = por %p238, %p239
    %p242 = scmp.ne.s32.totalorder %s227, %s241
    %p243 = scmp.eq.s32.totalorder %s23, 0
    %p244 = por %p242, %p243
    %s246 = sadd.s32 %s245, 1
    %p249 = scmp.eq.s32.totalorder %s17, 1
    %p250 = scmp.ne.s32.totalorder %s245, %s247
    %p251 = scmp.eq.s32.totalorder %s17, 0
    %p252 = por %p250, %p251
    %p253 = scmp.ne.s32.totalorder %s245, %s247
    %p254 = scmp.eq.s32.totalorder %s22, 1
    %p255 = por %p253, %p254
    %p256 = scmp.ne.s32.totalorder %s247, %s248
    %p257 = scmp.eq.s32.totalorder %s22, 0
    %p258 = por %p256, %p257
    %p259 = scmp.ne.s32.totalorder %s247, %s248
    %p260 = scmp.eq.s32.totalorder %s23, 1
    %p261 = por %p259, %p260
    %p263 = scmp.ne.s32.totalorder %s248, %s262
    %p264 = scmp.eq.s32.totalorder %s23, 0
    %p265 = por %p263, %p264
    %s266 = ssub.s32 %s17, %s24
    %p267 = scmp.eq.s32.totalorder %s266, 0
    %s269 = sadd.s32 %s268, 1
    %s270 = scalar_select %p267, %s268, %s269
    %p273 = pneg %p267
    %p274 = scmp.eq.s32.totalorder %s17, 1
    %p275 = por %p273, %p274
    %p276 = scmp.ne.s32.totalorder %s268, %s271
    %p277 = scmp.eq.s32.totalorder %s17, 0
    %p278 = por %p276, %p277
    %p279 = scmp.ne.s32.totalorder %s268, %s271
    %p280 = scmp.eq.s32.totalorder %s22, 1
    %p281 = por %p279, %p280
    %p282 = scmp.ne.s32.totalorder %s271, %s272
    %p283 = scmp.eq.s32.totalorder %s22, 0
    %p284 = por %p282, %p283
    %p285 = scmp.ne.s32.totalorder %s271, %s272
    %p286 = scmp.eq.s32.totalorder %s23, 1
    %p287 = por %p285, %p286
    %p289 = scmp.ne.s32.totalorder %s272, %s288
    %p290 = scmp.eq.s32.totalorder %s23, 0
    %p291 = por %p289, %p290
    %p292 = scmp.le.s32.totalorder 1, %s17
    %p293 = scmp.lt.s32.totalorder %s17, 3
    %p294 = pnand %p292, %p293
    %p295 = pneg %p294
    // Predicated region
    $region9: #{processor_forward.5} parent=5 // pred_check
      _
    $region10: #{processor_forward.5} parent=5 // pred_check_branch
      %297 = sbr.rel (%p294) target = $region12
    $region11: #{processor_forward.5} parent=5 // pred_region
      %s298 = ssub.s32 %s17, 1
      // Predicated region
      $region13: #{processor_forward.5} parent=11 // pred_check
        %p299 = pneg %p90
      $region14: #{processor_forward.5} parent=11 // pred_check_branch
        %301 = sbr.rel (%p299) target = $region16
      $region15: #{processor_forward.5} parent=11 // pred_region
        _
      $region16: #{processor_forward.5} parent=11 // pred_fallthru
        _
      // Predicated region
      $region17: #{processor_forward.5} parent=11 // pred_check
        %p302 = pneg %p111
      $region18: #{processor_forward.5} parent=11 // pred_check_branch
        %304 = sbr.rel (%p302) target = $region20
      $region19: #{processor_forward.5} parent=11 // pred_region
        _
      $region20: #{processor_forward.5} parent=11 // pred_fallthru
        _
      // Predicated region
      $region21: #{processor_forward.5} parent=11 // pred_check
        %p305 = pneg %p132
      $region22: #{processor_forward.5} parent=11 // pred_check_branch
        %307 = sbr.rel (%p305) target = $region24
      $region23: #{processor_forward.5} parent=11 // pred_region
        _
      $region24: #{processor_forward.5} parent=11 // pred_fallthru
        _
      // Predicated region
      $region25: #{processor_forward.5} parent=11 // pred_check
        %p308 = pneg %p153
      $region26: #{processor_forward.5} parent=11 // pred_check_branch
        %310 = sbr.rel (%p308) target = $region28
      $region27: #{processor_forward.5} parent=11 // pred_region
        _
      $region28: #{processor_forward.5} parent=11 // pred_fallthru
        _
      // Predicated region
      $region29: #{processor_forward.5} parent=11 // pred_check
        %p311 = pneg %p174
      $region30: #{processor_forward.5} parent=11 // pred_check_branch
        %313 = sbr.rel (%p311) target = $region32
      $region31: #{processor_forward.5} parent=11 // pred_region
        _
      $region32: #{processor_forward.5} parent=11 // pred_fallthru
        _
      // Predicated region
      $region33: #{processor_forward.5} parent=11 // pred_check
        %p314 = pneg %p195
      $region34: #{processor_forward.5} parent=11 // pred_check_branch
        %316 = sbr.rel (%p314) target = $region36
      $region35: #{processor_forward.5} parent=11 // pred_region
        _
      $region36: #{processor_forward.5} parent=11 // pred_fallthru
        _
      // Predicated region
      $region37: #{processor_forward.5} parent=11 // pred_check
        %p317 = pneg %p216
      $region38: #{processor_forward.5} parent=11 // pred_check_branch
        %319 = sbr.rel (%p317) target = $region40
      $region39: #{processor_forward.5} parent=11 // pred_region
        _
      $region40: #{processor_forward.5} parent=11 // pred_fallthru
        _
      // Predicated region
      $region41: #{processor_forward.5} parent=11 // pred_check
        %p320 = pneg %p237
      $region42: #{processor_forward.5} parent=11 // pred_check_branch
        %322 = sbr.rel (%p320) target = $region44
      $region43: #{processor_forward.5} parent=11 // pred_region
        _
      $region44: #{processor_forward.5} parent=11 // pred_fallthru
        _
      // Predicated region
      $region45: #{processor_forward.5} parent=11 // pred_check
        %p323 = pneg %p258
      $region46: #{processor_forward.5} parent=11 // pred_check_branch
        %325 = sbr.rel (%p323) target = $region48
      $region47: #{processor_forward.5} parent=11 // pred_region
        _
      $region48: #{processor_forward.5} parent=11 // pred_fallthru
        _
    $region12: #{processor_forward.5} parent=5 // pred_fallthru
      _
    %p326 = scmp.lt.s32.totalorder %s17, 2
    // Predicated region
    $region49: #{processor_forward.5} parent=5 // pred_check
      %p327 = pneg %p326
    $region50: #{processor_forward.5} parent=5 // pred_check_branch
      %329 = sbr.rel (%p327) target = $region52
    $region51: #{processor_forward.5} parent=5 // pred_region
      // Predicated region
      $region53: #{processor_forward.5} parent=51 // pred_check
        %p330 = pneg %p37
      $region54: #{processor_forward.5} parent=51 // pred_check_branch
        %332 = sbr.rel (%p330) target = $region56
      $region55: #{processor_forward.5} parent=51 // pred_region
        %s333 = smul.u32 4, %s17
        %p334 = scmp.lt.s32.totalorder %s333, 7
        %s335 = scalar_select %p334, %s333, 7
        %s336 = smul.addr %s335, 8
        %s337 = scalar_lea.vmem %s0, %s336
        %s338 = smul.u32 4, %s17
      $region56: #{processor_forward.5} parent=51 // pred_fallthru
        _
      // Predicated region
      $region57: #{processor_forward.5} parent=51 // pred_check
        %p339 = pneg %p63
      $region58: #{processor_forward.5} parent=51 // pred_check_branch
        %341 = sbr.rel (%p339) target = $region60
      $region59: #{processor_forward.5} parent=51 // pred_region
        %s342 = smul.u32 4, %s17
        %p343 = scmp.lt.s32.totalorder %s342, 7
        %s344 = scalar_select %p343, %s342, 7
        %s345 = smul.addr %s344, 8
        %s346 = scalar_lea.vmem %s1, %s345
        %s347 = smul.u32 4, %s17
      $region60: #{processor_forward.5} parent=51 // pred_fallthru
        _
    $region52: #{processor_forward.5} parent=5 // pred_fallthru
      _
    %p348 = scmp.le.s32.totalorder 1, %s17
    %p349 = scmp.lt.s32.totalorder %s17, 3
    %p350 = pnand %p348, %p349
    %p351 = pneg %p350
    // Predicated region
    $region61: #{processor_forward.5} parent=5 // pred_check
      _
    $region62: #{processor_forward.5} parent=5 // pred_check_branch
      %353 = sbr.rel (%p350) target = $region64
    $region63: #{processor_forward.5} parent=5 // pred_region
      %s354 = ssub.s32 %s17, 1
      %s355 = smul.u32 4, %s22
      %p356 = scmp.lt.s32.totalorder %s355, 7
      %s357 = scalar_select %p356, %s355, 7
      %s358 = smul.addr %s357, 8
      %s359 = scalar_lea.vmem %s0, %s358
      %p360 = pneg %p43
      %p361 = pneg %p40
      %s362 = smul.u32 4, %s22
      %p363 = scmp.lt.s32.totalorder %s362, 7
      %s364 = scalar_select %p363, %s362, 7
      %s365 = smul.addr %s364, 8
      %s366 = scalar_lea.vmem %s1, %s365
      %p367 = pneg %p69
      %p368 = pneg %p66
      %p369 = pneg %p90
      %p370 = pneg %p87
      %p371 = pneg %p111
      %p372 = pneg %p108
      %p373 = pneg %p132
      %p374 = pneg %p129
      %p375 = pneg %p153
      %p376 = pneg %p150
      %p377 = pneg %p174
      %p378 = pneg %p171
      %p379 = pneg %p195
      %p380 = pneg %p192
      %p381 = pneg %p216
      %p382 = pneg %p213
      %p383 = pneg %p237
      %p384 = pneg %p234
      %p385 = pneg %p258
      %p386 = pneg %p255
      %p387 = pneg %p284
      %p388 = pneg %p281
      %s389 = smul.u32 4, %s22
      %p390 = scmp.lt.s32.totalorder %s389, 7
      %s391 = scalar_select %p390, %s389, 7
      %s392 = smul.addr %s391, 8
      %s393 = scalar_lea.vmem %s11, %s392
      %s394 = smul.u32 4, %s22
      %p395 = scmp.lt.s32.totalorder %s394, 7
      %s396 = scalar_select %p395, %s394, 7
      %s397 = smul.addr %s396, 8
      %s398 = scalar_lea.vmem %s0, %s397
      %s399 = smul.u32 4, %s22
      %s400 = smul.u32 4, %s22
      %p401 = scmp.lt.s32.totalorder %s400, 7
      %s402 = scalar_select %p401, %s400, 7
      %s403 = smul.addr %s402, 8
      %s404 = scalar_lea.vmem %s1, %s403
      %s405 = smul.u32 4, %s22
      %s406 = smul.u32 4, %s22
      %p407 = scmp.lt.s32.totalorder %s406, 7
      %s408 = scalar_select %p407, %s406, 7
      %s409 = smul.addr %s408, 8
      %s410 = scalar_lea.vmem %s11, %s409
      %s411 = smul.u32 4, %s22
      %v412 = vld [vmem:[%s398] sm:$0xff]
      %v413 = vld [vmem:[%s398 + $0x8] sm:$0xff]
      %v414 = vld [vmem:[%s398 + $0x10] sm:$0xff]
      %v415 = vld [vmem:[%s398 + $0x18] sm:$0xff]
      %v416 = vld [vmem:[%s2] sm:$0xff]
      %v417 = vld [vmem:[%s2 + $0x8] sm:$0xff]
      %v418 = vld [vmem:[%s2 + $0x10] sm:$0xff]
      %v419 = vld [vmem:[%s2 + $0x18] sm:$0xff]
      %v420 = vld [vmem:[%s404] sm:$0xff]
      %v421 = vld [vmem:[%s404 + $0x8] sm:$0xff]
      %v422 = vld [vmem:[%s404 + $0x10] sm:$0xff]
      %v423 = vld [vmem:[%s404 + $0x18] sm:$0xff]
      %v424 = vld [vmem:[%s3] sm:$0xff]
      %v425 = vld [vmem:[%s3 + $0x8] sm:$0xff]
      %v426 = vld [vmem:[%s3 + $0x10] sm:$0xff]
      %v427 = vld [vmem:[%s3 + $0x18] sm:$0xff]
      %vm428 = vcmask 261120
      %v430 = vsel %vm428, %v420, 0
      %v433 = vsel %vm428, %v421, 0
      %v436 = vsel %vm428, %v422, 0
      %v439 = vsel %vm428, %v423, 0
      %441 = vmatprep.subr.mxu0 0.0
      %442 = vmatpush1.msra.mxu0 0.0
      %443 = vmatprep.subr.mxu0 0.0
      %444 = vmatpush1.msra.mxu0 0.0
      %445 = vmatprep.subr.mxu0 0.0
      %446 = vmatpush1.msra.mxu0 0.0
      %447 = vmatprep.subr.mxu0 0.0
      %448 = vmatpush1.msra.mxu0 0.0
      %449 = vmatprep.subr.mxu0 0.0
      %450 = vmatpush1.msra.mxu0 0.0
      %451 = vmatprep.subr.mxu0 0.0
      %452 = vmatpush1.msra.mxu0 0.0
      %453 = vmatprep.subr.mxu0 0.0
      %454 = vmatpush1.msra.mxu0 0.0
      %455 = vmatprep.subr.mxu0 0.0
      %456 = vmatpush1.msra.mxu0 0.0
      %457 = vmatprep.subr.mxu0 0.0
      %458 = vmatpush1.msra.mxu0 0.0
      %459 = vmatprep.subr.mxu0 0.0
      %460 = vmatpush1.msra.mxu0 0.0
      %461 = vmatprep.subr.mxu0 0.0
      %462 = vmatpush1.msra.mxu0 0.0
      %463 = vmatprep.subr.mxu0 0.0
      %464 = vmatpush1.msra.mxu0 0.0
      %465 = vmatprep.subr.mxu0 0.0
      %466 = vmatpush1.msra.mxu0 %v427
      %467 = vmatprep.subr.mxu0 0.0
      %468 = vmatpush1.msra.mxu0 %v426
      %469 = vmatprep.subr.mxu0 0.0
      %470 = vmatpush1.msra.mxu0 %v425
      %471 = vmatprep.subr.mxu0 0.0
      %472 = vmatpush1.msra.mxu0 %v424
      %473 = vmatprep.subr.mxu0 0.0
      %474 = vmatpush2.msra.mxu0 0.0
      %475 = vmatprep.subr.mxu0 0.0
      %476 = vmatpush2.msra.mxu0 0.0
      %477 = vmatprep.subr.mxu0 0.0
      %478 = vmatpush2.msra.mxu0 0.0
      %479 = vmatprep.subr.mxu0 0.0
      %480 = vmatpush2.msra.mxu0 0.0
      %481 = vmatprep.subr.mxu0 0.0
      %482 = vmatpush2.msra.mxu0 0.0
      %483 = vmatprep.subr.mxu0 0.0
      %484 = vmatpush2.msra.mxu0 0.0
      %485 = vmatprep.subr.mxu0 0.0
      %486 = vmatpush2.msra.mxu0 0.0
      %487 = vmatprep.subr.mxu0 0.0
      %488 = vmatpush2.msra.mxu0 0.0
      %489 = vmatprep.subr.mxu0 0.0
      %490 = vmatpush2.msra.mxu0 0.0
      %491 = vmatprep.subr.mxu0 0.0
      %492 = vmatpush2.msra.mxu0 0.0
      %493 = vmatprep.subr.mxu0 0.0
      %494 = vmatpush2.msra.mxu0 0.0
      %495 = vmatprep.subr.mxu0 0.0
      %496 = vmatpush2.msra.mxu0 0.0
      %497 = vmatprep.subr.mxu0 0.0
      %498 = vmatpush2.msra.mxu0 0.0
      %499 = vmatprep.subr.mxu0 0.0
      %500 = vmatpush2.msra.mxu0 0.0
      %501 = vmatprep.subr.mxu0 0.0
      %502 = vmatpush2.msra.mxu0 0.0
      %503 = vmatprep.subr.mxu0 0.0
      %504 = vmatpush2.msra.mxu0 0.0
      %505 = vmatprep.mubr.f32.mxu0 0.0
      %506 = vmatmul.mubr.f32.gmra.mxu0 %v430
      %v507 = vpop.f32.mrf.mxu0
      %v508 = vadd.f32 0.0, %v507
      %v509 = vpop.f32.mrf.mxu0
      %510 = vmatprep.mubr.f32.mxu0 0.0
      %511 = vmatmul.mubr.f32.gmra.mxu0 %v433
      %v512 = vpop.f32.mrf.mxu0
      %v513 = vadd.f32 0.0, %v512
      %v514 = vpop.f32.mrf.mxu0
      %515 = vmatprep.mubr.f32.mxu0 0.0
      %516 = vmatmul.mubr.f32.gmra.mxu0 %v436
      %v517 = vpop.f32.mrf.mxu0
      %v518 = vadd.f32 0.0, %v517
      %v519 = vpop.f32.mrf.mxu0
      %520 = vmatprep.mubr.f32.mxu0 0.0
      %521 = vmatmul.mubr.f32.gmra.mxu0 %v439
      %v522 = vpop.f32.mrf.mxu0
      %v523 = vadd.f32 0.0, %v522
      %v524 = vpop.f32.mrf.mxu0
      %525 = vdwg.mxu0
      %v527 = vsel %vm428, %v412, 0
      %v530 = vsel %vm428, %v413, 0
      %v533 = vsel %vm428, %v414, 0
      %v536 = vsel %vm428, %v415, 0
      %538 = vmatprep.subr.mxu0 0.0
      %539 = vmatpush1.msra.mxu0 0.0
      %540 = vmatprep.subr.mxu0 0.0
      %541 = vmatpush1.msra.mxu0 0.0
      %542 = vmatprep.subr.mxu0 0.0
      %543 = vmatpush1.msra.mxu0 0.0
      %544 = vmatprep.subr.mxu0 0.0
      %545 = vmatpush1.msra.mxu0 0.0
      %546 = vmatprep.subr.mxu0 0.0
      %547 = vmatpush1.msra.mxu0 0.0
      %548 = vmatprep.subr.mxu0 0.0
      %549 = vmatpush1.msra.mxu0 0.0
      %550 = vmatprep.subr.mxu0 0.0
      %551 = vmatpush1.msra.mxu0 0.0
      %552 = vmatprep.subr.mxu0 0.0
      %553 = vmatpush1.msra.mxu0 0.0
      %554 = vmatprep.subr.mxu0 0.0
      %555 = vmatpush1.msra.mxu0 0.0
      %556 = vmatprep.subr.mxu0 0.0
      %557 = vmatpush1.msra.mxu0 0.0
      %558 = vmatprep.subr.mxu0 0.0
      %559 = vmatpush1.msra.mxu0 0.0
      %560 = vmatprep.subr.mxu0 0.0
      %561 = vmatpush1.msra.mxu0 0.0
      %562 = vmatprep.subr.mxu0 0.0
      %563 = vmatpush1.msra.mxu0 %v419
      %564 = vmatprep.subr.mxu0 0.0
      %565 = vmatpush1.msra.mxu0 %v418
      %566 = vmatprep.subr.mxu0 0.0
      %567 = vmatpush1.msra.mxu0 %v417
      %568 = vmatprep.subr.mxu0 0.0
      %569 = vmatpush1.msra.mxu0 %v416
      %570 = vmatprep.subr.mxu0 0.0
      %571 = vmatpush2.msra.mxu0 0.0
      %572 = vmatprep.subr.mxu0 0.0
      %573 = vmatpush2.msra.mxu0 0.0
      %574 = vmatprep.subr.mxu0 0.0
      %575 = vmatpush2.msra.mxu0 0.0
      %576 = vmatprep.subr.mxu0 0.0
      %577 = vmatpush2.msra.mxu0 0.0
      %578 = vmatprep.subr.mxu0 0.0
      %579 = vmatpush2.msra.mxu0 0.0
      %580 = vmatprep.subr.mxu0 0.0
      %581 = vmatpush2.msra.mxu0 0.0
      %582 = vmatprep.subr.mxu0 0.0
      %583 = vmatpush2.msra.mxu0 0.0
      %584 = vmatprep.subr.mxu0 0.0
      %585 = vmatpush2.msra.mxu0 0.0
      %586 = vmatprep.subr.mxu0 0.0
      %587 = vmatpush2.msra.mxu0 0.0
      %588 = vmatprep.subr.mxu0 0.0
      %589 = vmatpush2.msra.mxu0 0.0
      %590 = vmatprep.subr.mxu0 0.0
      %591 = vmatpush2.msra.mxu0 0.0
      %592 = vmatprep.subr.mxu0 0.0
      %593 = vmatpush2.msra.mxu0 0.0
      %594 = vmatprep.subr.mxu0 0.0
      %595 = vmatpush2.msra.mxu0 0.0
      %596 = vmatprep.subr.mxu0 0.0
      %597 = vmatpush2.msra.mxu0 0.0
      %598 = vmatprep.subr.mxu0 0.0
      %599 = vmatpush2.msra.mxu0 0.0
      %600 = vmatprep.subr.mxu0 0.0
      %601 = vmatpush2.msra.mxu0 0.0
      %602 = vmatprep.mubr.f32.mxu0 0.0
      %603 = vmatmul.mubr.f32.gmra.mxu0 %v527
      %v604 = vpop.f32.mrf.mxu0
      %v605 = vadd.f32 %v508, %v604
      %v606 = vpop.f32.mrf.mxu0
      %607 = vmatprep.mubr.f32.mxu0 0.0
      %608 = vmatmul.mubr.f32.gmra.mxu0 %v530
      %v609 = vpop.f32.mrf.mxu0
      %v610 = vadd.f32 %v513, %v609
      %v611 = vpop.f32.mrf.mxu0
      %612 = vmatprep.mubr.f32.mxu0 0.0
      %613 = vmatmul.mubr.f32.gmra.mxu0 %v533
      %v614 = vpop.f32.mrf.mxu0
      %v615 = vadd.f32 %v518, %v614
      %v616 = vpop.f32.mrf.mxu0
      %617 = vmatprep.mubr.f32.mxu0 0.0
      %618 = vmatmul.mubr.f32.gmra.mxu0 %v536
      %v619 = vpop.f32.mrf.mxu0
      %v620 = vadd.f32 %v523, %v619
      %v621 = vpop.f32.mrf.mxu0
      %622 = vdwg.mxu0
      %v623 = vld [vmem:[%s4] sm:$0x1]
      %v625 = vlaneseq
      %v626 = vshrl.u32 %v625, 7
      %v627 = vsub.s32 0, %v626
      %v628 = vrot.slane %v623, %v627
      %v630 = vadd.f32 %v605, %v628
      %v631 = vadd.f32 %v610, %v628
      %v632 = vadd.f32 %v615, %v628
      %v633 = vadd.f32 %v620, %v628
      %v634 = vmax.f32 %v630, 0.0
      %v635 = vmax.f32 %v631, 0.0
      %v636 = vmax.f32 %v632, 0.0
      %v637 = vmax.f32 %v633, 0.0
      %v638 = vld [vmem:[%s5] sm:$0xff]
      %v639 = vld [vmem:[%s5 + $0x8] sm:$0xff]
      %v640 = vld [vmem:[%s5 + $0x10] sm:$0xff]
      %v641 = vld [vmem:[%s5 + $0x18] sm:$0xff]
      %v642 = vld [vmem:[%s6] sm:$0x1]
      %v644 = vlaneseq
      %v645 = vshrl.u32 %v644, 7
      %v646 = vsub.s32 0, %v645
      %v647 = vrot.slane %v642, %v646
      %v650 = vsel %vm428, %v634, 0
      %v653 = vsel %vm428, %v635, 0
      %v656 = vsel %vm428, %v636, 0
      %v659 = vsel %vm428, %v637, 0
      %661 = vmatprep.subr.mxu0 0.0
      %662 = vmatpush1.msra.mxu0 0.0
      %663 = vmatprep.subr.mxu0 0.0
      %664 = vmatpush1.msra.mxu0 0.0
      %665 = vmatprep.subr.mxu0 0.0
      %666 = vmatpush1.msra.mxu0 0.0
      %667 = vmatprep.subr.mxu0 0.0
      %668 = vmatpush1.msra.mxu0 0.0
      %669 = vmatprep.subr.mxu0 0.0
      %670 = vmatpush1.msra.mxu0 0.0
      %671 = vmatprep.subr.mxu0 0.0
      %672 = vmatpush1.msra.mxu0 0.0
      %673 = vmatprep.subr.mxu0 0.0
      %674 = vmatpush1.msra.mxu0 0.0
      %675 = vmatprep.subr.mxu0 0.0
      %676 = vmatpush1.msra.mxu0 0.0
      %677 = vmatprep.subr.mxu0 0.0
      %678 = vmatpush1.msra.mxu0 0.0
      %679 = vmatprep.subr.mxu0 0.0
      %680 = vmatpush1.msra.mxu0 0.0
      %681 = vmatprep.subr.mxu0 0.0
      %682 = vmatpush1.msra.mxu0 0.0
      %683 = vmatprep.subr.mxu0 0.0
      %684 = vmatpush1.msra.mxu0 0.0
      %685 = vmatprep.subr.mxu0 0.0
      %686 = vmatpush1.msra.mxu0 %v641
      %687 = vmatprep.subr.mxu0 0.0
      %688 = vmatpush1.msra.mxu0 %v640
      %689 = vmatprep.subr.mxu0 0.0
      %690 = vmatpush1.msra.mxu0 %v639
      %691 = vmatprep.subr.mxu0 0.0
      %692 = vmatpush1.msra.mxu0 %v638
      %693 = vmatprep.subr.mxu0 0.0
      %694 = vmatpush2.msra.mxu0 0.0
      %695 = vmatprep.subr.mxu0 0.0
      %696 = vmatpush2.msra.mxu0 0.0
      %697 = vmatprep.subr.mxu0 0.0
      %698 = vmatpush2.msra.mxu0 0.0
      %699 = vmatprep.subr.mxu0 0.0
      %700 = vmatpush2.msra.mxu0 0.0
      %701 = vmatprep.subr.mxu0 0.0
      %702 = vmatpush2.msra.mxu0 0.0
      %703 = vmatprep.subr.mxu0 0.0
      %704 = vmatpush2.msra.mxu0 0.0
      %705 = vmatprep.subr.mxu0 0.0
      %706 = vmatpush2.msra.mxu0 0.0
      %707 = vmatprep.subr.mxu0 0.0
      %708 = vmatpush2.msra.mxu0 0.0
      %709 = vmatprep.subr.mxu0 0.0
      %710 = vmatpush2.msra.mxu0 0.0
      %711 = vmatprep.subr.mxu0 0.0
      %712 = vmatpush2.msra.mxu0 0.0
      %713 = vmatprep.subr.mxu0 0.0
      %714 = vmatpush2.msra.mxu0 0.0
      %715 = vmatprep.subr.mxu0 0.0
      %716 = vmatpush2.msra.mxu0 0.0
      %717 = vmatprep.subr.mxu0 0.0
      %718 = vmatpush2.msra.mxu0 0.0
      %719 = vmatprep.subr.mxu0 0.0
      %720 = vmatpush2.msra.mxu0 0.0
      %721 = vmatprep.subr.mxu0 0.0
      %722 = vmatpush2.msra.mxu0 0.0
      %723 = vmatprep.subr.mxu0 0.0
      %724 = vmatpush2.msra.mxu0 0.0
      %725 = vmatprep.mubr.f32.mxu0 0.0
      %726 = vmatmul.mubr.f32.gmra.mxu0 %v650
      %v727 = vpop.f32.mrf.mxu0
      %v728 = vadd.f32 %v647, %v727
      %v729 = vpop.f32.mrf.mxu0
      %730 = vmatprep.mubr.f32.mxu0 0.0
      %731 = vmatmul.mubr.f32.gmra.mxu0 %v653
      %v732 = vpop.f32.mrf.mxu0
      %v733 = vadd.f32 %v647, %v732
      %v734 = vpop.f32.mrf.mxu0
      %735 = vmatprep.mubr.f32.mxu0 0.0
      %736 = vmatmul.mubr.f32.gmra.mxu0 %v656
      %v737 = vpop.f32.mrf.mxu0
      %v738 = vadd.f32 %v647, %v737
      %v739 = vpop.f32.mrf.mxu0
      %740 = vmatprep.mubr.f32.mxu0 0.0
      %741 = vmatmul.mubr.f32.gmra.mxu0 %v659
      %v742 = vpop.f32.mrf.mxu0
      %v743 = vadd.f32 %v647, %v742
      %v744 = vpop.f32.mrf.mxu0
      %745 = vdwg.mxu0
      %v746 = vmax.f32 %v728, 0.0
      %v747 = vmax.f32 %v733, 0.0
      %v748 = vmax.f32 %v738, 0.0
      %v749 = vmax.f32 %v743, 0.0
      %v750 = vld [vmem:[%s7] sm:$0xff]
      %v751 = vld [vmem:[%s7 + $0x8] sm:$0xff]
      %v752 = vld [vmem:[%s7 + $0x10] sm:$0xff]
      %v753 = vld [vmem:[%s7 + $0x18] sm:$0xff]
      %v754 = vld [vmem:[%s8] sm:$0x1]
      %v756 = vlaneseq
      %v757 = vshrl.u32 %v756, 7
      %v758 = vsub.s32 0, %v757
      %v759 = vrot.slane %v754, %v758
      %v762 = vsel %vm428, %v746, 0
      %v765 = vsel %vm428, %v747, 0
      %v768 = vsel %vm428, %v748, 0
      %v771 = vsel %vm428, %v749, 0
      %773 = vmatprep.subr.mxu0 0.0
      %774 = vmatpush1.msra.mxu0 0.0
      %775 = vmatprep.subr.mxu0 0.0
      %776 = vmatpush1.msra.mxu0 0.0
      %777 = vmatprep.subr.mxu0 0.0
      %778 = vmatpush1.msra.mxu0 0.0
      %779 = vmatprep.subr.mxu0 0.0
      %780 = vmatpush1.msra.mxu0 0.0
      %781 = vmatprep.subr.mxu0 0.0
      %782 = vmatpush1.msra.mxu0 0.0
      %783 = vmatprep.subr.mxu0 0.0
      %784 = vmatpush1.msra.mxu0 0.0
      %785 = vmatprep.subr.mxu0 0.0
      %786 = vmatpush1.msra.mxu0 0.0
      %787 = vmatprep.subr.mxu0 0.0
      %788 = vmatpush1.msra.mxu0 0.0
      %789 = vmatprep.subr.mxu0 0.0
      %790 = vmatpush1.msra.mxu0 0.0
      %791 = vmatprep.subr.mxu0 0.0
      %792 = vmatpush1.msra.mxu0 0.0
      %793 = vmatprep.subr.mxu0 0.0
      %794 = vmatpush1.msra.mxu0 0.0
      %795 = vmatprep.subr.mxu0 0.0
      %796 = vmatpush1.msra.mxu0 0.0
      %797 = vmatprep.subr.mxu0 0.0
      %798 = vmatpush1.msra.mxu0 %v753
      %799 = vmatprep.subr.mxu0 0.0
      %800 = vmatpush1.msra.mxu0 %v752
      %801 = vmatprep.subr.mxu0 0.0
      %802 = vmatpush1.msra.mxu0 %v751
      %803 = vmatprep.subr.mxu0 0.0
      %804 = vmatpush1.msra.mxu0 %v750
      %805 = vmatprep.subr.mxu0 0.0
      %806 = vmatpush2.msra.mxu0 0.0
      %807 = vmatprep.subr.mxu0 0.0
      %808 = vmatpush2.msra.mxu0 0.0
      %809 = vmatprep.subr.mxu0 0.0
      %810 = vmatpush2.msra.mxu0 0.0
      %811 = vmatprep.subr.mxu0 0.0
      %812 = vmatpush2.msra.mxu0 0.0
      %813 = vmatprep.subr.mxu0 0.0
      %814 = vmatpush2.msra.mxu0 0.0
      %815 = vmatprep.subr.mxu0 0.0
      %816 = vmatpush2.msra.mxu0 0.0
      %817 = vmatprep.subr.mxu0 0.0
      %818 = vmatpush2.msra.mxu0 0.0
      %819 = vmatprep.subr.mxu0 0.0
      %820 = vmatpush2.msra.mxu0 0.0
      %821 = vmatprep.subr.mxu0 0.0
      %822 = vmatpush2.msra.mxu0 0.0
      %823 = vmatprep.subr.mxu0 0.0
      %824 = vmatpush2.msra.mxu0 0.0
      %825 = vmatprep.subr.mxu0 0.0
      %826 = vmatpush2.msra.mxu0 0.0
      %827 = vmatprep.subr.mxu0 0.0
      %828 = vmatpush2.msra.mxu0 0.0
      %829 = vmatprep.subr.mxu0 0.0
      %830 = vmatpush2.msra.mxu0 0.0
      %831 = vmatprep.subr.mxu0 0.0
      %832 = vmatpush2.msra.mxu0 0.0
      %833 = vmatprep.subr.mxu0 0.0
      %834 = vmatpush2.msra.mxu0 0.0
      %835 = vmatprep.subr.mxu0 0.0
      %836 = vmatpush2.msra.mxu0 0.0
      %837 = vmatprep.mubr.f32.mxu0 0.0
      %838 = vmatmul.mubr.f32.gmra.mxu0 %v762
      %v839 = vpop.f32.mrf.mxu0
      %v840 = vadd.f32 %v759, %v839
      %v841 = vpop.f32.mrf.mxu0
      %842 = vmatprep.mubr.f32.mxu0 0.0
      %843 = vmatmul.mubr.f32.gmra.mxu0 %v765
      %v844 = vpop.f32.mrf.mxu0
      %v845 = vadd.f32 %v759, %v844
      %v846 = vpop.f32.mrf.mxu0
      %847 = vmatprep.mubr.f32.mxu0 0.0
      %848 = vmatmul.mubr.f32.gmra.mxu0 %v768
      %v849 = vpop.f32.mrf.mxu0
      %v850 = vadd.f32 %v759, %v849
      %v851 = vpop.f32.mrf.mxu0
      %852 = vmatprep.mubr.f32.mxu0 0.0
      %853 = vmatmul.mubr.f32.gmra.mxu0 %v771
      %v854 = vpop.f32.mrf.mxu0
      %v855 = vadd.f32 %v759, %v854
      %v856 = vpop.f32.mrf.mxu0
      %857 = vdwg.mxu0
      %v858 = vsel %vm428, %v840, 0.0
      %859 = vadd.xlane.f32.xlu0 %v858
      %v860 = vpop.xlane.xlu0 %859
      %v861 = vsel %vm428, %v845, 0.0
      %862 = vadd.xlane.f32.xlu0 %v861
      %v863 = vpop.xlane.xlu0 %862
      %v864 = vsel %vm428, %v850, 0.0
      %865 = vadd.xlane.f32.xlu0 %v864
      %v866 = vpop.xlane.xlu0 %865
      %v867 = vsel %vm428, %v855, 0.0
      %868 = vadd.xlane.f32.xlu0 %v867
      %v869 = vpop.xlane.xlu0 %868
      %v870 = vrcp.pop 32.0
      %v871 = vmul.f32 %v860, %v870
      %v872 = vmul.f32 %v863, %v870
      %v873 = vmul.f32 %v866, %v870
      %v874 = vmul.f32 %v869, %v870
      %v875 = vsub.f32 %v840, %v871
      %v876 = vsub.f32 %v845, %v872
      %v877 = vsub.f32 %v850, %v873
      %v878 = vsub.f32 %v855, %v874
      %v879 = vmul.f32 %v875, %v875
      %v880 = vmul.f32 %v876, %v876
      %v881 = vmul.f32 %v877, %v877
      %v882 = vmul.f32 %v878, %v878
      %v883 = vsel %vm428, %v879, 0.0
      %884 = vadd.xlane.f32.xlu0 %v883
      %v885 = vpop.xlane.xlu0 %884
      %v886 = vsel %vm428, %v880, 0.0
      %887 = vadd.xlane.f32.xlu0 %v886
      %v888 = vpop.xlane.xlu0 %887
      %v889 = vsel %vm428, %v881, 0.0
      %890 = vadd.xlane.f32.xlu0 %v889
      %v891 = vpop.xlane.xlu0 %890
      %v892 = vsel %vm428, %v882, 0.0
      %893 = vadd.xlane.f32.xlu0 %v892
      %v894 = vpop.xlane.xlu0 %893
      %v895 = vmul.f32 %v885, %v870
      %v896 = vmul.f32 %v888, %v870
      %v897 = vmul.f32 %v891, %v870
      %v898 = vmul.f32 %v894, %v870
      %v899 = vadd.f32 %v895, 1e-05
      %v900 = vadd.f32 %v896, 1e-05
      %v901 = vadd.f32 %v897, 1e-05
      %v902 = vadd.f32 %v898, 1e-05
      %v903 = vrsqrt.pop %v899
      %v904 = vrsqrt.pop %v900
      %v905 = vrsqrt.pop %v901
      %v906 = vrsqrt.pop %v902
      %v907 = vmul.f32 %v875, %v903
      %v908 = vmul.f32 %v876, %v904
      %v909 = vmul.f32 %v877, %v905
      %v910 = vmul.f32 %v878, %v906
      %v911 = vld [vmem:[%s9] sm:$0x1]
      %v913 = vlaneseq
      %v914 = vshrl.u32 %v913, 7
      %v915 = vsub.s32 0, %v914
      %v916 = vrot.slane %v911, %v915
      %v918 = vmul.f32 %v907, %v916
      %v919 = vmul.f32 %v908, %v916
      %v920 = vmul.f32 %v909, %v916
      %v921 = vmul.f32 %v910, %v916
      %v922 = vld [vmem:[%s10] sm:$0x1]
      %v924 = vlaneseq
      %v925 = vshrl.u32 %v924, 7
      %v926 = vsub.s32 0, %v925
      %v927 = vrot.slane %v922, %v926
      %v929 = vadd.f32 %v918, %v927
      %v930 = vadd.f32 %v919, %v927
      %v931 = vadd.f32 %v920, %v927
      %v932 = vadd.f32 %v921, %v927
      %v933 = vadd.f32 %v929, %v420
      %v934 = vadd.f32 %v930, %v421
      %v935 = vadd.f32 %v931, %v422
      %v936 = vadd.f32 %v932, %v423
      %937 = vst.msk [vmem:[%s410] sm:$0xff] %vm428, %v933
      %938 = vst.msk [vmem:[%s410 + $0x8] sm:$0xff] %vm428, %v934
      %939 = vst.msk [vmem:[%s410 + $0x10] sm:$0xff] %vm428, %v935
      %940 = vst.msk [vmem:[%s410 + $0x18] sm:$0xff] %vm428, %v936
      %s941 = smul.u32 4, %s22
      %p942 = scmp.lt.s32.totalorder %s941, 7
      %s943 = scalar_select %p942, %s941, 7
      %s944 = smul.addr %s943, 8
      %s945 = scalar_lea.vmem %s11, %s944
      // Predicated region
      $region65: #{processor_forward.5} parent=63 // pred_check
        %p946 = pneg %p281
      $region66: #{processor_forward.5} parent=63 // pred_check_branch
        %948 = sbr.rel (%p946) target = $region68
      $region67: #{processor_forward.5} parent=63 // pred_region
        %s949 = smul.u32 4, %s22
      $region68: #{processor_forward.5} parent=63 // pred_fallthru
        _
    $region64: #{processor_forward.5} parent=5 // pred_fallthru
      _
    %p950 = scmp.le.s32.totalorder 2, %s17
    // Predicated region
    $region69: #{processor_forward.5} parent=5 // pred_check
      %p951 = pneg %p950
    $region70: #{processor_forward.5} parent=5 // pred_check_branch
      %953 = sbr.rel (%p951) target = $region72
    $region71: #{processor_forward.5} parent=5 // pred_region
      %s954 = ssub.s32 %s17, 2
      // Predicated region
      $region73: #{processor_forward.5} parent=71 // pred_check
        %p955 = pneg %p287
      $region74: #{processor_forward.5} parent=71 // pred_check_branch
        %957 = sbr.rel (%p955) target = $region76
      $region75: #{processor_forward.5} parent=71 // pred_region
        %s958 = smul.u32 4, %s23
        %p959 = scmp.lt.s32.totalorder %s958, 7
        %s960 = scalar_select %p959, %s958, 7
        %s961 = smul.addr %s960, 8
        %s962 = scalar_lea.vmem %s11, %s961
      $region76: #{processor_forward.5} parent=71 // pred_fallthru
        _
    $region72: #{processor_forward.5} parent=5 // pred_fallthru
      _
  $region6: #{processor_forward.5} parent=0 // loop_footer
    %s21 = sadd.s32 1, %s17
  $region7: #{processor_forward.5} parent=0 // loop_footer_branch
    %16 = sbr.rel target = $region3
  $region8: #{processor_forward.5} parent=0 // loop_exit
    _

// kernel: processor_forward.6
$region0: #{processor_forward.6}
  #allocation0 [shape = 'u32[]', space=smem, size = 0x4, offset = 0x4, fixed_abs, tag = 'smem constant byte address 0x4 - core index']
  #allocation1 [shape = 'u32[144,128]{1,0:T(1,128)}', space=vmem, size = 0x12000, scoped, tag = 'internal scratch']
  %s0 = inlined_call_operand.vmem [shape: f32[16,32], index: 0, kind: input, shape index: {}]
  %s1 = inlined_call_operand.vmem [shape: f32[16,32], index: 1, kind: input, shape index: {}]
  %s2 = inlined_call_operand.vmem [shape: f32[32,32], index: 2, kind: input, shape index: {}]
  %s3 = inlined_call_operand.vmem [shape: f32[32,32], index: 3, kind: input, shape index: {}]
  %s4 = inlined_call_operand.vmem [shape: f32[1,32], index: 4, kind: input, shape index: {}]
  %s5 = inlined_call_operand.vmem [shape: f32[32,32], index: 5, kind: input, shape index: {}]
  %s6 = inlined_call_operand.vmem [shape: f32[1,32], index: 6, kind: input, shape index: {}]
  %s7 = inlined_call_operand.vmem [shape: f32[32,32], index: 7, kind: input, shape index: {}]
  %s8 = inlined_call_operand.vmem [shape: f32[1,32], index: 8, kind: input, shape index: {}]
  %s9 = inlined_call_operand.vmem [shape: f32[1,32], index: 9, kind: input, shape index: {}]
  %s10 = inlined_call_operand.vmem [shape: f32[1,32], index: 10, kind: input, shape index: {}]
  %s11 = inlined_call_operand.vmem [shape: f32[16,32], index: 11, kind: output, shape index: {0}]
  %s12 = inlined_call_operand.hbm [shape: f32[16,32], index: 12, kind: output, shape index: {1}]
  %13 = xla_tuple %s11, %s12
  %s14 = sld [smem:[#allocation0]]
  $region85: #{processor_forward.6} parent=0
    _
  %s16 = ssub.s32 1, %s14
  %s17 = scalar_select 0, %s16, %s14
  $region1: #{processor_forward.6} parent=0
    #allocation2 [shape = 'u8[8192]{0}', space=vmem, size = 0x2000, scoped, tag = 'output window, operand 1']
    #allocation3 [shape = 's32[2]{0}', space=sflag, size = 0x8, scoped, tag = 'scoped memory for processor_forward.6']
    %18 = vsyncpa [#allocation3], 0
    %s19 = scalar_lea.sflag [#allocation3], 1
    %20 = vsyncpa %s19, 0
    loop: start=0, step=1, limit=4
    $region2: #{processor_forward.6} parent=1 // loop_pre_header
      _
    $region3: #{processor_forward.6} parent=1 // loop_header
      %s22 = sphi 0, %s26
      %p23 = scmp.ge.s32.totalorder %s22, 4
      %s32 = sphi 0, %s34
      %s35 = sphi 0, %s32
      %s36 = sphi 0, %s35
      %s52 = sphi 0, %s36
      %s58 = sphi 0, %s60
      %s61 = sphi 0, %s58
      %s62 = sphi 0, %s61
      %s78 = sphi 0, %s62
      %s82 = sphi 0, %s82
      %s84 = sphi 0, %s82
      %s85 = sphi 0, %s84
      %s99 = sphi 0, %s85
      %s103 = sphi 0, %s103
      %s105 = sphi 0, %s103
      %s106 = sphi 0, %s105
      %s120 = sphi 0, %s106
      %s124 = sphi 0, %s124
      %s126 = sphi 0, %s124
      %s127 = sphi 0, %s126
      %s141 = sphi 0, %s127
      %s145 = sphi 0, %s145
      %s147 = sphi 0, %s145
      %s148 = sphi 0, %s147
      %s162 = sphi 0, %s148
      %s166 = sphi 0, %s166
      %s168 = sphi 0, %s166
      %s169 = sphi 0, %s168
      %s183 = sphi 0, %s169
      %s187 = sphi 0, %s187
      %s189 = sphi 0, %s187
      %s190 = sphi 0, %s189
      %s204 = sphi 0, %s190
      %s208 = sphi 0, %s208
      %s210 = sphi 0, %s208
      %s211 = sphi 0, %s210
      %s225 = sphi 0, %s211
      %s229 = sphi 0, %s229
      %s231 = sphi 0, %s229
      %s232 = sphi 0, %s231
      %s246 = sphi 0, %s232
      %s250 = sphi 0, %s250
      %s252 = sphi 0, %s250
      %s253 = sphi 0, %s252
      %s267 = sphi 0, %s253
      %s273 = sphi 0, %s275
      %s276 = sphi 0, %s273
      %s277 = sphi 0, %s276
      %s293 = sphi 0, %s277
      %s299 = sphi 0, %s301
      %s302 = sphi 0, %s299
      %s303 = sphi 0, %s302
      %s319 = sphi 0, %s303
    $region4: #{processor_forward.6} parent=1 // loop_header_branch
      %25 = sbr.rel (%p23) target = $region8
    $region5: #{processor_forward.6} parent=1 // loop_body
      %s27 = ssub.s32 %s22, 1
      %s28 = ssub.s32 %s22, 2
      %s29 = sadd.s32 %s22, 1
      %s30 = ssub.s32 %s22, %s29
      %p31 = scmp.eq.s32.totalorder %s30, 0
      %s33 = sadd.s32 %s32, 1
      %s34 = scalar_select %p31, %s32, %s33
      %p37 = pneg %p31
      %p38 = scmp.eq.s32.totalorder %s22, 1
      %p39 = por %p37, %p38
      %p40 = scmp.ne.s32.totalorder %s32, %s35
      %p41 = scmp.eq.s32.totalorder %s22, 0
      %p42 = por %p40, %p41
      %p43 = scmp.ne.s32.totalorder %s32, %s35
      %p44 = scmp.eq.s32.totalorder %s27, 1
      %p45 = por %p43, %p44
      %p46 = scmp.ne.s32.totalorder %s35, %s36
      %p47 = scmp.eq.s32.totalorder %s27, 0
      %p48 = por %p46, %p47
      %p49 = scmp.ne.s32.totalorder %s35, %s36
      %p50 = scmp.eq.s32.totalorder %s28, 1
      %p51 = por %p49, %p50
      %p53 = scmp.ne.s32.totalorder %s36, %s52
      %p54 = scmp.eq.s32.totalorder %s28, 0
      %p55 = por %p53, %p54
      %s56 = ssub.s32 %s22, %s29
      %p57 = scmp.eq.s32.totalorder %s56, 0
      %s59 = sadd.s32 %s58, 1
      %s60 = scalar_select %p57, %s58, %s59
      %p63 = pneg %p57
      %p64 = scmp.eq.s32.totalorder %s22, 1
      %p65 = por %p63, %p64
      %p66 = scmp.ne.s32.totalorder %s58, %s61
      %p67 = scmp.eq.s32.totalorder %s22, 0
      %p68 = por %p66, %p67
      %p69 = scmp.ne.s32.totalorder %s58, %s61
      %p70 = scmp.eq.s32.totalorder %s27, 1
      %p71 = por %p69, %p70
      %p72 = scmp.ne.s32.totalorder %s61, %s62
      %p73 = scmp.eq.s32.totalorder %s27, 0
      %p74 = por %p72, %p73
      %p75 = scmp.ne.s32.totalorder %s61, %s62
      %p76 = scmp.eq.s32.totalorder %s28, 1
      %p77 = por %p75, %p76
      %p79 = scmp.ne.s32.totalorder %s62, %s78
      %p80 = scmp.eq.s32.totalorder %s28, 0
      %p81 = por %p79, %p80
      %s83 = sadd.s32 %s82, 1
      %p86 = scmp.eq.s32.totalorder %s22, 1
      %p87 = scmp.ne.s32.totalorder %s82, %s84
      %p88 = scmp.eq.s32.totalorder %s22, 0
      %p89 = por %p87, %p88
      %p90 = scmp.ne.s32.totalorder %s82, %s84
      %p91 = scmp.eq.s32.totalorder %s27, 1
      %p92 = por %p90, %p91
      %p93 = scmp.ne.s32.totalorder %s84, %s85
      %p94 = scmp.eq.s32.totalorder %s27, 0
      %p95 = por %p93, %p94
      %p96 = scmp.ne.s32.totalorder %s84, %s85
      %p97 = scmp.eq.s32.totalorder %s28, 1
      %p98 = por %p96, %p97
      %p100 = scmp.ne.s32.totalorder %s85, %s99
      %p101 = scmp.eq.s32.totalorder %s28, 0
      %p102 = por %p100, %p101
      %s104 = sadd.s32 %s103, 1
      %p107 = scmp.eq.s32.totalorder %s22, 1
      %p108 = scmp.ne.s32.totalorder %s103, %s105
      %p109 = scmp.eq.s32.totalorder %s22, 0
      %p110 = por %p108, %p109
      %p111 = scmp.ne.s32.totalorder %s103, %s105
      %p112 = scmp.eq.s32.totalorder %s27, 1
      %p113 = por %p111, %p112
      %p114 = scmp.ne.s32.totalorder %s105, %s106
      %p115 = scmp.eq.s32.totalorder %s27, 0
      %p116 = por %p114, %p115
      %p117 = scmp.ne.s32.totalorder %s105, %s106
      %p118 = scmp.eq.s32.totalorder %s28, 1
      %p119 = por %p117, %p118
      %p121 = scmp.ne.s32.totalorder %s106, %s120
      %p122 = scmp.eq.s32.totalorder %s28, 0
      %p123 = por %p121, %p122
      %s125 = sadd.s32 %s124, 1
      %p128 = scmp.eq.s32.totalorder %s22, 1
      %p129 = scmp.ne.s32.totalorder %s124, %s126
      %p130 = scmp.eq.s32.totalorder %s22, 0
      %p131 = por %p129, %p130
      %p132 = scmp.ne.s32.totalorder %s124, %s126
      %p133 = scmp.eq.s32.totalorder %s27, 1
      %p134 = por %p132, %p133
      %p135 = scmp.ne.s32.totalorder %s126, %s127
      %p136 = scmp.eq.s32.totalorder %s27, 0
      %p137 = por %p135, %p136
      %p138 = scmp.ne.s32.totalorder %s126, %s127
      %p139 = scmp.eq.s32.totalorder %s28, 1
      %p140 = por %p138, %p139
      %p142 = scmp.ne.s32.totalorder %s127, %s141
      %p143 = scmp.eq.s32.totalorder %s28, 0
      %p144 = por %p142, %p143
      %s146 = sadd.s32 %s145, 1
      %p149 = scmp.eq.s32.totalorder %s22, 1
      %p150 = scmp.ne.s32.totalorder %s145, %s147
      %p151 = scmp.eq.s32.totalorder %s22, 0
      %p152 = por %p150, %p151
      %p153 = scmp.ne.s32.totalorder %s145, %s147
      %p154 = scmp.eq.s32.totalorder %s27, 1
      %p155 = por %p153, %p154
      %p156 = scmp.ne.s32.totalorder %s147, %s148
      %p157 = scmp.eq.s32.totalorder %s27, 0
      %p158 = por %p156, %p157
      %p159 = scmp.ne.s32.totalorder %s147, %s148
      %p160 = scmp.eq.s32.totalorder %s28, 1
      %p161 = por %p159, %p160
      %p163 = scmp.ne.s32.totalorder %s148, %s162
      %p164 = scmp.eq.s32.totalorder %s28, 0
      %p165 = por %p163, %p164
      %s167 = sadd.s32 %s166, 1
      %p170 = scmp.eq.s32.totalorder %s22, 1
      %p171 = scmp.ne.s32.totalorder %s166, %s168
      %p172 = scmp.eq.s32.totalorder %s22, 0
      %p173 = por %p171, %p172
      %p174 = scmp.ne.s32.totalorder %s166, %s168
      %p175 = scmp.eq.s32.totalorder %s27, 1
      %p176 = por %p174, %p175
      %p177 = scmp.ne.s32.totalorder %s168, %s169
      %p178 = scmp.eq.s32.totalorder %s27, 0
      %p179 = por %p177, %p178
      %p180 = scmp.ne.s32.totalorder %s168, %s169
      %p181 = scmp.eq.s32.totalorder %s28, 1
      %p182 = por %p180, %p181
      %p184 = scmp.ne.s32.totalorder %s169, %s183
      %p185 = scmp.eq.s32.totalorder %s28, 0
      %p186 = por %p184, %p185
      %s188 = sadd.s32 %s187, 1
      %p191 = scmp.eq.s32.totalorder %s22, 1
      %p192 = scmp.ne.s32.totalorder %s187, %s189
      %p193 = scmp.eq.s32.totalorder %s22, 0
      %p194 = por %p192, %p193
      %p195 = scmp.ne.s32.totalorder %s187, %s189
      %p196 = scmp.eq.s32.totalorder %s27, 1
      %p197 = por %p195, %p196
      %p198 = scmp.ne.s32.totalorder %s189, %s190
      %p199 = scmp.eq.s32.totalorder %s27, 0
      %p200 = por %p198, %p199
      %p201 = scmp.ne.s32.totalorder %s189, %s190
      %p202 = scmp.eq.s32.totalorder %s28, 1
      %p203 = por %p201, %p202
      %p205 = scmp.ne.s32.totalorder %s190, %s204
      %p206 = scmp.eq.s32.totalorder %s28, 0
      %p207 = por %p205, %p206
      %s209 = sadd.s32 %s208, 1
      %p212 = scmp.eq.s32.totalorder %s22, 1
      %p213 = scmp.ne.s32.totalorder %s208, %s210
      %p214 = scmp.eq.s32.totalorder %s22, 0
      %p215 = por %p213, %p214
      %p216 = scmp.ne.s32.totalorder %s208, %s210
      %p217 = scmp.eq.s32.totalorder %s27, 1
      %p218 = por %p216, %p217
      %p219 = scmp.ne.s32.totalorder %s210, %s211
      %p220 = scmp.eq.s32.totalorder %s27, 0
      %p221 = por %p219, %p220
      %p222 = scmp.ne.s32.totalorder %s210, %s211
      %p223 = scmp.eq.s32.totalorder %s28, 1
      %p224 = por %p222, %p223
      %p226 = scmp.ne.s32.totalorder %s211, %s225
      %p227 = scmp.eq.s32.totalorder %s28, 0
      %p228 = por %p226, %p227
      %s230 = sadd.s32 %s229, 1
      %p233 = scmp.eq.s32.totalorder %s22, 1
      %p234 = scmp.ne.s32.totalorder %s229, %s231
      %p235 = scmp.eq.s32.totalorder %s22, 0
      %p236 = por %p234, %p235
      %p237 = scmp.ne.s32.totalorder %s229, %s231
      %p238 = scmp.eq.s32.totalorder %s27, 1
      %p239 = por %p237, %p238
      %p240 = scmp.ne.s32.totalorder %s231, %s232
      %p241 = scmp.eq.s32.totalorder %s27, 0
      %p242 = por %p240, %p241
      %p243 = scmp.ne.s32.totalorder %s231, %s232
      %p244 = scmp.eq.s32.totalorder %s28, 1
      %p245 = por %p243, %p244
      %p247 = scmp.ne.s32.totalorder %s232, %s246
      %p248 = scmp.eq.s32.totalorder %s28, 0
      %p249 = por %p247, %p248
      %s251 = sadd.s32 %s250, 1
      %p254 = scmp.eq.s32.totalorder %s22, 1
      %p255 = scmp.ne.s32.totalorder %s250, %s252
      %p256 = scmp.eq.s32.totalorder %s22, 0
      %p257 = por %p255, %p256
      %p258 = scmp.ne.s32.totalorder %s250, %s252
      %p259 = scmp.eq.s32.totalorder %s27, 1
      %p260 = por %p258, %p259
      %p261 = scmp.ne.s32.totalorder %s252, %s253
      %p262 = scmp.eq.s32.totalorder %s27, 0
      %p263 = por %p261, %p262
      %p264 = scmp.ne.s32.totalorder %s252, %s253
      %p265 = scmp.eq.s32.totalorder %s28, 1
      %p266 = por %p264, %p265
      %p268 = scmp.ne.s32.totalorder %s253, %s267
      %p269 = scmp.eq.s32.totalorder %s28, 0
      %p270 = por %p268, %p269
      %s271 = ssub.s32 %s22, %s29
      %p272 = scmp.eq.s32.totalorder %s271, 0
      %s274 = sadd.s32 %s273, 1
      %s275 = scalar_select %p272, %s273, %s274
      %p278 = pneg %p272
      %p279 = scmp.eq.s32.totalorder %s22, 1
      %p280 = por %p278, %p279
      %p281 = scmp.ne.s32.totalorder %s273, %s276
      %p282 = scmp.eq.s32.totalorder %s22, 0
      %p283 = por %p281, %p282
      %p284 = scmp.ne.s32.totalorder %s273, %s276
      %p285 = scmp.eq.s32.totalorder %s27, 1
      %p286 = por %p284, %p285
      %p287 = scmp.ne.s32.totalorder %s276, %s277
      %p288 = scmp.eq.s32.totalorder %s27, 0
      %p289 = por %p287, %p288
      %p290 = scmp.ne.s32.totalorder %s276, %s277
      %p291 = scmp.eq.s32.totalorder %s28, 1
      %p292 = por %p290, %p291
      %p294 = scmp.ne.s32.totalorder %s277, %s293
      %p295 = scmp.eq.s32.totalorder %s28, 0
      %p296 = por %p294, %p295
      %s297 = ssub.s32 %s22, %s29
      %p298 = scmp.eq.s32.totalorder %s297, 0
      %s300 = sadd.s32 %s299, 1
      %s301 = scalar_select %p298, %s299, %s300
      %p304 = pneg %p298
      %p305 = scmp.eq.s32.totalorder %s22, 1
      %p306 = por %p304, %p305
      %p307 = scmp.ne.s32.totalorder %s299, %s302
      %p308 = scmp.eq.s32.totalorder %s22, 0
      %p309 = por %p307, %p308
      %p310 = scmp.ne.s32.totalorder %s299, %s302
      %p311 = scmp.eq.s32.totalorder %s27, 1
      %p312 = por %p310, %p311
      %p313 = scmp.ne.s32.totalorder %s302, %s303
      %p314 = scmp.eq.s32.totalorder %s27, 0
      %p315 = por %p313, %p314
      %p316 = scmp.ne.s32.totalorder %s302, %s303
      %p317 = scmp.eq.s32.totalorder %s28, 1
      %p318 = por %p316, %p317
      %p320 = scmp.ne.s32.totalorder %s303, %s319
      %p321 = scmp.eq.s32.totalorder %s28, 0
      %p322 = por %p320, %p321
      %p323 = scmp.le.s32.totalorder 1, %s22
      %p324 = scmp.lt.s32.totalorder %s22, 3
      %p325 = pnand %p323, %p324
      %p326 = pneg %p325
      // Predicated region
      $region9: #{processor_forward.6} parent=5 // pred_check
        _
      $region10: #{processor_forward.6} parent=5 // pred_check_branch
        %328 = sbr.rel (%p325) target = $region12
      $region11: #{processor_forward.6} parent=5 // pred_region
        %s329 = ssub.s32 %s22, 1
        // Predicated region
        $region13: #{processor_forward.6} parent=11 // pred_check
          %p330 = pneg %p95
        $region14: #{processor_forward.6} parent=11 // pred_check_branch
          %332 = sbr.rel (%p330) target = $region16
        $region15: #{processor_forward.6} parent=11 // pred_region
          _
        $region16: #{processor_forward.6} parent=11 // pred_fallthru
          _
        // Predicated region
        $region17: #{processor_forward.6} parent=11 // pred_check
          %p333 = pneg %p116
        $region18: #{processor_forward.6} parent=11 // pred_check_branch
          %335 = sbr.rel (%p333) target = $region20
        $region19: #{processor_forward.6} parent=11 // pred_region
          _
        $region20: #{processor_forward.6} parent=11 // pred_fallthru
          _
        // Predicated region
        $region21: #{processor_forward.6} parent=11 // pred_check
          %p336 = pneg %p137
        $region22: #{processor_forward.6} parent=11 // pred_check_branch
          %338 = sbr.rel (%p336) target = $region24
        $region23: #{processor_forward.6} parent=11 // pred_region
          _
        $region24: #{processor_forward.6} parent=11 // pred_fallthru
          _
        // Predicated region
        $region25: #{processor_forward.6} parent=11 // pred_check
          %p339 = pneg %p158
        $region26: #{processor_forward.6} parent=11 // pred_check_branch
          %341 = sbr.rel (%p339) target = $region28
        $region27: #{processor_forward.6} parent=11 // pred_region
          _
        $region28: #{processor_forward.6} parent=11 // pred_fallthru
          _
        // Predicated region
        $region29: #{processor_forward.6} parent=11 // pred_check
          %p342 = pneg %p179
        $region30: #{processor_forward.6} parent=11 // pred_check_branch
          %344 = sbr.rel (%p342) target = $region32
        $region31: #{processor_forward.6} parent=11 // pred_region
          _
        $region32: #{processor_forward.6} parent=11 // pred_fallthru
          _
        // Predicated region
        $region33: #{processor_forward.6} parent=11 // pred_check
          %p345 = pneg %p200
        $region34: #{processor_forward.6} parent=11 // pred_check_branch
          %347 = sbr.rel (%p345) target = $region36
        $region35: #{processor_forward.6} parent=11 // pred_region
          _
        $region36: #{processor_forward.6} parent=11 // pred_fallthru
          _
        // Predicated region
        $region37: #{processor_forward.6} parent=11 // pred_check
          %p348 = pneg %p221
        $region38: #{processor_forward.6} parent=11 // pred_check_branch
          %350 = sbr.rel (%p348) target = $region40
        $region39: #{processor_forward.6} parent=11 // pred_region
          _
        $region40: #{processor_forward.6} parent=11 // pred_fallthru
          _
        // Predicated region
        $region41: #{processor_forward.6} parent=11 // pred_check
          %p351 = pneg %p242
        $region42: #{processor_forward.6} parent=11 // pred_check_branch
          %353 = sbr.rel (%p351) target = $region44
        $region43: #{processor_forward.6} parent=11 // pred_region
          _
        $region44: #{processor_forward.6} parent=11 // pred_fallthru
          _
        // Predicated region
        $region45: #{processor_forward.6} parent=11 // pred_check
          %p354 = pneg %p263
        $region46: #{processor_forward.6} parent=11 // pred_check_branch
          %356 = sbr.rel (%p354) target = $region48
        $region47: #{processor_forward.6} parent=11 // pred_region
          _
        $region48: #{processor_forward.6} parent=11 // pred_fallthru
          _
      $region12: #{processor_forward.6} parent=5 // pred_fallthru
        _
      %p357 = scmp.lt.s32.totalorder %s22, 2
      // Predicated region
      $region49: #{processor_forward.6} parent=5 // pred_check
        %p358 = pneg %p357
      $region50: #{processor_forward.6} parent=5 // pred_check_branch
        %360 = sbr.rel (%p358) target = $region52
      $region51: #{processor_forward.6} parent=5 // pred_region
        // Predicated region
        $region53: #{processor_forward.6} parent=51 // pred_check
          %p361 = pneg %p42
        $region54: #{processor_forward.6} parent=51 // pred_check_branch
          %363 = sbr.rel (%p361) target = $region56
        $region55: #{processor_forward.6} parent=51 // pred_region
          %p364 = scmp.lt.s32.totalorder %s22, 1
          %s365 = scalar_select %p364, %s22, 1
          %s366 = smul.addr %s365, 8
          %s367 = scalar_lea.vmem %s0, %s366
        $region56: #{processor_forward.6} parent=51 // pred_fallthru
          _
        // Predicated region
        $region57: #{processor_forward.6} parent=51 // pred_check
          %p368 = pneg %p68
        $region58: #{processor_forward.6} parent=51 // pred_check_branch
          %370 = sbr.rel (%p368) target = $region60
        $region59: #{processor_forward.6} parent=51 // pred_region
          %p371 = scmp.lt.s32.totalorder %s22, 1
          %s372 = scalar_select %p371, %s22, 1
          %s373 = smul.addr %s372, 8
          %s374 = scalar_lea.vmem %s1, %s373
        $region60: #{processor_forward.6} parent=51 // pred_fallthru
          _
      $region52: #{processor_forward.6} parent=5 // pred_fallthru
        _
      %p375 = scmp.le.s32.totalorder 1, %s22
      %p376 = scmp.lt.s32.totalorder %s22, 3
      %p377 = pnand %p375, %p376
      %p378 = pneg %p377
      // Predicated region
      $region61: #{processor_forward.6} parent=5 // pred_check
        _
      $region62: #{processor_forward.6} parent=5 // pred_check_branch
        %380 = sbr.rel (%p377) target = $region64
      $region63: #{processor_forward.6} parent=5 // pred_region
        %s381 = ssub.s32 %s22, 1
        %p382 = scmp.lt.s32.totalorder %s27, 1
        %s383 = scalar_select %p382, %s27, 1
        %s384 = smul.addr %s383, 8
        %s385 = scalar_lea.vmem %s0, %s384
        %p386 = pneg %p48
        %p387 = pneg %p45
        %p388 = scmp.lt.s32.totalorder %s27, 1
        %s389 = scalar_select %p388, %s27, 1
        %s390 = smul.addr %s389, 8
        %s391 = scalar_lea.vmem %s1, %s390
        %p392 = pneg %p74
        %p393 = pneg %p71
        %p394 = pneg %p95
        %p395 = pneg %p92
        %p396 = pneg %p116
        %p397 = pneg %p113
        %p398 = pneg %p137
        %p399 = pneg %p134
        %p400 = pneg %p158
        %p401 = pneg %p155
        %p402 = pneg %p179
        %p403 = pneg %p176
        %p404 = pneg %p200
        %p405 = pneg %p197
        %p406 = pneg %p221
        %p407 = pneg %p218
        %p408 = pneg %p242
        %p409 = pneg %p239
        %p410 = pneg %p263
        %p411 = pneg %p260
        %p412 = pneg %p289
        %p413 = pneg %p286
        %p414 = scmp.lt.s32.totalorder %s27, 1
        %s415 = scalar_select %p414, %s27, 1
        %s416 = smul.addr %s415, 8
        %s417 = scalar_lea.vmem %s11, %s416
        %p418 = pneg %p315
        %p419 = pneg %p312
        %s420 = sand.u32 %s302, 1
        %s421 = scalar_lea.sflag [#allocation3], %s420
        %s422 = sand.u32 %s302, 1
        %s423 = smul.addr %s422, 8
        %s424 = scalar_lea.vmem [#allocation2], %s423
        %p425 = scmp.lt.s32.totalorder %s27, 1
        %s426 = scalar_select %p425, %s27, 1
        %s427 = smul.addr %s426, 8
        %s428 = scalar_lea.vmem %s0, %s427
        %p429 = scmp.lt.s32.totalorder %s27, 1
        %s430 = scalar_select %p429, %s27, 1
        %s431 = smul.addr %s430, 8
        %s432 = scalar_lea.vmem %s1, %s431
        %p433 = scmp.lt.s32.totalorder %s27, 1
        %s434 = scalar_select %p433, %s27, 1
        %s435 = smul.addr %s434, 8
        %s436 = scalar_lea.vmem %s11, %s435
        %v437 = vld [vmem:[%s428] sm:$0xff]
        %v438 = vld [vmem:[%s2] sm:$0xff]
        %v439 = vld [vmem:[%s2 + $0x8] sm:$0xff]
        %v440 = vld [vmem:[%s2 + $0x10] sm:$0xff]
        %v441 = vld [vmem:[%s2 + $0x18] sm:$0xff]
        %v442 = vld [vmem:[%s432] sm:$0xff]
        %v443 = vld [vmem:[%s3] sm:$0xff]
        %v444 = vld [vmem:[%s3 + $0x8] sm:$0xff]
        %v445 = vld [vmem:[%s3 + $0x10] sm:$0xff]
        %v446 = vld [vmem:[%s3 + $0x18] sm:$0xff]
        %vm447 = vcmask 261120
        %v449 = vsel %vm447, %v442, 0
        %451 = vmatprep.subr.mxu0 0.0
        %452 = vmatpush1.msra.mxu0 0.0
        %453 = vmatprep.subr.mxu0 0.0
        %454 = vmatpush1.msra.mxu0 0.0
        %455 = vmatprep.subr.mxu0 0.0
        %456 = vmatpush1.msra.mxu0 0.0
        %457 = vmatprep.subr.mxu0 0.0
        %458 = vmatpush1.msra.mxu0 0.0
        %459 = vmatprep.subr.mxu0 0.0
        %460 = vmatpush1.msra.mxu0 0.0
        %461 = vmatprep.subr.mxu0 0.0
        %462 = vmatpush1.msra.mxu0 0.0
        %463 = vmatprep.subr.mxu0 0.0
        %464 = vmatpush1.msra.mxu0 0.0
        %465 = vmatprep.subr.mxu0 0.0
        %466 = vmatpush1.msra.mxu0 0.0
        %467 = vmatprep.subr.mxu0 0.0
        %468 = vmatpush1.msra.mxu0 0.0
        %469 = vmatprep.subr.mxu0 0.0
        %470 = vmatpush1.msra.mxu0 0.0
        %471 = vmatprep.subr.mxu0 0.0
        %472 = vmatpush1.msra.mxu0 0.0
        %473 = vmatprep.subr.mxu0 0.0
        %474 = vmatpush1.msra.mxu0 0.0
        %475 = vmatprep.subr.mxu0 0.0
        %476 = vmatpush1.msra.mxu0 %v446
        %477 = vmatprep.subr.mxu0 0.0
        %478 = vmatpush1.msra.mxu0 %v445
        %479 = vmatprep.subr.mxu0 0.0
        %480 = vmatpush1.msra.mxu0 %v444
        %481 = vmatprep.subr.mxu0 0.0
        %482 = vmatpush1.msra.mxu0 %v443
        %483 = vmatprep.subr.mxu0 0.0
        %484 = vmatpush2.msra.mxu0 0.0
        %485 = vmatprep.subr.mxu0 0.0
        %486 = vmatpush2.msra.mxu0 0.0
        %487 = vmatprep.subr.mxu0 0.0
        %488 = vmatpush2.msra.mxu0 0.0
        %489 = vmatprep.subr.mxu0 0.0
        %490 = vmatpush2.msra.mxu0 0.0
        %491 = vmatprep.subr.mxu0 0.0
        %492 = vmatpush2.msra.mxu0 0.0
        %493 = vmatprep.subr.mxu0 0.0
        %494 = vmatpush2.msra.mxu0 0.0
        %495 = vmatprep.subr.mxu0 0.0
        %496 = vmatpush2.msra.mxu0 0.0
        %497 = vmatprep.subr.mxu0 0.0
        %498 = vmatpush2.msra.mxu0 0.0
        %499 = vmatprep.subr.mxu0 0.0
        %500 = vmatpush2.msra.mxu0 0.0
        %501 = vmatprep.subr.mxu0 0.0
        %502 = vmatpush2.msra.mxu0 0.0
        %503 = vmatprep.subr.mxu0 0.0
        %504 = vmatpush2.msra.mxu0 0.0
        %505 = vmatprep.subr.mxu0 0.0
        %506 = vmatpush2.msra.mxu0 0.0
        %507 = vmatprep.subr.mxu0 0.0
        %508 = vmatpush2.msra.mxu0 0.0
        %509 = vmatprep.subr.mxu0 0.0
        %510 = vmatpush2.msra.mxu0 0.0
        %511 = vmatprep.subr.mxu0 0.0
        %512 = vmatpush2.msra.mxu0 0.0
        %513 = vmatprep.subr.mxu0 0.0
        %514 = vmatpush2.msra.mxu0 0.0
        %515 = vmatprep.mubr.f32.mxu0 0.0
        %516 = vmatmul.mubr.f32.gmra.mxu0 %v449
        %v517 = vpop.f32.mrf.mxu0
        %v518 = vadd.f32 0.0, %v517
        %v519 = vpop.f32.mrf.mxu0
        %520 = vdwg.mxu0
        %v522 = vsel %vm447, %v437, 0
        %524 = vmatprep.subr.mxu0 0.0
        %525 = vmatpush1.msra.mxu0 0.0
        %526 = vmatprep.subr.mxu0 0.0
        %527 = vmatpush1.msra.mxu0 0.0
        %528 = vmatprep.subr.mxu0 0.0
        %529 = vmatpush1.msra.mxu0 0.0
        %530 = vmatprep.subr.mxu0 0.0
        %531 = vmatpush1.msra.mxu0 0.0
        %532 = vmatprep.subr.mxu0 0.0
        %533 = vmatpush1.msra.mxu0 0.0
        %534 = vmatprep.subr.mxu0 0.0
        %535 = vmatpush1.msra.mxu0 0.0
        %536 = vmatprep.subr.mxu0 0.0
        %537 = vmatpush1.msra.mxu0 0.0
        %538 = vmatprep.subr.mxu0 0.0
        %539 = vmatpush1.msra.mxu0 0.0
        %540 = vmatprep.subr.mxu0 0.0
        %541 = vmatpush1.msra.mxu0 0.0
        %542 = vmatprep.subr.mxu0 0.0
        %543 = vmatpush1.msra.mxu0 0.0
        %544 = vmatprep.subr.mxu0 0.0
        %545 = vmatpush1.msra.mxu0 0.0
        %546 = vmatprep.subr.mxu0 0.0
        %547 = vmatpush1.msra.mxu0 0.0
        %548 = vmatprep.subr.mxu0 0.0
        %549 = vmatpush1.msra.mxu0 %v441
        %550 = vmatprep.subr.mxu0 0.0
        %551 = vmatpush1.msra.mxu0 %v440
        %552 = vmatprep.subr.mxu0 0.0
        %553 = vmatpush1.msra.mxu0 %v439
        %554 = vmatprep.subr.mxu0 0.0
        %555 = vmatpush1.msra.mxu0 %v438
        %556 = vmatprep.subr.mxu0 0.0
        %557 = vmatpush2.msra.mxu0 0.0
        %558 = vmatprep.subr.mxu0 0.0
        %559 = vmatpush2.msra.mxu0 0.0
        %560 = vmatprep.subr.mxu0 0.0
        %561 = vmatpush2.msra.mxu0 0.0
        %562 = vmatprep.subr.mxu0 0.0
        %563 = vmatpush2.msra.mxu0 0.0
        %564 = vmatprep.subr.mxu0 0.0
        %565 = vmatpush2.msra.mxu0 0.0
        %566 = vmatprep.subr.mxu0 0.0
        %567 = vmatpush2.msra.mxu0 0.0
        %568 = vmatprep.subr.mxu0 0.0
        %569 = vmatpush2.msra.mxu0 0.0
        %570 = vmatprep.subr.mxu0 0.0
        %571 = vmatpush2.msra.mxu0 0.0
        %572 = vmatprep.subr.mxu0 0.0
        %573 = vmatpush2.msra.mxu0 0.0
        %574 = vmatprep.subr.mxu0 0.0
        %575 = vmatpush2.msra.mxu0 0.0
        %576 = vmatprep.subr.mxu0 0.0
        %577 = vmatpush2.msra.mxu0 0.0
        %578 = vmatprep.subr.mxu0 0.0
        %579 = vmatpush2.msra.mxu0 0.0
        %580 = vmatprep.subr.mxu0 0.0
        %581 = vmatpush2.msra.mxu0 0.0
        %582 = vmatprep.subr.mxu0 0.0
        %583 = vmatpush2.msra.mxu0 0.0
        %584 = vmatprep.subr.mxu0 0.0
        %585 = vmatpush2.msra.mxu0 0.0
        %586 = vmatprep.subr.mxu0 0.0
        %587 = vmatpush2.msra.mxu0 0.0
        %588 = vmatprep.mubr.f32.mxu0 0.0
        %589 = vmatmul.mubr.f32.gmra.mxu0 %v522
        %v590 = vpop.f32.mrf.mxu0
        %v591 = vadd.f32 %v518, %v590
        %v592 = vpop.f32.mrf.mxu0
        %593 = vdwg.mxu0
        %v594 = vld [vmem:[%s4] sm:$0x1]
        %v596 = vlaneseq
        %v597 = vshrl.u32 %v596, 7
        %v598 = vsub.s32 0, %v597
        %v599 = vrot.slane %v594, %v598
        %v601 = vadd.f32 %v591, %v599
        %v602 = vmax.f32 %v601, 0.0
        %v603 = vld [vmem:[%s5] sm:$0xff]
        %v604 = vld [vmem:[%s5 + $0x8] sm:$0xff]
        %v605 = vld [vmem:[%s5 + $0x10] sm:$0xff]
        %v606 = vld [vmem:[%s5 + $0x18] sm:$0xff]
        %v607 = vld [vmem:[%s6] sm:$0x1]
        %v609 = vlaneseq
        %v610 = vshrl.u32 %v609, 7
        %v611 = vsub.s32 0, %v610
        %v612 = vrot.slane %v607, %v611
        %v615 = vsel %vm447, %v602, 0
        %617 = vmatprep.subr.mxu0 0.0
        %618 = vmatpush1.msra.mxu0 0.0
        %619 = vmatprep.subr.mxu0 0.0
        %620 = vmatpush1.msra.mxu0 0.0
        %621 = vmatprep.subr.mxu0 0.0
        %622 = vmatpush1.msra.mxu0 0.0
        %623 = vmatprep.subr.mxu0 0.0
        %624 = vmatpush1.msra.mxu0 0.0
        %625 = vmatprep.subr.mxu0 0.0
        %626 = vmatpush1.msra.mxu0 0.0
        %627 = vmatprep.subr.mxu0 0.0
        %628 = vmatpush1.msra.mxu0 0.0
        %629 = vmatprep.subr.mxu0 0.0
        %630 = vmatpush1.msra.mxu0 0.0
        %631 = vmatprep.subr.mxu0 0.0
        %632 = vmatpush1.msra.mxu0 0.0
        %633 = vmatprep.subr.mxu0 0.0
        %634 = vmatpush1.msra.mxu0 0.0
        %635 = vmatprep.subr.mxu0 0.0
        %636 = vmatpush1.msra.mxu0 0.0
        %637 = vmatprep.subr.mxu0 0.0
        %638 = vmatpush1.msra.mxu0 0.0
        %639 = vmatprep.subr.mxu0 0.0
        %640 = vmatpush1.msra.mxu0 0.0
        %641 = vmatprep.subr.mxu0 0.0
        %642 = vmatpush1.msra.mxu0 %v606
        %643 = vmatprep.subr.mxu0 0.0
        %644 = vmatpush1.msra.mxu0 %v605
        %645 = vmatprep.subr.mxu0 0.0
        %646 = vmatpush1.msra.mxu0 %v604
        %647 = vmatprep.subr.mxu0 0.0
        %648 = vmatpush1.msra.mxu0 %v603
        %649 = vmatprep.subr.mxu0 0.0
        %650 = vmatpush2.msra.mxu0 0.0
        %651 = vmatprep.subr.mxu0 0.0
        %652 = vmatpush2.msra.mxu0 0.0
        %653 = vmatprep.subr.mxu0 0.0
        %654 = vmatpush2.msra.mxu0 0.0
        %655 = vmatprep.subr.mxu0 0.0
        %656 = vmatpush2.msra.mxu0 0.0
        %657 = vmatprep.subr.mxu0 0.0
        %658 = vmatpush2.msra.mxu0 0.0
        %659 = vmatprep.subr.mxu0 0.0
        %660 = vmatpush2.msra.mxu0 0.0
        %661 = vmatprep.subr.mxu0 0.0
        %662 = vmatpush2.msra.mxu0 0.0
        %663 = vmatprep.subr.mxu0 0.0
        %664 = vmatpush2.msra.mxu0 0.0
        %665 = vmatprep.subr.mxu0 0.0
        %666 = vmatpush2.msra.mxu0 0.0
        %667 = vmatprep.subr.mxu0 0.0
        %668 = vmatpush2.msra.mxu0 0.0
        %669 = vmatprep.subr.mxu0 0.0
        %670 = vmatpush2.msra.mxu0 0.0
        %671 = vmatprep.subr.mxu0 0.0
        %672 = vmatpush2.msra.mxu0 0.0
        %673 = vmatprep.subr.mxu0 0.0
        %674 = vmatpush2.msra.mxu0 0.0
        %675 = vmatprep.subr.mxu0 0.0
        %676 = vmatpush2.msra.mxu0 0.0
        %677 = vmatprep.subr.mxu0 0.0
        %678 = vmatpush2.msra.mxu0 0.0
        %679 = vmatprep.subr.mxu0 0.0
        %680 = vmatpush2.msra.mxu0 0.0
        %681 = vmatprep.mubr.f32.mxu0 0.0
        %682 = vmatmul.mubr.f32.gmra.mxu0 %v615
        %v683 = vpop.f32.mrf.mxu0
        %v684 = vadd.f32 %v612, %v683
        %v685 = vpop.f32.mrf.mxu0
        %686 = vdwg.mxu0
        %v687 = vmax.f32 %v684, 0.0
        %v688 = vld [vmem:[%s7] sm:$0xff]
        %v689 = vld [vmem:[%s7 + $0x8] sm:$0xff]
        %v690 = vld [vmem:[%s7 + $0x10] sm:$0xff]
        %v691 = vld [vmem:[%s7 + $0x18] sm:$0xff]
        %v692 = vld [vmem:[%s8] sm:$0x1]
        %v694 = vlaneseq
        %v695 = vshrl.u32 %v694, 7
        %v696 = vsub.s32 0, %v695
        %v697 = vrot.slane %v692, %v696
        %v700 = vsel %vm447, %v687, 0
        %702 = vmatprep.subr.mxu0 0.0
        %703 = vmatpush1.msra.mxu0 0.0
        %704 = vmatprep.subr.mxu0 0.0
        %705 = vmatpush1.msra.mxu0 0.0
        %706 = vmatprep.subr.mxu0 0.0
        %707 = vmatpush1.msra.mxu0 0.0
        %708 = vmatprep.subr.mxu0 0.0
        %709 = vmatpush1.msra.mxu0 0.0
        %710 = vmatprep.subr.mxu0 0.0
        %711 = vmatpush1.msra.mxu0 0.0
        %712 = vmatprep.subr.mxu0 0.0
        %713 = vmatpush1.msra.mxu0 0.0
        %714 = vmatprep.subr.mxu0 0.0
        %715 = vmatpush1.msra.mxu0 0.0
        %716 = vmatprep.subr.mxu0 0.0
        %717 = vmatpush1.msra.mxu0 0.0
        %718 = vmatprep.subr.mxu0 0.0
        %719 = vmatpush1.msra.mxu0 0.0
        %720 = vmatprep.subr.mxu0 0.0
        %721 = vmatpush1.msra.mxu0 0.0
        %722 = vmatprep.subr.mxu0 0.0
        %723 = vmatpush1.msra.mxu0 0.0
        %724 = vmatprep.subr.mxu0 0.0
        %725 = vmatpush1.msra.mxu0 0.0
        %726 = vmatprep.subr.mxu0 0.0
        %727 = vmatpush1.msra.mxu0 %v691
        %728 = vmatprep.subr.mxu0 0.0
        %729 = vmatpush1.msra.mxu0 %v690
        %730 = vmatprep.subr.mxu0 0.0
        %731 = vmatpush1.msra.mxu0 %v689
        %732 = vmatprep.subr.mxu0 0.0
        %733 = vmatpush1.msra.mxu0 %v688
        %734 = vmatprep.subr.mxu0 0.0
        %735 = vmatpush2.msra.mxu0 0.0
        %736 = vmatprep.subr.mxu0 0.0
        %737 = vmatpush2.msra.mxu0 0.0
        %738 = vmatprep.subr.mxu0 0.0
        %739 = vmatpush2.msra.mxu0 0.0
        %740 = vmatprep.subr.mxu0 0.0
        %741 = vmatpush2.msra.mxu0 0.0
        %742 = vmatprep.subr.mxu0 0.0
        %743 = vmatpush2.msra.mxu0 0.0
        %744 = vmatprep.subr.mxu0 0.0
        %745 = vmatpush2.msra.mxu0 0.0
        %746 = vmatprep.subr.mxu0 0.0
        %747 = vmatpush2.msra.mxu0 0.0
        %748 = vmatprep.subr.mxu0 0.0
        %749 = vmatpush2.msra.mxu0 0.0
        %750 = vmatprep.subr.mxu0 0.0
        %751 = vmatpush2.msra.mxu0 0.0
        %752 = vmatprep.subr.mxu0 0.0
        %753 = vmatpush2.msra.mxu0 0.0
        %754 = vmatprep.subr.mxu0 0.0
        %755 = vmatpush2.msra.mxu0 0.0
        %756 = vmatprep.subr.mxu0 0.0
        %757 = vmatpush2.msra.mxu0 0.0
        %758 = vmatprep.subr.mxu0 0.0
        %759 = vmatpush2.msra.mxu0 0.0
        %760 = vmatprep.subr.mxu0 0.0
        %761 = vmatpush2.msra.mxu0 0.0
        %762 = vmatprep.subr.mxu0 0.0
        %763 = vmatpush2.msra.mxu0 0.0
        %764 = vmatprep.subr.mxu0 0.0
        %765 = vmatpush2.msra.mxu0 0.0
        %766 = vmatprep.mubr.f32.mxu0 0.0
        %767 = vmatmul.mubr.f32.gmra.mxu0 %v700
        %v768 = vpop.f32.mrf.mxu0
        %v769 = vadd.f32 %v697, %v768
        %v770 = vpop.f32.mrf.mxu0
        %771 = vdwg.mxu0
        %v772 = vsel %vm447, %v769, 0.0
        %773 = vadd.xlane.f32.xlu0 %v772
        %v774 = vpop.xlane.xlu0 %773
        %v775 = vrcp.pop 32.0
        %v776 = vmul.f32 %v774, %v775
        %v777 = vsub.f32 %v769, %v776
        %v778 = vmul.f32 %v777, %v777
        %v779 = vsel %vm447, %v778, 0.0
        %780 = vadd.xlane.f32.xlu0 %v779
        %v781 = vpop.xlane.xlu0 %780
        %v782 = vmul.f32 %v781, %v775
        %v783 = vadd.f32 %v782, 1e-05
        %v784 = vrsqrt.pop %v783
        %v785 = vmul.f32 %v777, %v784
        %v786 = vld [vmem:[%s9] sm:$0x1]
        %v788 = vlaneseq
        %v789 = vshrl.u32 %v788, 7
        %v790 = vsub.s32 0, %v789
        %v791 = vrot.slane %v786, %v790
        %v793 = vmul.f32 %v785, %v791
        %v794 = vld [vmem:[%s10] sm:$0x1]
        %v796 = vlaneseq
        %v797 = vshrl.u32 %v796, 7
        %v798 = vsub.s32 0, %v797
        %v799 = vrot.slane %v794, %v798
        %v801 = vadd.f32 %v793, %v799
        %v802 = vadd.f32 %v801, %v442
        %803 = vst.msk [vmem:[%s436] sm:$0xff] %vm447, %v801
        %804 = vst.msk [vmem:[%s424] sm:$0xff] %vm447, %v802
        %p805 = scmp.lt.s32.totalorder %s27, 1
        %s806 = scalar_select %p805, %s27, 1
        %s807 = smul.addr %s806, 8
        %s808 = scalar_lea.vmem %s11, %s807
        %s809 = sand.u32 %s302, 1
        %s810 = scalar_lea.sflag [#allocation3], %s809
        %s811 = sand.u32 %s302, 1
        %s812 = smul.addr %s811, 8
        %s813 = scalar_lea.vmem [#allocation2], %s812
        // Predicated region
        $region65: #{processor_forward.6} parent=63 // pred_check
          %p814 = pneg %p286
        $region66: #{processor_forward.6} parent=63 // pred_check_branch
          %816 = sbr.rel (%p814) target = $region68
        $region67: #{processor_forward.6} parent=63 // pred_region
          _
        $region68: #{processor_forward.6} parent=63 // pred_fallthru
          _
        // Predicated region
        $region69: #{processor_forward.6} parent=63 // pred_check
          %p817 = pneg %p312
        $region70: #{processor_forward.6} parent=63 // pred_check_branch
          %819 = sbr.rel (%p817) target = $region72
        $region71: #{processor_forward.6} parent=63 // pred_region
          %s821 = ssub.s32 128, 128
          %822 = vsyncadd %s810, %s821
          %s823 = smul.addr %s27, 128
          %s824 = scalar_lea.hbm %s12, %s823
          %s826 = sshll.u32 %s813, 4
          %s827 = int_to_ptr.vmem [resolvable:$true] %s826
          %829 = dma.vmem_to_hbm [thread:$0]  %s827, 128, %s824, %s810
        $region72: #{processor_forward.6} parent=63 // pred_fallthru
          _
      $region64: #{processor_forward.6} parent=5 // pred_fallthru
        _
      %p830 = scmp.le.s32.totalorder 2, %s22
      // Predicated region
      $region73: #{processor_forward.6} parent=5 // pred_check
        %p831 = pneg %p830
      $region74: #{processor_forward.6} parent=5 // pred_check_branch
        %833 = sbr.rel (%p831) target = $region76
      $region75: #{processor_forward.6} parent=5 // pred_region
        %s834 = ssub.s32 %s22, 2
        // Predicated region
        $region77: #{processor_forward.6} parent=75 // pred_check
          %p835 = pneg %p292
        $region78: #{processor_forward.6} parent=75 // pred_check_branch
          %837 = sbr.rel (%p835) target = $region80
        $region79: #{processor_forward.6} parent=75 // pred_region
          %p838 = scmp.lt.s32.totalorder %s28, 1
          %s839 = scalar_select %p838, %s28, 1
          %s840 = smul.addr %s839, 8
          %s841 = scalar_lea.vmem %s11, %s840
        $region80: #{processor_forward.6} parent=75 // pred_fallthru
          _
        // Predicated region
        $region81: #{processor_forward.6} parent=75 // pred_check
          %p842 = pneg %p318
        $region82: #{processor_forward.6} parent=75 // pred_check_branch
          %844 = sbr.rel (%p842) target = $region84
        $region83: #{processor_forward.6} parent=75 // pred_region
          %s845 = sand.u32 %s303, 1
          %s846 = scalar_lea.sflag [#allocation3], %s845
          %s847 = sand.u32 %s303, 1
          %s848 = smul.addr %s847, 8
          %s849 = scalar_lea.vmem [#allocation2], %s848
          %850 = dma.done %s846, 128
        $region84: #{processor_forward.6} parent=75 // pred_fallthru
          _
      $region76: #{processor_forward.6} parent=5 // pred_fallthru
        _
    $region6: #{processor_forward.6} parent=1 // loop_footer
      %s26 = sadd.s32 1, %s22
    $region7: #{processor_forward.6} parent=1 // loop_footer_branch
      %21 = sbr.rel target = $region3
    $region8: #{processor_forward.6} parent=1 // loop_exit
      _
    %851 = vsyncpa [#allocation3], 1
    %s852 = scalar_lea.sflag [#allocation3], 1
    %853 = vsyncpa %s852, 1

</llo_original>
